<compile_context>
chip_gen: v7x
topology: tpu7x:2x2x1
jax: 0.10.0
libtpu: 0.0.40
codegen_flags: <defaults>
</compile_context>

<pallas_src>
import jax
import jax.numpy as jnp
from jax import lax
from jax.experimental import pallas as pl
from jax.experimental.pallas import tpu as pltpu

_HP = lax.Precision.HIGHEST        # reference only


def _round_up(n, m):
    return (n + m - 1) // m * m


def _bdot(a, b):
    """Single-pass bf16 MXU matmul with f32 accumulation."""
    return jnp.dot(a.astype(jnp.bfloat16), b, preferred_element_type=jnp.float32)


# ------------------------------ fused kernel ------------------------------- #

def _conv_stage(x, H, wk_ref, b_ref, scr):
    """One Conv3x3(SAME) + ReLU + MaxPool2x2 stage on a batch-flattened activation.

    x      : (M, W*Cin) f32 with M = TB*H; global row g = image g//H, local row g%H.
    wk_ref : (3, W*Cin, 256) bf16 (per-kh, conv1) or (3*W*Cin, 256) bf16 (kh-fused);
             output lanes are pre-permuted to [even-w cols | odd-w cols].
    b_ref  : (1, 256) f32 bias row.
    Returns (M//2, 128) f32 pooled output in the same flattened layout (H -> H//2).
    """
    M, WC = x.shape
    # kh row shifts: sublane roll (XLU) + zero per-image boundary rows (VPU mask).
    rows = lax.broadcasted_iota(jnp.int32, (M, WC), 0)
    first = (rows & (H - 1)) == 0                 # local row 0 of each image
    last = (rows & (H - 1)) == (H - 1)            # local row H-1 of each image
    x_dn = jnp.where(first, 0.0, pltpu.roll(x, shift=1, axis=0))      # row i <- x[i-1]
    x_up = jnp.where(last, 0.0, pltpu.roll(x, shift=M - 1, axis=0))   # row i <- x[i+1]

    if wk_ref.ndim == 3:     # conv1: three K=WC matmuls (avoids 96-lane concat cost)
        y = _bdot(x_dn, wk_ref[0]) + _bdot(x, wk_ref[1]) + _bdot(x_up, wk_ref[2])
    else:                    # conv2/3: lane-concat at 128 boundaries + one K=3*WC matmul
        y = _bdot(jnp.concatenate([x_dn, x, x_up], axis=1), wk_ref[...])

    y = jnp.maximum(y + b_ref[...], 0.0)          # bias + ReLU (f32, VPU)
    y = jnp.maximum(y[:, :128], y[:, 128:])       # column pool: even|odd lane halves
    # Row pool: stride-2 sublane reads through VMEM scratch + VPU max.
    scr[0:M, :] = y
    ev = scr[pl.ds(0, M // 2, stride=2), :]
    od = scr[pl.ds(1, M // 2, stride=2), :]
    return jnp.maximum(ev, od)


def _fused_kernel(x_ref, w1_ref, b1_ref, w2_ref, b2_ref, w3_ref, b3_ref,
                  fc1w_ref, fc1b_ref, fc2w_ref, fc2b_ref, out_ref, scr):
    TB = x_ref.shape[0]
    x = x_ref[...].reshape(TB * 32, 96)              # (TB*32, 96) lane-dense f32
    x = _conv_stage(x, 32, w1_ref, b1_ref, scr)      # (TB*16, 128)
    x = _conv_stage(x, 16, w2_ref, b2_ref, scr)      # (TB*8, 128)
    x = _conv_stage(x, 8,  w3_ref, b3_ref, scr)      # (TB*4, 128)
    # fc1: regroup rows (image, h) -> per-image (TB, 512) via stride-4 sublane reads;
    # the NCHW flatten permutation was folded into fc1w at prepare time.
    off = TB * 8                                     # disjoint from rows just read
    scr[off:off + TB * 4, :] = x
    xflat = jnp.concatenate(
        [scr[pl.ds(off + h, TB, stride=4), :] for h in range(4)], axis=1)   # (TB, 512)
    h1 = jnp.maximum(_bdot(xflat, fc1w_ref[...]) + fc1b_ref[...], 0.0)      # (TB, 128)
    out_ref[...] = _bdot(h1, fc2w_ref[...]) + fc2b_ref[...]                 # (TB, 128)


# --------------------------- weight restructuring --------------------------- #

def _prep_conv(w, b, W, fuse):
    """PyTorch (Cout, Cin, 3, 3) conv + bias -> kernel-ready matrices.

    Per kh, a banded (W*Cin, W*Cout) matrix folds the kw shift, SAME zero padding and
    channel mixing into one matmul; output columns are permuted so the 2x2 column pool
    becomes max(lanes[0:128], lanes[128:256]).  If `fuse`, the three kh matrices are
    stacked along K into a single (3*W*Cin, W*Cout) matrix.
    """
    Cout, Cin = w.shape[0], w.shape[1]
    f32 = jnp.float32
    w = w.astype(f32)
    wk = [sum(jnp.kron(jnp.eye(W, k=1 - kw, dtype=f32), w[:, :, kh, kw].T)
              for kw in range(3))
          for kh in range(3)]                                    # 3 x (W*Cin, W*Cout)
    perm = jnp.array([(2 * wp + par) * Cout + c
                      for par in (0, 1) for wp in range(W // 2) for c in range(Cout)],
                     dtype=jnp.int32)                            # [even-w | odd-w]
    wk = [m[:, perm] for m in wk]
    wk = (jnp.concatenate(wk, axis=0) if fuse else jnp.stack(wk)).astype(jnp.bfloat16)
    brow = jnp.tile(b.astype(f32), W).reshape(1, W * Cout)       # invariant under perm
    return [wk, brow]


def prepare_params(params):
    """Build kernel-ready constant operands once (outside jit)."""
    f32 = jnp.float32
    ins = []
    ins += _prep_conv(params["conv1_w"], params["conv1_b"], W=32, fuse=False)
    ins += _prep_conv(params["conv2_w"], params["conv2_b"], W=16, fuse=True)
    ins += _prep_conv(params["conv3_w"], params["conv3_b"], W=8, fuse=True)
    # fc1: reorder rows from the PyTorch NCHW flatten (c*16 + h*4 + w) to the kernel's
    # h-major (h*128 + w*32 + c) layout produced by the stride-4 gather + lane concat.
    w1 = params["fc1_w"].astype(f32).reshape(32, 4, 4, 128)      # (c, h, w, o)
    w1 = jnp.transpose(w1, (1, 2, 0, 3)).reshape(4 * 128, 128)   # (h*128 + w*32 + c, o)
    ins.append(w1.astype(jnp.bfloat16))
    ins.append(params["fc1_b"].astype(f32).reshape(1, 128))
    # fc2: pad N=10 -> 128 so the single HBM store is lane-dense and unmasked.
    w2 = jnp.zeros((128, 128), f32).at[:, :10].set(params["fc2_w"].astype(f32))
    b2 = jnp.zeros((1, 128), f32).at[0, :10].set(params["fc2_b"].astype(f32))
    ins += [w2.astype(jnp.bfloat16), b2]
    return ins


# ------------------------------ forward wrapper ----------------------------- #

def _const_map(ndim):
    return lambda b: (0,) * ndim


def forward_fn(kparams, x_nchw, block_b=32):
    B = x_nchw.shape[0]
    TB = min(block_b, _round_up(B, 8))               # images per grid step (multiple of 8)
    B_pad = _round_up(B, TB)
    # NCHW -> lane-dense (B, 32, 96); the only XLA-side relayout in the whole forward.
    x = jnp.transpose(x_nchw, (0, 2, 3, 1)).reshape(B, 32, 32 * 3)
    if B_pad != B:
        x = jnp.pad(x, ((0, B_pad - B), (0, 0), (0, 0)))
    in_specs = [pl.BlockSpec((TB, 32, 96), lambda b: (b, 0, 0))]
    in_specs += [pl.BlockSpec(p.shape, _const_map(p.ndim)) for p in kparams]
    out = pl.pallas_call(
        _fused_kernel,
        out_shape=jax.ShapeDtypeStruct((B_pad, 128), jnp.float32),
        grid=(B_pad // TB,),
        in_specs=in_specs,
        out_specs=pl.BlockSpec((TB, 128), lambda b: (b, 0)),
        scratch_shapes=[pltpu.VMEM((TB * 32, 128), jnp.float32)],
        compiler_params=pltpu.CompilerParams(
            dimension_semantics=("parallel",),        # batch blocks across TCs (v7x)
            vmem_limit_bytes=32 * 1024 * 1024),
    )(x, *kparams)
    return out[:B, :10]                               # drop batch + fc2 lane padding


forward = jax.jit(forward_fn, static_argnames=("block_b",))


# ------------------------------- params & ref ------------------------------- #

def init_params(key):
    ks = jax.random.split(key, 10)

    def u(k, shape, fan_in):
        bound = 1.0 / jnp.sqrt(jnp.float32(fan_in))
        return jax.random.uniform(k, shape, jnp.float32, -bound, bound)

    return {
        "conv1_w": u(ks[0], (8, 3, 3, 3), 3 * 9),
        "conv1_b": u(ks[1], (8,), 3 * 9),
        "conv2_w": u(ks[2], (16, 8, 3, 3), 8 * 9),
        "conv2_b": u(ks[3], (16,), 8 * 9),
        "conv3_w": u(ks[4], (32, 16, 3, 3), 16 * 9),
        "conv3_b": u(ks[5], (32,), 16 * 9),
        "fc1_w": u(ks[6], (32 * 4 * 4, 128), 32 * 4 * 4),   # stored (in, out)
        "fc1_b": u(ks[7], (128,), 32 * 4 * 4),
        "fc2_w": u(ks[8], (128, 10), 128),
        "fc2_b": u(ks[9], (10,), 128),
    }


def reference(params, x_nchw):
    x = jnp.transpose(x_nchw, (0, 2, 3, 1))

    def conv(x, w, b):
        w_hwio = jnp.transpose(w, (2, 3, 1, 0))
        y = lax.conv_general_dilated(
            x, w_hwio, (1, 1), "SAME",
            dimension_numbers=("NHWC", "HWIO", "NHWC"),
            precision=_HP)
        return jax.nn.relu(y + b)

    def pool(x):
        return lax.reduce_window(x, -jnp.inf, lax.max,
                                 (1, 2, 2, 1), (1, 2, 2, 1), "VALID")

    x = pool(conv(x, params["conv1_w"], params["conv1_b"]))
    x = pool(conv(x, params["conv2_w"], params["conv2_b"]))
    x = pool(conv(x, params["conv3_w"], params["conv3_b"]))
    x = jnp.transpose(x, (0, 3, 1, 2)).reshape(-1, 32 * 4 * 4)   # NCHW flatten
    x = jax.nn.relu(jnp.dot(x, params["fc1_w"], precision=_HP) + params["fc1_b"])
    return jnp.dot(x, params["fc2_w"], precision=_HP) + params["fc2_b"]


if __name__ == "__main__":
    key = jax.random.PRNGKey(0)
    k_param, k_x = jax.random.split(key)
    params = init_params(k_param)
    kparams = prepare_params(params)                    # one-time restructuring
    x = jax.random.normal(k_x, (2, 3, 32, 32), jnp.float32)   # NCHW, like PyTorch

    out = jax.block_until_ready(forward(kparams, x))
    assert out.shape == (2, 10), out.shape

    ref = reference(params, x)
    # bf16 single-pass matmuls vs f32 HIGHEST reference -> loosened tolerance.
    assert jnp.allclose(out, ref, atol=5e-2, rtol=5e-2), "mismatch vs reference"

    print("KERNEL_OK")
</pallas_src>

<mosaic_0001>
module attributes {stable_mosaic.version = 11 : i64} {
  func.func @_fused_kernel(%arg0: i32, %arg1: memref<8x32x96xf32, #tpu.memory_space<vmem>>, %arg2: memref<3x96x256xbf16, #tpu.memory_space<vmem>>, %arg3: memref<1x256xf32, #tpu.memory_space<vmem>>, %arg4: memref<384x256xbf16, #tpu.memory_space<vmem>>, %arg5: memref<1x256xf32, #tpu.memory_space<vmem>>, %arg6: memref<384x256xbf16, #tpu.memory_space<vmem>>, %arg7: memref<1x256xf32, #tpu.memory_space<vmem>>, %arg8: memref<512x128xbf16, #tpu.memory_space<vmem>>, %arg9: memref<1x128xf32, #tpu.memory_space<vmem>>, %arg10: memref<128x128xbf16, #tpu.memory_space<vmem>>, %arg11: memref<1x128xf32, #tpu.memory_space<vmem>>, %arg12: memref<8x128xf32, #tpu.memory_space<vmem>>, %arg13: memref<256x128xf32, #tpu.memory_space<vmem>>) attributes {dimension_semantics = [#tpu.dimension_semantics<parallel>], iteration_bounds = array<i64: 1>, scalar_prefetch = 0 : i64, scratch_operands = 1 : i64, tpu.core_type = #tpu.core_type<tc>, window_params = [{transform_indices = @transform_0, window_bounds = array<i64: 8, 32, 96>}, {pipeline_mode = #tpu.pipeline_mode<synchronous>, transform_indices = @transform_1, window_bounds = array<i64: 3, 96, 256>}, {pipeline_mode = #tpu.pipeline_mode<synchronous>, transform_indices = @transform_2, window_bounds = array<i64: 1, 256>}, {pipeline_mode = #tpu.pipeline_mode<synchronous>, transform_indices = @transform_3, window_bounds = array<i64: 384, 256>}, {pipeline_mode = #tpu.pipeline_mode<synchronous>, transform_indices = @transform_4, window_bounds = array<i64: 1, 256>}, {pipeline_mode = #tpu.pipeline_mode<synchronous>, transform_indices = @transform_5, window_bounds = array<i64: 384, 256>}, {pipeline_mode = #tpu.pipeline_mode<synchronous>, transform_indices = @transform_6, window_bounds = array<i64: 1, 256>}, {pipeline_mode = #tpu.pipeline_mode<synchronous>, transform_indices = @transform_7, window_bounds = array<i64: 512, 128>}, {pipeline_mode = #tpu.pipeline_mode<synchronous>, transform_indices = @transform_8, window_bounds = array<i64: 1, 128>}, {pipeline_mode = #tpu.pipeline_mode<synchronous>, transform_indices = @transform_9, window_bounds = array<i64: 128, 128>}, {pipeline_mode = #tpu.pipeline_mode<synchronous>, transform_indices = @transform_10, window_bounds = array<i64: 1, 128>}, {transform_indices = @transform_11, window_bounds = array<i64: 8, 128>}]} {
    %c0 = arith.constant 0 : index
    %c0_0 = arith.constant 0 : index
    %c0_1 = arith.constant 0 : index
    %0 = vector.load %arg1[%c0, %c0_0, %c0_1] : memref<8x32x96xf32, #tpu.memory_space<vmem>>, vector<8x32x96xf32>
    %1 = vector.shape_cast %0 : vector<8x32x96xf32> to vector<256x96xf32>
    %2 = tpu.iota {dimensions = array<i32: 0>} : vector<256x96xi32>
    %c31_i32 = arith.constant 31 : i32
    %3 = vector.broadcast %c31_i32 : i32 to vector<256x96xi32>
    %4 = arith.andi %2, %3 : vector<256x96xi32>
    %c0_i32 = arith.constant 0 : i32
    %5 = vector.broadcast %c0_i32 : i32 to vector<256x96xi32>
    %6 = arith.cmpi eq, %4, %5 : vector<256x96xi32>
    %c31_i32_2 = arith.constant 31 : i32
    %7 = vector.broadcast %c31_i32_2 : i32 to vector<256x96xi32>
    %8 = arith.andi %2, %7 : vector<256x96xi32>
    %c31_i32_3 = arith.constant 31 : i32
    %9 = vector.broadcast %c31_i32_3 : i32 to vector<256x96xi32>
    %10 = arith.cmpi eq, %8, %9 : vector<256x96xi32>
    %c1_i32 = arith.constant 1 : i32
    %11 = tpu.dynamic_rotate %1 by %c1_i32 dim 0 : vector<256x96xf32>, i32 -> vector<256x96xf32>
    %cst = arith.constant 0.000000e+00 : f32
    %12 = vector.broadcast %cst : f32 to vector<256x96xf32>
    %13 = arith.select %6, %12, %11 : vector<256x96xi1>, vector<256x96xf32>
    %c255_i32 = arith.constant 255 : i32
    %14 = tpu.dynamic_rotate %1 by %c255_i32 dim 0 : vector<256x96xf32>, i32 -> vector<256x96xf32>
    %cst_4 = arith.constant 0.000000e+00 : f32
    %15 = vector.broadcast %cst_4 : f32 to vector<256x96xf32>
    %16 = arith.select %10, %15, %14 : vector<256x96xi1>, vector<256x96xf32>
    %c0_5 = arith.constant 0 : index
    %c0_6 = arith.constant 0 : index
    %c0_7 = arith.constant 0 : index
    %17 = vector.load %arg2[%c0_5, %c0_6, %c0_7] : memref<3x96x256xbf16, #tpu.memory_space<vmem>>, vector<1x96x256xbf16>
    %18 = vector.shape_cast %17 : vector<1x96x256xbf16> to vector<96x256xbf16>
    %19 = arith.truncf %13 : vector<256x96xf32> to vector<256x96xbf16>
    %cst_8 = arith.constant dense<0.000000e+00> : vector<256x256xf32>
    %20 = tpu.matmul %19, %18, %cst_8 {dimension_numbers = #tpu.dot_dimension_numbers<[1], [0], [0], [1], [0, 0, 1, 1], [], []>} : vector<256x96xbf16>, vector<96x256xbf16>, vector<256x256xf32> -> vector<256x256xf32>
    %c1 = arith.constant 1 : index
    %c0_9 = arith.constant 0 : index
    %c0_10 = arith.constant 0 : index
    %21 = vector.load %arg2[%c1, %c0_9, %c0_10] : memref<3x96x256xbf16, #tpu.memory_space<vmem>>, vector<1x96x256xbf16>
    %22 = vector.shape_cast %21 : vector<1x96x256xbf16> to vector<96x256xbf16>
    %23 = arith.truncf %1 : vector<256x96xf32> to vector<256x96xbf16>
    %cst_11 = arith.constant dense<0.000000e+00> : vector<256x256xf32>
    %24 = tpu.matmul %23, %22, %cst_11 {dimension_numbers = #tpu.dot_dimension_numbers<[1], [0], [0], [1], [0, 0, 1, 1], [], []>} : vector<256x96xbf16>, vector<96x256xbf16>, vector<256x256xf32> -> vector<256x256xf32>
    %25 = arith.addf %20, %24 : vector<256x256xf32>
    %c2 = arith.constant 2 : index
    %c0_12 = arith.constant 0 : index
    %c0_13 = arith.constant 0 : index
    %26 = vector.load %arg2[%c2, %c0_12, %c0_13] : memref<3x96x256xbf16, #tpu.memory_space<vmem>>, vector<1x96x256xbf16>
    %27 = vector.shape_cast %26 : vector<1x96x256xbf16> to vector<96x256xbf16>
    %28 = arith.truncf %16 : vector<256x96xf32> to vector<256x96xbf16>
    %cst_14 = arith.constant dense<0.000000e+00> : vector<256x256xf32>
    %29 = tpu.matmul %28, %27, %cst_14 {dimension_numbers = #tpu.dot_dimension_numbers<[1], [0], [0], [1], [0, 0, 1, 1], [], []>} : vector<256x96xbf16>, vector<96x256xbf16>, vector<256x256xf32> -> vector<256x256xf32>
    %30 = arith.addf %25, %29 : vector<256x256xf32>
    %c0_15 = arith.constant 0 : index
    %c0_16 = arith.constant 0 : index
    %31 = vector.load %arg3[%c0_15, %c0_16] : memref<1x256xf32, #tpu.memory_space<vmem>>, vector<1x256xf32>
    %32 = vector.broadcast %31 : vector<1x256xf32> to vector<256x256xf32>
    %33 = arith.addf %30, %32 : vector<256x256xf32>
    %cst_17 = arith.constant 0.000000e+00 : f32
    %34 = vector.broadcast %cst_17 : f32 to vector<256x256xf32>
    %35 = arith.maximumf %33, %34 : vector<256x256xf32>
    %36 = vector.extract_strided_slice %35 {offsets = [0, 0], sizes = [256, 128], strides = [1, 1]} : vector<256x256xf32> to vector<256x128xf32>
    %37 = vector.extract_strided_slice %35 {offsets = [0, 128], sizes = [256, 128], strides = [1, 1]} : vector<256x256xf32> to vector<256x128xf32>
    %38 = arith.maximumf %36, %37 : vector<256x128xf32>
    %c0_18 = arith.constant 0 : index
    %c0_19 = arith.constant 0 : index
    %39 = vector.load %arg13[%c0_18, %c0_19] : memref<256x128xf32, #tpu.memory_space<vmem>>, vector<256x128xf32>
    tpu.vector_store %arg13[%c0_18, %c0_19], %38 {strides = array<i32>} : memref<256x128xf32, #tpu.memory_space<vmem>>, vector<256x128xf32>,
    %c0_20 = arith.constant 0 : index
    %c0_21 = arith.constant 0 : index
    %40 = tpu.strided_load %arg13[%c0_20, %c0_21] {strides = array<i32: 2, 1>} : memref<256x128xf32, #tpu.memory_space<vmem>>, vector<128x128xf32>
    %c1_22 = arith.constant 1 : index
    %c0_23 = arith.constant 0 : index
    %41 = tpu.strided_load %arg13[%c1_22, %c0_23] {strides = array<i32: 2, 1>} : memref<256x128xf32, #tpu.memory_space<vmem>>, vector<128x128xf32>
    %42 = arith.maximumf %40, %41 : vector<128x128xf32>
    %43 = tpu.iota {dimensions = array<i32: 0>} : vector<128x128xi32>
    %c15_i32 = arith.constant 15 : i32
    %44 = vector.broadcast %c15_i32 : i32 to vector<128x128xi32>
    %45 = arith.andi %43, %44 : vector<128x128xi32>
    %c0_i32_24 = arith.constant 0 : i32
    %46 = vector.broadcast %c0_i32_24 : i32 to vector<128x128xi32>
    %47 = arith.cmpi eq, %45, %46 : vector<128x128xi32>
    %c15_i32_25 = arith.constant 15 : i32
    %48 = vector.broadcast %c15_i32_25 : i32 to vector<128x128xi32>
    %49 = arith.andi %43, %48 : vector<128x128xi32>
    %c15_i32_26 = arith.constant 15 : i32
    %50 = vector.broadcast %c15_i32_26 : i32 to vector<128x128xi32>
    %51 = arith.cmpi eq, %49, %50 : vector<128x128xi32>
    %c1_i32_27 = arith.constant 1 : i32
    %52 = tpu.dynamic_rotate %42 by %c1_i32_27 dim 0 : vector<128x128xf32>, i32 -> vector<128x128xf32>
    %cst_28 = arith.constant 0.000000e+00 : f32
    %53 = vector.broadcast %cst_28 : f32 to vector<128x128xf32>
    %54 = arith.select %47, %53, %52 : vector<128x128xi1>, vector<128x128xf32>
    %c127_i32 = arith.constant 127 : i32
    %55 = tpu.dynamic_rotate %42 by %c127_i32 dim 0 : vector<128x128xf32>, i32 -> vector<128x128xf32>
    %cst_29 = arith.constant 0.000000e+00 : f32
    %56 = vector.broadcast %cst_29 : f32 to vector<128x128xf32>
    %57 = arith.select %51, %56, %55 : vector<128x128xi1>, vector<128x128xf32>
    %58 = tpu.concatenate %54, %42, %57 in 1 : vector<128x128xf32>, vector<128x128xf32>, vector<128x128xf32> -> vector<128x384xf32>
    %c0_30 = arith.constant 0 : index
    %c0_31 = arith.constant 0 : index
    %59 = vector.load %arg4[%c0_30, %c0_31] : memref<384x256xbf16, #tpu.memory_space<vmem>>, vector<384x256xbf16>
    %60 = arith.truncf %58 : vector<128x384xf32> to vector<128x384xbf16>
    %cst_32 = arith.constant dense<0.000000e+00> : vector<128x256xf32>
    %61 = tpu.matmul %60, %59, %cst_32 {dimension_numbers = #tpu.dot_dimension_numbers<[1], [0], [0], [1], [0, 0, 1, 1], [], []>} : vector<128x384xbf16>, vector<384x256xbf16>, vector<128x256xf32> -> vector<128x256xf32>
    %c0_33 = arith.constant 0 : index
    %c0_34 = arith.constant 0 : index
    %62 = vector.load %arg5[%c0_33, %c0_34] : memref<1x256xf32, #tpu.memory_space<vmem>>, vector<1x256xf32>
    %63 = vector.broadcast %62 : vector<1x256xf32> to vector<128x256xf32>
    %64 = arith.addf %61, %63 : vector<128x256xf32>
    %cst_35 = arith.constant 0.000000e+00 : f32
    %65 = vector.broadcast %cst_35 : f32 to vector<128x256xf32>
    %66 = arith.maximumf %64, %65 : vector<128x256xf32>
    %67 = vector.extract_strided_slice %66 {offsets = [0, 0], sizes = [128, 128], strides = [1, 1]} : vector<128x256xf32> to vector<128x128xf32>
    %68 = vector.extract_strided_slice %66 {offsets = [0, 128], sizes = [128, 128], strides = [1, 1]} : vector<128x256xf32> to vector<128x128xf32>
    %69 = arith.maximumf %67, %68 : vector<128x128xf32>
    %c0_36 = arith.constant 0 : index
    %c0_37 = arith.constant 0 : index
    %70 = vector.load %arg13[%c0_36, %c0_37] : memref<256x128xf32, #tpu.memory_space<vmem>>, vector<128x128xf32>
    tpu.vector_store %arg13[%c0_36, %c0_37], %69 {strides = array<i32>} : memref<256x128xf32, #tpu.memory_space<vmem>>, vector<128x128xf32>,
    %c0_38 = arith.constant 0 : index
    %c0_39 = arith.constant 0 : index
    %71 = tpu.strided_load %arg13[%c0_38, %c0_39] {strides = array<i32: 2, 1>} : memref<256x128xf32, #tpu.memory_space<vmem>>, vector<64x128xf32>
    %c1_40 = arith.constant 1 : index
    %c0_41 = arith.constant 0 : index
    %72 = tpu.strided_load %arg13[%c1_40, %c0_41] {strides = array<i32: 2, 1>} : memref<256x128xf32, #tpu.memory_space<vmem>>, vector<64x128xf32>
    %73 = arith.maximumf %71, %72 : vector<64x128xf32>
    %74 = tpu.iota {dimensions = array<i32: 0>} : vector<64x128xi32>
    %c7_i32 = arith.constant 7 : i32
    %75 = vector.broadcast %c7_i32 : i32 to vector<64x128xi32>
    %76 = arith.andi %74, %75 : vector<64x128xi32>
    %c0_i32_42 = arith.constant 0 : i32
    %77 = vector.broadcast %c0_i32_42 : i32 to vector<64x128xi32>
    %78 = arith.cmpi eq, %76, %77 : vector<64x128xi32>
    %c7_i32_43 = arith.constant 7 : i32
    %79 = vector.broadcast %c7_i32_43 : i32 to vector<64x128xi32>
    %80 = arith.andi %74, %79 : vector<64x128xi32>
    %c7_i32_44 = arith.constant 7 : i32
    %81 = vector.broadcast %c7_i32_44 : i32 to vector<64x128xi32>
    %82 = arith.cmpi eq, %80, %81 : vector<64x128xi32>
    %c1_i32_45 = arith.constant 1 : i32
    %83 = tpu.dynamic_rotate %73 by %c1_i32_45 dim 0 : vector<64x128xf32>, i32 -> vector<64x128xf32>
    %cst_46 = arith.constant 0.000000e+00 : f32
    %84 = vector.broadcast %cst_46 : f32 to vector<64x128xf32>
    %85 = arith.select %78, %84, %83 : vector<64x128xi1>, vector<64x128xf32>
    %c63_i32 = arith.constant 63 : i32
    %86 = tpu.dynamic_rotate %73 by %c63_i32 dim 0 : vector<64x128xf32>, i32 -> vector<64x128xf32>
    %cst_47 = arith.constant 0.000000e+00 : f32
    %87 = vector.broadcast %cst_47 : f32 to vector<64x128xf32>
    %88 = arith.select %82, %87, %86 : vector<64x128xi1>, vector<64x128xf32>
    %89 = tpu.concatenate %85, %73, %88 in 1 : vector<64x128xf32>, vector<64x128xf32>, vector<64x128xf32> -> vector<64x384xf32>
    %c0_48 = arith.constant 0 : index
    %c0_49 = arith.constant 0 : index
    %90 = vector.load %arg6[%c0_48, %c0_49] : memref<384x256xbf16, #tpu.memory_space<vmem>>, vector<384x256xbf16>
    %91 = arith.truncf %89 : vector<64x384xf32> to vector<64x384xbf16>
    %cst_50 = arith.constant dense<0.000000e+00> : vector<64x256xf32>
    %92 = tpu.matmul %91, %90, %cst_50 {dimension_numbers = #tpu.dot_dimension_numbers<[1], [0], [0], [1], [0, 0, 1, 1], [], []>} : vector<64x384xbf16>, vector<384x256xbf16>, vector<64x256xf32> -> vector<64x256xf32>
    %c0_51 = arith.constant 0 : index
    %c0_52 = arith.constant 0 : index
    %93 = vector.load %arg7[%c0_51, %c0_52] : memref<1x256xf32, #tpu.memory_space<vmem>>, vector<1x256xf32>
    %94 = vector.broadcast %93 : vector<1x256xf32> to vector<64x256xf32>
    %95 = arith.addf %92, %94 : vector<64x256xf32>
    %cst_53 = arith.constant 0.000000e+00 : f32
    %96 = vector.broadcast %cst_53 : f32 to vector<64x256xf32>
    %97 = arith.maximumf %95, %96 : vector<64x256xf32>
    %98 = vector.extract_strided_slice %97 {offsets = [0, 0], sizes = [64, 128], strides = [1, 1]} : vector<64x256xf32> to vector<64x128xf32>
    %99 = vector.extract_strided_slice %97 {offsets = [0, 128], sizes = [64, 128], strides = [1, 1]} : vector<64x256xf32> to vector<64x128xf32>
    %100 = arith.maximumf %98, %99 : vector<64x128xf32>
    %c0_54 = arith.constant 0 : index
    %c0_55 = arith.constant 0 : index
    %101 = vector.load %arg13[%c0_54, %c0_55] : memref<256x128xf32, #tpu.memory_space<vmem>>, vector<64x128xf32>
    tpu.vector_store %arg13[%c0_54, %c0_55], %100 {strides = array<i32>} : memref<256x128xf32, #tpu.memory_space<vmem>>, vector<64x128xf32>,
    %c0_56 = arith.constant 0 : index
    %c0_57 = arith.constant 0 : index
    %102 = tpu.strided_load %arg13[%c0_56, %c0_57] {strides = array<i32: 2, 1>} : memref<256x128xf32, #tpu.memory_space<vmem>>, vector<32x128xf32>
    %c1_58 = arith.constant 1 : index
    %c0_59 = arith.constant 0 : index
    %103 = tpu.strided_load %arg13[%c1_58, %c0_59] {strides = array<i32: 2, 1>} : memref<256x128xf32, #tpu.memory_space<vmem>>, vector<32x128xf32>
    %104 = arith.maximumf %102, %103 : vector<32x128xf32>
    %c64 = arith.constant 64 : index
    %c0_60 = arith.constant 0 : index
    %105 = vector.load %arg13[%c64, %c0_60] : memref<256x128xf32, #tpu.memory_space<vmem>>, vector<32x128xf32>
    tpu.vector_store %arg13[%c64, %c0_60], %104 {strides = array<i32>} : memref<256x128xf32, #tpu.memory_space<vmem>>, vector<32x128xf32>,
    %c64_61 = arith.constant 64 : index
    %c0_62 = arith.constant 0 : index
    %106 = tpu.strided_load %arg13[%c64_61, %c0_62] {strides = array<i32: 4, 1>} : memref<256x128xf32, #tpu.memory_space<vmem>>, vector<8x128xf32>
    %c65 = arith.constant 65 : index
    %c0_63 = arith.constant 0 : index
    %107 = tpu.strided_load %arg13[%c65, %c0_63] {strides = array<i32: 4, 1>} : memref<256x128xf32, #tpu.memory_space<vmem>>, vector<8x128xf32>
    %c66 = arith.constant 66 : index
    %c0_64 = arith.constant 0 : index
    %108 = tpu.strided_load %arg13[%c66, %c0_64] {strides = array<i32: 4, 1>} : memref<256x128xf32, #tpu.memory_space<vmem>>, vector<8x128xf32>
    %c67 = arith.constant 67 : index
    %c0_65 = arith.constant 0 : index
    %109 = tpu.strided_load %arg13[%c67, %c0_65] {strides = array<i32: 4, 1>} : memref<256x128xf32, #tpu.memory_space<vmem>>, vector<8x128xf32>
    %110 = tpu.concatenate %106, %107, %108, %109 in 1 : vector<8x128xf32>, vector<8x128xf32>, vector<8x128xf32>, vector<8x128xf32> -> vector<8x512xf32>
    %c0_66 = arith.constant 0 : index
    %c0_67 = arith.constant 0 : index
    %111 = vector.load %arg8[%c0_66, %c0_67] : memref<512x128xbf16, #tpu.memory_space<vmem>>, vector<512x128xbf16>
    %112 = arith.truncf %110 : vector<8x512xf32> to vector<8x512xbf16>
    %cst_68 = arith.constant dense<0.000000e+00> : vector<8x128xf32>
    %113 = tpu.matmul %112, %111, %cst_68 {dimension_numbers = #tpu.dot_dimension_numbers<[1], [0], [0], [1], [0, 0, 1, 1], [], []>} : vector<8x512xbf16>, vector<512x128xbf16>, vector<8x128xf32> -> vector<8x128xf32>
    %c0_69 = arith.constant 0 : index
    %c0_70 = arith.constant 0 : index
    %114 = vector.load %arg9[%c0_69, %c0_70] : memref<1x128xf32, #tpu.memory_space<vmem>>, vector<1x128xf32>
    %115 = vector.broadcast %114 : vector<1x128xf32> to vector<8x128xf32>
    %116 = arith.addf %113, %115 : vector<8x128xf32>
    %cst_71 = arith.constant 0.000000e+00 : f32
    %117 = vector.broadcast %cst_71 : f32 to vector<8x128xf32>
    %118 = arith.maximumf %116, %117 : vector<8x128xf32>
    %c0_72 = arith.constant 0 : index
    %c0_73 = arith.constant 0 : index
    %119 = vector.load %arg10[%c0_72, %c0_73] : memref<128x128xbf16, #tpu.memory_space<vmem>>, vector<128x128xbf16>
    %120 = arith.truncf %118 : vector<8x128xf32> to vector<8x128xbf16>
    %cst_74 = arith.constant dense<0.000000e+00> : vector<8x128xf32>
    %121 = tpu.matmul %120, %119, %cst_74 {dimension_numbers = #tpu.dot_dimension_numbers<[1], [0], [0], [1], [0, 0, 1, 1], [], []>} : vector<8x128xbf16>, vector<128x128xbf16>, vector<8x128xf32> -> vector<8x128xf32>
    %c0_75 = arith.constant 0 : index
    %c0_76 = arith.constant 0 : index
    %122 = vector.load %arg11[%c0_75, %c0_76] : memref<1x128xf32, #tpu.memory_space<vmem>>, vector<1x128xf32>
    %123 = vector.broadcast %122 : vector<1x128xf32> to vector<8x128xf32>
    %124 = arith.addf %121, %123 : vector<8x128xf32>
    %c0_77 = arith.constant 0 : index
    %c0_78 = arith.constant 0 : index
    %125 = vector.load %arg12[%c0_77, %c0_78] : memref<8x128xf32, #tpu.memory_space<vmem>>, vector<8x128xf32>
    tpu.vector_store %arg12[%c0_77, %c0_78], %124 {strides = array<i32>} : memref<8x128xf32, #tpu.memory_space<vmem>>, vector<8x128xf32>,
    return
  }
  func.func @transform_0(%arg0: i32) -> (i32, i32, i32) {
    %c0_i32 = arith.constant 0 : i32
    %c0_i32_0 = arith.constant 0 : i32
    %c0_i32_1 = arith.constant 0 : i32
    return %arg0, %c0_i32, %c0_i32_0 : i32, i32, i32
  }
  func.func @transform_1(%arg0: i32) -> (i32, i32, i32) {
    %c0_i32 = arith.constant 0 : i32
    %c0_i32_0 = arith.constant 0 : i32
    %c0_i32_1 = arith.constant 0 : i32
    %c0_i32_2 = arith.constant 0 : i32
    return %c0_i32, %c0_i32_0, %c0_i32_1 : i32, i32, i32
  }
  func.func @transform_2(%arg0: i32) -> (i32, i32) {
    %c0_i32 = arith.constant 0 : i32
    %c0_i32_0 = arith.constant 0 : i32
    %c0_i32_1 = arith.constant 0 : i32
    return %c0_i32, %c0_i32_0 : i32, i32
  }
  func.func @transform_3(%arg0: i32) -> (i32, i32) {
    %c0_i32 = arith.constant 0 : i32
    %c0_i32_0 = arith.constant 0 : i32
    %c0_i32_1 = arith.constant 0 : i32
    return %c0_i32, %c0_i32_0 : i32, i32
  }
  func.func @transform_4(%arg0: i32) -> (i32, i32) {
    %c0_i32 = arith.constant 0 : i32
    %c0_i32_0 = arith.constant 0 : i32
    %c0_i32_1 = arith.constant 0 : i32
    return %c0_i32, %c0_i32_0 : i32, i32
  }
  func.func @transform_5(%arg0: i32) -> (i32, i32) {
    %c0_i32 = arith.constant 0 : i32
    %c0_i32_0 = arith.constant 0 : i32
    %c0_i32_1 = arith.constant 0 : i32
    return %c0_i32, %c0_i32_0 : i32, i32
  }
  func.func @transform_6(%arg0: i32) -> (i32, i32) {
    %c0_i32 = arith.constant 0 : i32
    %c0_i32_0 = arith.constant 0 : i32
    %c0_i32_1 = arith.constant 0 : i32
    return %c0_i32, %c0_i32_0 : i32, i32
  }
  func.func @transform_7(%arg0: i32) -> (i32, i32) {
    %c0_i32 = arith.constant 0 : i32
    %c0_i32_0 = arith.constant 0 : i32
    %c0_i32_1 = arith.constant 0 : i32
    return %c0_i32, %c0_i32_0 : i32, i32
  }
  func.func @transform_8(%arg0: i32) -> (i32, i32) {
    %c0_i32 = arith.constant 0 : i32
    %c0_i32_0 = arith.constant 0 : i32
    %c0_i32_1 = arith.constant 0 : i32
    return %c0_i32, %c0_i32_0 : i32, i32
  }
  func.func @transform_9(%arg0: i32) -> (i32, i32) {
    %c0_i32 = arith.constant 0 : i32
    %c0_i32_0 = arith.constant 0 : i32
    %c0_i32_1 = arith.constant 0 : i32
    return %c0_i32, %c0_i32_0 : i32, i32
  }
  func.func @transform_10(%arg0: i32) -> (i32, i32) {
    %c0_i32 = arith.constant 0 : i32
    %c0_i32_0 = arith.constant 0 : i32
    %c0_i32_1 = arith.constant 0 : i32
    return %c0_i32, %c0_i32_0 : i32, i32
  }
  func.func @transform_11(%arg0: i32) -> (i32, i32) {
    %c0_i32 = arith.constant 0 : i32
    %c0_i32_0 = arith.constant 0 : i32
    return %arg0, %c0_i32 : i32, i32
  }
}

</mosaic_0001>

<llo_original>
// kernel: forward_fn.1
$region0: #{forward_fn.1}
  #allocation0 [shape = 'u32[]', space=smem, size = 0x4, offset = 0x4, fixed_abs, tag = 'smem constant byte address 0x4 - core index']
  #allocation1 [shape = 'u32[144,128]{1,0:T(1,128)}', space=vmem, size = 0x12000, scoped, tag = 'internal scratch']
  #allocation2 [shape = 'f32[256,128]{1,0:T(8,128)}', space=vmem, size = 0x20000, scoped, tag = 'scratch operand']
  %s0 = inlined_call_operand.vmem [shape: f32[8,32,96], index: 0, kind: input, shape index: {}]
  %s1 = inlined_call_operand.hbm [shape: bf16[3,96,256], index: 1, kind: input, shape index: {}]
  %s2 = inlined_call_operand.vmem [shape: f32[1,256], index: 2, kind: input, shape index: {}]
  %s3 = inlined_call_operand.vmem [shape: bf16[384,256], index: 3, kind: input, shape index: {}]
  %s4 = inlined_call_operand.vmem [shape: f32[1,256], index: 4, kind: input, shape index: {}]
  %s5 = inlined_call_operand.vmem [shape: bf16[384,256], index: 5, kind: input, shape index: {}]
  %s6 = inlined_call_operand.vmem [shape: f32[1,256], index: 6, kind: input, shape index: {}]
  %s7 = inlined_call_operand.hbm [shape: bf16[512,128], index: 7, kind: input, shape index: {}]
  %s8 = inlined_call_operand.vmem [shape: f32[1,128], index: 8, kind: input, shape index: {}]
  %s9 = inlined_call_operand.vmem [shape: bf16[128,128], index: 9, kind: input, shape index: {}]
  %s10 = inlined_call_operand.vmem [shape: f32[1,128], index: 10, kind: input, shape index: {}]
  %s11 = inlined_call_operand.vmem [shape: f32[8,128], index: 11, kind: output, shape index: {}]
  %s12 = sld [smem:[#allocation0]]
  $region62: #{forward_fn.1} parent=0
    _
  %s14 = ssub.s32 1, %s12
  %s15 = scalar_select 0, %s14, %s12
  $region1: #{forward_fn.1} parent=0
    #allocation3 [shape = 'u8[147456]{0}', space=vmem, size = 0x24000, scoped, tag = 'input window, operand 1, single buffered']
    #allocation4 [shape = 's32[1]{0}', space=sflag, size = 0x4, scoped, tag = 'scoped memory for forward_fn.1']
    #allocation5 [shape = 'u8[131072]{0}', space=vmem, size = 0x20000, scoped, tag = 'input window, operand 7, single buffered']
    #allocation6 [shape = 's32[1]{0}', space=sflag, size = 0x4, scoped, tag = 'scoped memory for forward_fn.1']
    %16 = vsyncpa [#allocation4], 0
    %17 = vsyncpa [#allocation6], 0
    // Predicated region
    $region2: #{forward_fn.1} parent=1 // pred_check
      _
    $region3: #{forward_fn.1} parent=1 // pred_check_branch
      %19 = sbr.rel (0) target = $region5
    $region4: #{forward_fn.1} parent=1 // pred_region
      _
    $region5: #{forward_fn.1} parent=1 // pred_fallthru
      _
    // Predicated region
    $region6: #{forward_fn.1} parent=1 // pred_check
      _
    $region7: #{forward_fn.1} parent=1 // pred_check_branch
      %21 = sbr.rel (0) target = $region9
    $region8: #{forward_fn.1} parent=1 // pred_region
      %s23 = ssub.s32 4608, 4608
      %24 = vsyncadd [#allocation4], %s23
      %s25 = sshll.u32 [#allocation3], 4
      %s26 = int_to_ptr.vmem [resolvable:$true] %s25
      %31 = dma.hbm_to_vmem [thread:$0]  %s1, 4608, %s26, [#allocation4], 128, 128, 8
    $region9: #{forward_fn.1} parent=1 // pred_fallthru
      _
    // Predicated region
    $region10: #{forward_fn.1} parent=1 // pred_check
      _
    $region11: #{forward_fn.1} parent=1 // pred_check_branch
      %33 = sbr.rel (0) target = $region13
    $region12: #{forward_fn.1} parent=1 // pred_region
      _
    $region13: #{forward_fn.1} parent=1 // pred_fallthru
      _
    // Predicated region
    $region14: #{forward_fn.1} parent=1 // pred_check
      _
    $region15: #{forward_fn.1} parent=1 // pred_check_branch
      %35 = sbr.rel (0) target = $region17
    $region16: #{forward_fn.1} parent=1 // pred_region
      _
    $region17: #{forward_fn.1} parent=1 // pred_fallthru
      _
    // Predicated region
    $region18: #{forward_fn.1} parent=1 // pred_check
      _
    $region19: #{forward_fn.1} parent=1 // pred_check_branch
      %37 = sbr.rel (0) target = $region21
    $region20: #{forward_fn.1} parent=1 // pred_region
      _
    $region21: #{forward_fn.1} parent=1 // pred_fallthru
      _
    // Predicated region
    $region22: #{forward_fn.1} parent=1 // pred_check
      _
    $region23: #{forward_fn.1} parent=1 // pred_check_branch
      %39 = sbr.rel (0) target = $region25
    $region24: #{forward_fn.1} parent=1 // pred_region
      _
    $region25: #{forward_fn.1} parent=1 // pred_fallthru
      _
    // Predicated region
    $region26: #{forward_fn.1} parent=1 // pred_check
      _
    $region27: #{forward_fn.1} parent=1 // pred_check_branch
      %41 = sbr.rel (0) target = $region29
    $region28: #{forward_fn.1} parent=1 // pred_region
      _
    $region29: #{forward_fn.1} parent=1 // pred_fallthru
      _
    // Predicated region
    $region30: #{forward_fn.1} parent=1 // pred_check
      _
    $region31: #{forward_fn.1} parent=1 // pred_check_branch
      %43 = sbr.rel (0) target = $region33
    $region32: #{forward_fn.1} parent=1 // pred_region
      %s45 = ssub.s32 4096, 4096
      %46 = vsyncadd [#allocation6], %s45
      %s47 = sshll.u32 [#allocation5], 4
      %s48 = int_to_ptr.vmem [resolvable:$true] %s47
      %53 = dma.hbm_to_vmem [thread:$0]  %s7, 4096, %s48, [#allocation6], 64, 64, 4
    $region33: #{forward_fn.1} parent=1 // pred_fallthru
      _
    // Predicated region
    $region34: #{forward_fn.1} parent=1 // pred_check
      _
    $region35: #{forward_fn.1} parent=1 // pred_check_branch
      %55 = sbr.rel (0) target = $region37
    $region36: #{forward_fn.1} parent=1 // pred_region
      _
    $region37: #{forward_fn.1} parent=1 // pred_fallthru
      _
    // Predicated region
    $region38: #{forward_fn.1} parent=1 // pred_check
      _
    $region39: #{forward_fn.1} parent=1 // pred_check_branch
      %57 = sbr.rel (0) target = $region41
    $region40: #{forward_fn.1} parent=1 // pred_region
      _
    $region41: #{forward_fn.1} parent=1 // pred_fallthru
      _
    // Predicated region
    $region42: #{forward_fn.1} parent=1 // pred_check
      _
    $region43: #{forward_fn.1} parent=1 // pred_check_branch
      %59 = sbr.rel (0) target = $region45
    $region44: #{forward_fn.1} parent=1 // pred_region
      _
    $region45: #{forward_fn.1} parent=1 // pred_fallthru
      _
    // Predicated region
    $region46: #{forward_fn.1} parent=1 // pred_check
      _
    $region47: #{forward_fn.1} parent=1 // pred_check_branch
      %61 = sbr.rel (0) target = $region49
    $region48: #{forward_fn.1} parent=1 // pred_region
      %62 = dma.done [#allocation4], 4608
    $region49: #{forward_fn.1} parent=1 // pred_fallthru
      _
    // Predicated region
    $region50: #{forward_fn.1} parent=1 // pred_check
      _
    $region51: #{forward_fn.1} parent=1 // pred_check_branch
      %64 = sbr.rel (0) target = $region53
    $region52: #{forward_fn.1} parent=1 // pred_region
      %65 = dma.done [#allocation6], 4096
    $region53: #{forward_fn.1} parent=1 // pred_fallthru
      _
    %v67 = vld [vmem:[%s0] sm:$0xff]
    %v68 = vld [vmem:[%s0 + $0x8] sm:$0xff]
    %v69 = vld [vmem:[%s0 + $0x10] sm:$0xff]
    %v70 = vld [vmem:[%s0 + $0x18] sm:$0xff]
    %v71 = vld [vmem:[%s0 + $0x20] sm:$0xff]
    %v72 = vld [vmem:[%s0 + $0x28] sm:$0xff]
    %v73 = vld [vmem:[%s0 + $0x30] sm:$0xff]
    %v74 = vld [vmem:[%s0 + $0x38] sm:$0xff]
    %v75 = vld [vmem:[%s0 + $0x40] sm:$0xff]
    %v76 = vld [vmem:[%s0 + $0x48] sm:$0xff]
    %v77 = vld [vmem:[%s0 + $0x50] sm:$0xff]
    %v78 = vld [vmem:[%s0 + $0x58] sm:$0xff]
    %v79 = vld [vmem:[%s0 + $0x60] sm:$0xff]
    %v80 = vld [vmem:[%s0 + $0x68] sm:$0xff]
    %v81 = vld [vmem:[%s0 + $0x70] sm:$0xff]
    %v82 = vld [vmem:[%s0 + $0x78] sm:$0xff]
    %v83 = vld [vmem:[%s0 + $0x80] sm:$0xff]
    %v84 = vld [vmem:[%s0 + $0x88] sm:$0xff]
    %v85 = vld [vmem:[%s0 + $0x90] sm:$0xff]
    %v86 = vld [vmem:[%s0 + $0x98] sm:$0xff]
    %v87 = vld [vmem:[%s0 + $0xa0] sm:$0xff]
    %v88 = vld [vmem:[%s0 + $0xa8] sm:$0xff]
    %v89 = vld [vmem:[%s0 + $0xb0] sm:$0xff]
    %v90 = vld [vmem:[%s0 + $0xb8] sm:$0xff]
    %v91 = vld [vmem:[%s0 + $0xc0] sm:$0xff]
    %v92 = vld [vmem:[%s0 + $0xc8] sm:$0xff]
    %v93 = vld [vmem:[%s0 + $0xd0] sm:$0xff]
    %v94 = vld [vmem:[%s0 + $0xd8] sm:$0xff]
    %v95 = vld [vmem:[%s0 + $0xe0] sm:$0xff]
    %v96 = vld [vmem:[%s0 + $0xe8] sm:$0xff]
    %v97 = vld [vmem:[%s0 + $0xf0] sm:$0xff]
    %v98 = vld [vmem:[%s0 + $0xf8] sm:$0xff]
    %v99 = vlaneseq
    %v100 = vshrl.u32 %v99, 7
    %v101 = vadd.s32 %v100, 8
    %v102 = vadd.s32 %v100, 16
    %v103 = vadd.s32 %v100, 24
    %v104 = vadd.s32 %v100, 32
    %v105 = vadd.s32 %v100, 40
    %v106 = vadd.s32 %v100, 48
    %v107 = vadd.s32 %v100, 56
    %v108 = vadd.s32 %v100, 64
    %v109 = vadd.s32 %v100, 72
    %v110 = vadd.s32 %v100, 80
    %v111 = vadd.s32 %v100, 88
    %v112 = vadd.s32 %v100, 96
    %v113 = vadd.s32 %v100, 104
    %v114 = vadd.s32 %v100, 112
    %v115 = vadd.s32 %v100, 120
    %v116 = vadd.s32 %v100, 128
    %v117 = vadd.s32 %v100, 136
    %v118 = vadd.s32 %v100, 144
    %v119 = vadd.s32 %v100, 152
    %v120 = vadd.s32 %v100, 160
    %v121 = vadd.s32 %v100, 168
    %v122 = vadd.s32 %v100, 176
    %v123 = vadd.s32 %v100, 184
    %v124 = vadd.s32 %v100, 192
    %v125 = vadd.s32 %v100, 200
    %v126 = vadd.s32 %v100, 208
    %v127 = vadd.s32 %v100, 216
    %v128 = vadd.s32 %v100, 224
    %v129 = vadd.s32 %v100, 232
    %v130 = vadd.s32 %v100, 240
    %v131 = vadd.s32 %v100, 248
    %v132 = vand.u32 %v100, 31
    %v133 = vand.u32 %v101, 31
    %v134 = vand.u32 %v102, 31
    %v135 = vand.u32 %v103, 31
    %v136 = vand.u32 %v104, 31
    %v137 = vand.u32 %v105, 31
    %v138 = vand.u32 %v106, 31
    %v139 = vand.u32 %v107, 31
    %v140 = vand.u32 %v108, 31
    %v141 = vand.u32 %v109, 31
    %v142 = vand.u32 %v110, 31
    %v143 = vand.u32 %v111, 31
    %v144 = vand.u32 %v112, 31
    %v145 = vand.u32 %v113, 31
    %v146 = vand.u32 %v114, 31
    %v147 = vand.u32 %v115, 31
    %v148 = vand.u32 %v116, 31
    %v149 = vand.u32 %v117, 31
    %v150 = vand.u32 %v118, 31
    %v151 = vand.u32 %v119, 31
    %v152 = vand.u32 %v120, 31
    %v153 = vand.u32 %v121, 31
    %v154 = vand.u32 %v122, 31
    %v155 = vand.u32 %v123, 31
    %v156 = vand.u32 %v124, 31
    %v157 = vand.u32 %v125, 31
    %v158 = vand.u32 %v126, 31
    %v159 = vand.u32 %v127, 31
    %v160 = vand.u32 %v128, 31
    %v161 = vand.u32 %v129, 31
    %v162 = vand.u32 %v130, 31
    %v163 = vand.u32 %v131, 31
    %vm164 = vcmp.eq.s32.totalorder %v132, 0
    %vm165 = vcmp.eq.s32.totalorder %v133, 0
    %vm166 = vcmp.eq.s32.totalorder %v134, 0
    %vm167 = vcmp.eq.s32.totalorder %v135, 0
    %vm168 = vcmp.eq.s32.totalorder %v136, 0
    %vm169 = vcmp.eq.s32.totalorder %v137, 0
    %vm170 = vcmp.eq.s32.totalorder %v138, 0
    %vm171 = vcmp.eq.s32.totalorder %v139, 0
    %vm172 = vcmp.eq.s32.totalorder %v140, 0
    %vm173 = vcmp.eq.s32.totalorder %v141, 0
    %vm174 = vcmp.eq.s32.totalorder %v142, 0
    %vm175 = vcmp.eq.s32.totalorder %v143, 0
    %vm176 = vcmp.eq.s32.totalorder %v144, 0
    %vm177 = vcmp.eq.s32.totalorder %v145, 0
    %vm178 = vcmp.eq.s32.totalorder %v146, 0
    %vm179 = vcmp.eq.s32.totalorder %v147, 0
    %vm180 = vcmp.eq.s32.totalorder %v148, 0
    %vm181 = vcmp.eq.s32.totalorder %v149, 0
    %vm182 = vcmp.eq.s32.totalorder %v150, 0
    %vm183 = vcmp.eq.s32.totalorder %v151, 0
    %vm184 = vcmp.eq.s32.totalorder %v152, 0
    %vm185 = vcmp.eq.s32.totalorder %v153, 0
    %vm186 = vcmp.eq.s32.totalorder %v154, 0
    %vm187 = vcmp.eq.s32.totalorder %v155, 0
    %vm188 = vcmp.eq.s32.totalorder %v156, 0
    %vm189 = vcmp.eq.s32.totalorder %v157, 0
    %vm190 = vcmp.eq.s32.totalorder %v158, 0
    %vm191 = vcmp.eq.s32.totalorder %v159, 0
    %vm192 = vcmp.eq.s32.totalorder %v160, 0
    %vm193 = vcmp.eq.s32.totalorder %v161, 0
    %vm194 = vcmp.eq.s32.totalorder %v162, 0
    %vm195 = vcmp.eq.s32.totalorder %v163, 0
    %vm196 = vcmp.eq.s32.totalorder %v132, 31
    %vm197 = vcmp.eq.s32.totalorder %v133, 31
    %vm198 = vcmp.eq.s32.totalorder %v134, 31
    %vm199 = vcmp.eq.s32.totalorder %v135, 31
    %vm200 = vcmp.eq.s32.totalorder %v136, 31
    %vm201 = vcmp.eq.s32.totalorder %v137, 31
    %vm202 = vcmp.eq.s32.totalorder %v138, 31
    %vm203 = vcmp.eq.s32.totalorder %v139, 31
    %vm204 = vcmp.eq.s32.totalorder %v140, 31
    %vm205 = vcmp.eq.s32.totalorder %v141, 31
    %vm206 = vcmp.eq.s32.totalorder %v142, 31
    %vm207 = vcmp.eq.s32.totalorder %v143, 31
    %vm208 = vcmp.eq.s32.totalorder %v144, 31
    %vm209 = vcmp.eq.s32.totalorder %v145, 31
    %vm210 = vcmp.eq.s32.totalorder %v146, 31
    %vm211 = vcmp.eq.s32.totalorder %v147, 31
    %vm212 = vcmp.eq.s32.totalorder %v148, 31
    %vm213 = vcmp.eq.s32.totalorder %v149, 31
    %vm214 = vcmp.eq.s32.totalorder %v150, 31
    %vm215 = vcmp.eq.s32.totalorder %v151, 31
    %vm216 = vcmp.eq.s32.totalorder %v152, 31
    %vm217 = vcmp.eq.s32.totalorder %v153, 31
    %vm218 = vcmp.eq.s32.totalorder %v154, 31
    %vm219 = vcmp.eq.s32.totalorder %v155, 31
    %vm220 = vcmp.eq.s32.totalorder %v156, 31
    %vm221 = vcmp.eq.s32.totalorder %v157, 31
    %vm222 = vcmp.eq.s32.totalorder %v158, 31
    %vm223 = vcmp.eq.s32.totalorder %v159, 31
    %vm224 = vcmp.eq.s32.totalorder %v160, 31
    %vm225 = vcmp.eq.s32.totalorder %v161, 31
    %vm226 = vcmp.eq.s32.totalorder %v162, 31
    %vm227 = vcmp.eq.s32.totalorder %v163, 31
    %v228 = vrot.slane %v67, 7
    %v229 = vrot.slane %v68, 7
    %v230 = vrot.slane %v69, 7
    %v231 = vrot.slane %v70, 7
    %v232 = vrot.slane %v71, 7
    %v233 = vrot.slane %v72, 7
    %v234 = vrot.slane %v73, 7
    %v235 = vrot.slane %v74, 7
    %v236 = vrot.slane %v75, 7
    %v237 = vrot.slane %v76, 7
    %v238 = vrot.slane %v77, 7
    %v239 = vrot.slane %v78, 7
    %v240 = vrot.slane %v79, 7
    %v241 = vrot.slane %v80, 7
    %v242 = vrot.slane %v81, 7
    %v243 = vrot.slane %v82, 7
    %v244 = vrot.slane %v83, 7
    %v245 = vrot.slane %v84, 7
    %v246 = vrot.slane %v85, 7
    %v247 = vrot.slane %v86, 7
    %v248 = vrot.slane %v87, 7
    %v249 = vrot.slane %v88, 7
    %v250 = vrot.slane %v89, 7
    %v251 = vrot.slane %v90, 7
    %v252 = vrot.slane %v91, 7
    %v253 = vrot.slane %v92, 7
    %v254 = vrot.slane %v93, 7
    %v255 = vrot.slane %v94, 7
    %v256 = vrot.slane %v95, 7
    %v257 = vrot.slane %v96, 7
    %v258 = vrot.slane %v97, 7
    %v259 = vrot.slane %v98, 7
    %vm260 = vcmp.lt.s32.totalorder %v100, 1
    %v261 = vsel %vm260, %v258, %v259
    %v262 = vsel %vm260, %v257, %v258
    %v263 = vsel %vm260, %v256, %v257
    %v264 = vsel %vm260, %v255, %v256
    %v265 = vsel %vm260, %v254, %v255
    %v266 = vsel %vm260, %v253, %v254
    %v267 = vsel %vm260, %v252, %v253
    %v268 = vsel %vm260, %v251, %v252
    %v269 = vsel %vm260, %v250, %v251
    %v270 = vsel %vm260, %v249, %v250
    %v271 = vsel %vm260, %v248, %v249
    %v272 = vsel %vm260, %v247, %v248
    %v273 = vsel %vm260, %v246, %v247
    %v274 = vsel %vm260, %v245, %v246
    %v275 = vsel %vm260, %v244, %v245
    %v276 = vsel %vm260, %v243, %v244
    %v277 = vsel %vm260, %v242, %v243
    %v278 = vsel %vm260, %v241, %v242
    %v279 = vsel %vm260, %v240, %v241
    %v280 = vsel %vm260, %v239, %v240
    %v281 = vsel %vm260, %v238, %v239
    %v282 = vsel %vm260, %v237, %v238
    %v283 = vsel %vm260, %v236, %v237
    %v284 = vsel %vm260, %v235, %v236
    %v285 = vsel %vm260, %v234, %v235
    %v286 = vsel %vm260, %v233, %v234
    %v287 = vsel %vm260, %v232, %v233
    %v288 = vsel %vm260, %v231, %v232
    %v289 = vsel %vm260, %v230, %v231
    %v290 = vsel %vm260, %v229, %v230
    %v291 = vsel %vm260, %v228, %v229
    %v292 = vsel %vm260, %v259, %v228
    %v293 = vsel %vm164, 0.0, %v292
    %v294 = vsel %vm165, 0.0, %v291
    %v295 = vsel %vm166, 0.0, %v290
    %v296 = vsel %vm167, 0.0, %v289
    %v297 = vsel %vm168, 0.0, %v288
    %v298 = vsel %vm169, 0.0, %v287
    %v299 = vsel %vm170, 0.0, %v286
    %v300 = vsel %vm171, 0.0, %v285
    %v301 = vsel %vm172, 0.0, %v284
    %v302 = vsel %vm173, 0.0, %v283
    %v303 = vsel %vm174, 0.0, %v282
    %v304 = vsel %vm175, 0.0, %v281
    %v305 = vsel %vm176, 0.0, %v280
    %v306 = vsel %vm177, 0.0, %v279
    %v307 = vsel %vm178, 0.0, %v278
    %v308 = vsel %vm179, 0.0, %v277
    %v309 = vsel %vm180, 0.0, %v276
    %v310 = vsel %vm181, 0.0, %v275
    %v311 = vsel %vm182, 0.0, %v274
    %v312 = vsel %vm183, 0.0, %v273
    %v313 = vsel %vm184, 0.0, %v272
    %v314 = vsel %vm185, 0.0, %v271
    %v315 = vsel %vm186, 0.0, %v270
    %v316 = vsel %vm187, 0.0, %v269
    %v317 = vsel %vm188, 0.0, %v268
    %v318 = vsel %vm189, 0.0, %v267
    %v319 = vsel %vm190, 0.0, %v266
    %v320 = vsel %vm191, 0.0, %v265
    %v321 = vsel %vm192, 0.0, %v264
    %v322 = vsel %vm193, 0.0, %v263
    %v323 = vsel %vm194, 0.0, %v262
    %v324 = vsel %vm195, 0.0, %v261
    %v325 = vrot.slane %v67, 1
    %v326 = vrot.slane %v68, 1
    %v327 = vrot.slane %v69, 1
    %v328 = vrot.slane %v70, 1
    %v329 = vrot.slane %v71, 1
    %v330 = vrot.slane %v72, 1
    %v331 = vrot.slane %v73, 1
    %v332 = vrot.slane %v74, 1
    %v333 = vrot.slane %v75, 1
    %v334 = vrot.slane %v76, 1
    %v335 = vrot.slane %v77, 1
    %v336 = vrot.slane %v78, 1
    %v337 = vrot.slane %v79, 1
    %v338 = vrot.slane %v80, 1
    %v339 = vrot.slane %v81, 1
    %v340 = vrot.slane %v82, 1
    %v341 = vrot.slane %v83, 1
    %v342 = vrot.slane %v84, 1
    %v343 = vrot.slane %v85, 1
    %v344 = vrot.slane %v86, 1
    %v345 = vrot.slane %v87, 1
    %v346 = vrot.slane %v88, 1
    %v347 = vrot.slane %v89, 1
    %v348 = vrot.slane %v90, 1
    %v349 = vrot.slane %v91, 1
    %v350 = vrot.slane %v92, 1
    %v351 = vrot.slane %v93, 1
    %v352 = vrot.slane %v94, 1
    %v353 = vrot.slane %v95, 1
    %v354 = vrot.slane %v96, 1
    %v355 = vrot.slane %v97, 1
    %v356 = vrot.slane %v98, 1
    %vm357 = vcmp.lt.s32.totalorder %v100, 7
    %v358 = vsel %vm357, %v355, %v356
    %v359 = vsel %vm357, %v354, %v355
    %v360 = vsel %vm357, %v353, %v354
    %v361 = vsel %vm357, %v352, %v353
    %v362 = vsel %vm357, %v351, %v352
    %v363 = vsel %vm357, %v350, %v351
    %v364 = vsel %vm357, %v349, %v350
    %v365 = vsel %vm357, %v348, %v349
    %v366 = vsel %vm357, %v347, %v348
    %v367 = vsel %vm357, %v346, %v347
    %v368 = vsel %vm357, %v345, %v346
    %v369 = vsel %vm357, %v344, %v345
    %v370 = vsel %vm357, %v343, %v344
    %v371 = vsel %vm357, %v342, %v343
    %v372 = vsel %vm357, %v341, %v342
    %v373 = vsel %vm357, %v340, %v341
    %v374 = vsel %vm357, %v339, %v340
    %v375 = vsel %vm357, %v338, %v339
    %v376 = vsel %vm357, %v337, %v338
    %v377 = vsel %vm357, %v336, %v337
    %v378 = vsel %vm357, %v335, %v336
    %v379 = vsel %vm357, %v334, %v335
    %v380 = vsel %vm357, %v333, %v334
    %v381 = vsel %vm357, %v332, %v333
    %v382 = vsel %vm357, %v331, %v332
    %v383 = vsel %vm357, %v330, %v331
    %v384 = vsel %vm357, %v329, %v330
    %v385 = vsel %vm357, %v328, %v329
    %v386 = vsel %vm357, %v327, %v328
    %v387 = vsel %vm357, %v326, %v327
    %v388 = vsel %vm357, %v325, %v326
    %v389 = vsel %vm357, %v356, %v325
    %v390 = vsel %vm196, 0.0, %v388
    %v391 = vsel %vm197, 0.0, %v387
    %v392 = vsel %vm198, 0.0, %v386
    %v393 = vsel %vm199, 0.0, %v385
    %v394 = vsel %vm200, 0.0, %v384
    %v395 = vsel %vm201, 0.0, %v383
    %v396 = vsel %vm202, 0.0, %v382
    %v397 = vsel %vm203, 0.0, %v381
    %v398 = vsel %vm204, 0.0, %v380
    %v399 = vsel %vm205, 0.0, %v379
    %v400 = vsel %vm206, 0.0, %v378
    %v401 = vsel %vm207, 0.0, %v377
    %v402 = vsel %vm208, 0.0, %v376
    %v403 = vsel %vm209, 0.0, %v375
    %v404 = vsel %vm210, 0.0, %v374
    %v405 = vsel %vm211, 0.0, %v373
    %v406 = vsel %vm212, 0.0, %v372
    %v407 = vsel %vm213, 0.0, %v371
    %v408 = vsel %vm214, 0.0, %v370
    %v409 = vsel %vm215, 0.0, %v369
    %v410 = vsel %vm216, 0.0, %v368
    %v411 = vsel %vm217, 0.0, %v367
    %v412 = vsel %vm218, 0.0, %v366
    %v413 = vsel %vm219, 0.0, %v365
    %v414 = vsel %vm220, 0.0, %v364
    %v415 = vsel %vm221, 0.0, %v363
    %v416 = vsel %vm222, 0.0, %v362
    %v417 = vsel %vm223, 0.0, %v361
    %v418 = vsel %vm224, 0.0, %v360
    %v419 = vsel %vm225, 0.0, %v359
    %v420 = vsel %vm226, 0.0, %v358
    %v421 = vsel %vm227, 0.0, %v389
    %v422 = vld [vmem:[#allocation3] sm:$0xff]
    %v423 = vld [vmem:[#allocation3 + $0x8] sm:$0xff]
    %v424 = vld [vmem:[#allocation3 + $0x10] sm:$0xff]
    %v425 = vld [vmem:[#allocation3 + $0x18] sm:$0xff]
    %v426 = vld [vmem:[#allocation3 + $0x20] sm:$0xff]
    %v427 = vld [vmem:[#allocation3 + $0x28] sm:$0xff]
    %v428 = vld [vmem:[#allocation3 + $0x30] sm:$0xff]
    %v429 = vld [vmem:[#allocation3 + $0x38] sm:$0xff]
    %v430 = vld [vmem:[#allocation3 + $0x40] sm:$0xff]
    %v431 = vld [vmem:[#allocation3 + $0x48] sm:$0xff]
    %v432 = vld [vmem:[#allocation3 + $0x50] sm:$0xff]
    %v433 = vld [vmem:[#allocation3 + $0x58] sm:$0xff]
    %v434 = vpack.c.bf16 %v294, %v293
    %v435 = vpack.c.bf16 %v296, %v295
    %v436 = vpack.c.bf16 %v298, %v297
    %v437 = vpack.c.bf16 %v300, %v299
    %v438 = vpack.c.bf16 %v302, %v301
    %v439 = vpack.c.bf16 %v304, %v303
    %v440 = vpack.c.bf16 %v306, %v305
    %v441 = vpack.c.bf16 %v308, %v307
    %v442 = vpack.c.bf16 %v310, %v309
    %v443 = vpack.c.bf16 %v312, %v311
    %v444 = vpack.c.bf16 %v314, %v313
    %v445 = vpack.c.bf16 %v316, %v315
    %v446 = vpack.c.bf16 %v318, %v317
    %v447 = vpack.c.bf16 %v320, %v319
    %v448 = vpack.c.bf16 %v322, %v321
    %v449 = vpack.c.bf16 %v324, %v323
    %s450 = scalar_lea.vmem [#allocation3], 96
    %v451 = vld [vmem:[%s450] sm:$0xff]
    %v452 = vld [vmem:[%s450 + $0x8] sm:$0xff]
    %v453 = vld [vmem:[%s450 + $0x10] sm:$0xff]
    %v454 = vld [vmem:[%s450 + $0x18] sm:$0xff]
    %v455 = vld [vmem:[%s450 + $0x20] sm:$0xff]
    %v456 = vld [vmem:[%s450 + $0x28] sm:$0xff]
    %v457 = vld [vmem:[%s450 + $0x30] sm:$0xff]
    %v458 = vld [vmem:[%s450 + $0x38] sm:$0xff]
    %v459 = vld [vmem:[%s450 + $0x40] sm:$0xff]
    %v460 = vld [vmem:[%s450 + $0x48] sm:$0xff]
    %v461 = vld [vmem:[%s450 + $0x50] sm:$0xff]
    %v462 = vld [vmem:[%s450 + $0x58] sm:$0xff]
    %v463 = vpack.c.bf16 %v68, %v67
    %v464 = vpack.c.bf16 %v70, %v69
    %v465 = vpack.c.bf16 %v72, %v71
    %v466 = vpack.c.bf16 %v74, %v73
    %v467 = vpack.c.bf16 %v76, %v75
    %v468 = vpack.c.bf16 %v78, %v77
    %v469 = vpack.c.bf16 %v80, %v79
    %v470 = vpack.c.bf16 %v82, %v81
    %v471 = vpack.c.bf16 %v84, %v83
    %v472 = vpack.c.bf16 %v86, %v85
    %v473 = vpack.c.bf16 %v88, %v87
    %v474 = vpack.c.bf16 %v90, %v89
    %v475 = vpack.c.bf16 %v92, %v91
    %v476 = vpack.c.bf16 %v94, %v93
    %v477 = vpack.c.bf16 %v96, %v95
    %v478 = vpack.c.bf16 %v98, %v97
    %v491 = vunpack.c.l.b16 %v451
    %v492 = vunpack.c.h.b16 %v451
    %v493 = vunpack.c.l.b16 %v452
    %v494 = vunpack.c.h.b16 %v452
    %v495 = vunpack.c.l.b16 %v453
    %v496 = vunpack.c.h.b16 %v453
    %v497 = vunpack.c.l.b16 %v454
    %v498 = vunpack.c.h.b16 %v454
    %v499 = vunpack.c.l.b16 %v455
    %v500 = vunpack.c.h.b16 %v455
    %v501 = vunpack.c.l.b16 %v456
    %v502 = vunpack.c.h.b16 %v456
    %v503 = vunpack.c.l.b16 %v457
    %v504 = vunpack.c.h.b16 %v457
    %v505 = vunpack.c.l.b16 %v458
    %v506 = vunpack.c.h.b16 %v458
    %v507 = vunpack.c.l.b16 %v459
    %v508 = vunpack.c.h.b16 %v459
    %v509 = vunpack.c.l.b16 %v460
    %v510 = vunpack.c.h.b16 %v460
    %v511 = vunpack.c.l.b16 %v461
    %v512 = vunpack.c.h.b16 %v461
    %v513 = vunpack.c.l.b16 %v462
    %v514 = vunpack.c.h.b16 %v462
    %v515 = vpack.c.b16 %v493, %v491
    %v516 = vpack.c.b16 %v494, %v492
    %v517 = vpack.c.b16 %v497, %v495
    %v518 = vpack.c.b16 %v498, %v496
    %v519 = vpack.c.b16 %v501, %v499
    %v520 = vpack.c.b16 %v502, %v500
    %v521 = vpack.c.b16 %v505, %v503
    %v522 = vpack.c.b16 %v506, %v504
    %v523 = vpack.c.b16 %v509, %v507
    %v524 = vpack.c.b16 %v510, %v508
    %v525 = vpack.c.b16 %v513, %v511
    %v526 = vpack.c.b16 %v514, %v512
    %vm539 = vcmask 785408
    %v541 = vsel %vm539, %v463, 0
    %v544 = vsel %vm539, %v464, 0
    %v547 = vsel %vm539, %v465, 0
    %v550 = vsel %vm539, %v466, 0
    %v553 = vsel %vm539, %v467, 0
    %v556 = vsel %vm539, %v468, 0
    %v559 = vsel %vm539, %v469, 0
    %v562 = vsel %vm539, %v470, 0
    %v565 = vsel %vm539, %v471, 0
    %v568 = vsel %vm539, %v472, 0
    %v571 = vsel %vm539, %v473, 0
    %v574 = vsel %vm539, %v474, 0
    %v577 = vsel %vm539, %v475, 0
    %v580 = vsel %vm539, %v476, 0
    %v583 = vsel %vm539, %v477, 0
    %v586 = vsel %vm539, %v478, 0
    %588 = vmatprep.subr.bf16.mxu0 %v516
    %589 = vmatpush1.bf16.msra.mxu0 %v515
    %590 = vmatprep.subr.bf16.mxu0 %v518
    %591 = vmatpush1.bf16.msra.mxu0 %v517
    %592 = vmatprep.subr.bf16.mxu0 %v520
    %593 = vmatpush1.bf16.msra.mxu0 %v519
    %594 = vmatprep.subr.bf16.mxu0 %v522
    %595 = vmatpush1.bf16.msra.mxu0 %v521
    %596 = vmatprep.subr.bf16.mxu0 %v524
    %597 = vmatpush1.bf16.msra.mxu0 %v523
    %598 = vmatprep.subr.bf16.mxu0 %v526
    %599 = vmatpush1.bf16.msra.mxu0 %v525
    %600 = vmatprep.subr.bf16.mxu0 0
    %601 = vmatpush1.bf16.msra.mxu0 0
    %602 = vmatprep.subr.bf16.mxu0 0
    %603 = vmatpush1.bf16.msra.mxu0 0
    %604 = vmatprep.subr.bf16.mxu0 0
    %605 = vmatpush1.bf16.msra.mxu0 0
    %606 = vmatprep.subr.bf16.mxu0 0
    %607 = vmatpush1.bf16.msra.mxu0 0
    %608 = vmatprep.subr.bf16.mxu0 0
    %609 = vmatpush1.bf16.msra.mxu0 0
    %610 = vmatprep.subr.bf16.mxu0 0
    %611 = vmatpush1.bf16.msra.mxu0 0
    %612 = vmatprep.subr.bf16.mxu0 0
    %613 = vmatpush1.bf16.msra.mxu0 0
    %614 = vmatprep.subr.bf16.mxu0 0
    %615 = vmatpush1.bf16.msra.mxu0 0
    %616 = vmatprep.subr.bf16.mxu0 0
    %617 = vmatpush1.bf16.msra.mxu0 0
    %618 = vmatprep.subr.bf16.mxu0 0
    %619 = vmatpush1.bf16.msra.mxu0 0
    %620 = vmatprep.mubr.bf16.mxu0 0
    %621 = vmatmul.mubr.bf16.gmra.mrb[0].mxu0 %v541
    %v622 = vpop.f32.mrb[0].mxu0
    %v623 = vadd.f32 0.0, %v622
    %v624 = vpop.f32.mrb[0].mxu0
    %v625 = vadd.f32 0.0, %v624
    %v626 = vpop.f32.mrb[0].mxu0
    %v627 = vadd.f32 0.0, %v626
    %v628 = vpop.f32.mrb[0].mxu0
    %v629 = vadd.f32 0.0, %v628
    %630 = vmatprep.mubr.bf16.mxu0 0
    %631 = vmatmul.mubr.bf16.gmra.mrb[0].mxu0 %v544
    %v632 = vpop.f32.mrb[0].mxu0
    %v633 = vadd.f32 0.0, %v632
    %v634 = vpop.f32.mrb[0].mxu0
    %v635 = vadd.f32 0.0, %v634
    %v636 = vpop.f32.mrb[0].mxu0
    %v637 = vadd.f32 0.0, %v636
    %v638 = vpop.f32.mrb[0].mxu0
    %v639 = vadd.f32 0.0, %v638
    %640 = vmatprep.mubr.bf16.mxu0 0
    %641 = vmatmul.mubr.bf16.gmra.mrb[0].mxu0 %v547
    %v642 = vpop.f32.mrb[0].mxu0
    %v643 = vadd.f32 0.0, %v642
    %v644 = vpop.f32.mrb[0].mxu0
    %v645 = vadd.f32 0.0, %v644
    %v646 = vpop.f32.mrb[0].mxu0
    %v647 = vadd.f32 0.0, %v646
    %v648 = vpop.f32.mrb[0].mxu0
    %v649 = vadd.f32 0.0, %v648
    %650 = vmatprep.mubr.bf16.mxu0 0
    %651 = vmatmul.mubr.bf16.gmra.mrb[0].mxu0 %v550
    %v652 = vpop.f32.mrb[0].mxu0
    %v653 = vadd.f32 0.0, %v652
    %v654 = vpop.f32.mrb[0].mxu0
    %v655 = vadd.f32 0.0, %v654
    %v656 = vpop.f32.mrb[0].mxu0
    %v657 = vadd.f32 0.0, %v656
    %v658 = vpop.f32.mrb[0].mxu0
    %v659 = vadd.f32 0.0, %v658
    %660 = vmatprep.mubr.bf16.mxu0 0
    %661 = vmatmul.mubr.bf16.gmra.mrb[0].mxu0 %v553
    %v662 = vpop.f32.mrb[0].mxu0
    %v663 = vadd.f32 0.0, %v662
    %v664 = vpop.f32.mrb[0].mxu0
    %v665 = vadd.f32 0.0, %v664
    %v666 = vpop.f32.mrb[0].mxu0
    %v667 = vadd.f32 0.0, %v666
    %v668 = vpop.f32.mrb[0].mxu0
    %v669 = vadd.f32 0.0, %v668
    %670 = vmatprep.mubr.bf16.mxu0 0
    %671 = vmatmul.mubr.bf16.gmra.mrb[0].mxu0 %v556
    %v672 = vpop.f32.mrb[0].mxu0
    %v673 = vadd.f32 0.0, %v672
    %v674 = vpop.f32.mrb[0].mxu0
    %v675 = vadd.f32 0.0, %v674
    %v676 = vpop.f32.mrb[0].mxu0
    %v677 = vadd.f32 0.0, %v676
    %v678 = vpop.f32.mrb[0].mxu0
    %v679 = vadd.f32 0.0, %v678
    %680 = vmatprep.mubr.bf16.mxu0 0
    %681 = vmatmul.mubr.bf16.gmra.mrb[0].mxu0 %v559
    %v682 = vpop.f32.mrb[0].mxu0
    %v683 = vadd.f32 0.0, %v682
    %v684 = vpop.f32.mrb[0].mxu0
    %v685 = vadd.f32 0.0, %v684
    %v686 = vpop.f32.mrb[0].mxu0
    %v687 = vadd.f32 0.0, %v686
    %v688 = vpop.f32.mrb[0].mxu0
    %v689 = vadd.f32 0.0, %v688
    %690 = vmatprep.mubr.bf16.mxu0 0
    %691 = vmatmul.mubr.bf16.gmra.mrb[0].mxu0 %v562
    %v692 = vpop.f32.mrb[0].mxu0
    %v693 = vadd.f32 0.0, %v692
    %v694 = vpop.f32.mrb[0].mxu0
    %v695 = vadd.f32 0.0, %v694
    %v696 = vpop.f32.mrb[0].mxu0
    %v697 = vadd.f32 0.0, %v696
    %v698 = vpop.f32.mrb[0].mxu0
    %v699 = vadd.f32 0.0, %v698
    %700 = vmatprep.mubr.bf16.mxu0 0
    %701 = vmatmul.mubr.bf16.gmra.mrb[0].mxu0 %v565
    %v702 = vpop.f32.mrb[0].mxu0
    %v703 = vadd.f32 0.0, %v702
    %v704 = vpop.f32.mrb[0].mxu0
    %v705 = vadd.f32 0.0, %v704
    %v706 = vpop.f32.mrb[0].mxu0
    %v707 = vadd.f32 0.0, %v706
    %v708 = vpop.f32.mrb[0].mxu0
    %v709 = vadd.f32 0.0, %v708
    %710 = vmatprep.mubr.bf16.mxu0 0
    %711 = vmatmul.mubr.bf16.gmra.mrb[0].mxu0 %v568
    %v712 = vpop.f32.mrb[0].mxu0
    %v713 = vadd.f32 0.0, %v712
    %v714 = vpop.f32.mrb[0].mxu0
    %v715 = vadd.f32 0.0, %v714
    %v716 = vpop.f32.mrb[0].mxu0
    %v717 = vadd.f32 0.0, %v716
    %v718 = vpop.f32.mrb[0].mxu0
    %v719 = vadd.f32 0.0, %v718
    %720 = vmatprep.mubr.bf16.mxu0 0
    %721 = vmatmul.mubr.bf16.gmra.mrb[0].mxu0 %v571
    %v722 = vpop.f32.mrb[0].mxu0
    %v723 = vadd.f32 0.0, %v722
    %v724 = vpop.f32.mrb[0].mxu0
    %v725 = vadd.f32 0.0, %v724
    %v726 = vpop.f32.mrb[0].mxu0
    %v727 = vadd.f32 0.0, %v726
    %v728 = vpop.f32.mrb[0].mxu0
    %v729 = vadd.f32 0.0, %v728
    %730 = vmatprep.mubr.bf16.mxu0 0
    %731 = vmatmul.mubr.bf16.gmra.mrb[0].mxu0 %v574
    %v732 = vpop.f32.mrb[0].mxu0
    %v733 = vadd.f32 0.0, %v732
    %v734 = vpop.f32.mrb[0].mxu0
    %v735 = vadd.f32 0.0, %v734
    %v736 = vpop.f32.mrb[0].mxu0
    %v737 = vadd.f32 0.0, %v736
    %v738 = vpop.f32.mrb[0].mxu0
    %v739 = vadd.f32 0.0, %v738
    %740 = vmatprep.mubr.bf16.mxu0 0
    %741 = vmatmul.mubr.bf16.gmra.mrb[0].mxu0 %v577
    %v742 = vpop.f32.mrb[0].mxu0
    %v743 = vadd.f32 0.0, %v742
    %v744 = vpop.f32.mrb[0].mxu0
    %v745 = vadd.f32 0.0, %v744
    %v746 = vpop.f32.mrb[0].mxu0
    %v747 = vadd.f32 0.0, %v746
    %v748 = vpop.f32.mrb[0].mxu0
    %v749 = vadd.f32 0.0, %v748
    %750 = vmatprep.mubr.bf16.mxu0 0
    %751 = vmatmul.mubr.bf16.gmra.mrb[0].mxu0 %v580
    %v752 = vpop.f32.mrb[0].mxu0
    %v753 = vadd.f32 0.0, %v752
    %v754 = vpop.f32.mrb[0].mxu0
    %v755 = vadd.f32 0.0, %v754
    %v756 = vpop.f32.mrb[0].mxu0
    %v757 = vadd.f32 0.0, %v756
    %v758 = vpop.f32.mrb[0].mxu0
    %v759 = vadd.f32 0.0, %v758
    %760 = vmatprep.mubr.bf16.mxu0 0
    %761 = vmatmul.mubr.bf16.gmra.mrb[0].mxu0 %v583
    %v762 = vpop.f32.mrb[0].mxu0
    %v763 = vadd.f32 0.0, %v762
    %v764 = vpop.f32.mrb[0].mxu0
    %v765 = vadd.f32 0.0, %v764
    %v766 = vpop.f32.mrb[0].mxu0
    %v767 = vadd.f32 0.0, %v766
    %v768 = vpop.f32.mrb[0].mxu0
    %v769 = vadd.f32 0.0, %v768
    %770 = vmatprep.mubr.bf16.mxu0 0
    %771 = vmatmul.mubr.bf16.gmra.mrb[0].mxu0 %v586
    %v772 = vpop.f32.mrb[0].mxu0
    %v773 = vadd.f32 0.0, %v772
    %v774 = vpop.f32.mrb[0].mxu0
    %v775 = vadd.f32 0.0, %v774
    %v776 = vpop.f32.mrb[0].mxu0
    %v777 = vadd.f32 0.0, %v776
    %v778 = vpop.f32.mrb[0].mxu0
    %v779 = vadd.f32 0.0, %v778
    %780 = vdwg.mxu0
    %v793 = vunpack.c.l.b16 %v422
    %v794 = vunpack.c.h.b16 %v422
    %v795 = vunpack.c.l.b16 %v423
    %v796 = vunpack.c.h.b16 %v423
    %v797 = vunpack.c.l.b16 %v424
    %v798 = vunpack.c.h.b16 %v424
    %v799 = vunpack.c.l.b16 %v425
    %v800 = vunpack.c.h.b16 %v425
    %v801 = vunpack.c.l.b16 %v426
    %v802 = vunpack.c.h.b16 %v426
    %v803 = vunpack.c.l.b16 %v427
    %v804 = vunpack.c.h.b16 %v427
    %v805 = vunpack.c.l.b16 %v428
    %v806 = vunpack.c.h.b16 %v428
    %v807 = vunpack.c.l.b16 %v429
    %v808 = vunpack.c.h.b16 %v429
    %v809 = vunpack.c.l.b16 %v430
    %v810 = vunpack.c.h.b16 %v430
    %v811 = vunpack.c.l.b16 %v431
    %v812 = vunpack.c.h.b16 %v431
    %v813 = vunpack.c.l.b16 %v432
    %v814 = vunpack.c.h.b16 %v432
    %v815 = vunpack.c.l.b16 %v433
    %v816 = vunpack.c.h.b16 %v433
    %v817 = vpack.c.b16 %v795, %v793
    %v818 = vpack.c.b16 %v796, %v794
    %v819 = vpack.c.b16 %v799, %v797
    %v820 = vpack.c.b16 %v800, %v798
    %v821 = vpack.c.b16 %v803, %v801
    %v822 = vpack.c.b16 %v804, %v802
    %v823 = vpack.c.b16 %v807, %v805
    %v824 = vpack.c.b16 %v808, %v806
    %v825 = vpack.c.b16 %v811, %v809
    %v826 = vpack.c.b16 %v812, %v810
    %v827 = vpack.c.b16 %v815, %v813
    %v828 = vpack.c.b16 %v816, %v814
    %v842 = vsel %vm539, %v434, 0
    %v845 = vsel %vm539, %v435, 0
    %v848 = vsel %vm539, %v436, 0
    %v851 = vsel %vm539, %v437, 0
    %v854 = vsel %vm539, %v438, 0
    %v857 = vsel %vm539, %v439, 0
    %v860 = vsel %vm539, %v440, 0
    %v863 = vsel %vm539, %v441, 0
    %v866 = vsel %vm539, %v442, 0
    %v869 = vsel %vm539, %v443, 0
    %v872 = vsel %vm539, %v444, 0
    %v875 = vsel %vm539, %v445, 0
    %v878 = vsel %vm539, %v446, 0
    %v881 = vsel %vm539, %v447, 0
    %v884 = vsel %vm539, %v448, 0
    %v887 = vsel %vm539, %v449, 0
    %889 = vmatprep.subr.bf16.mxu0 %v818
    %890 = vmatpush1.bf16.msra.mxu0 %v817
    %891 = vmatprep.subr.bf16.mxu0 %v820
    %892 = vmatpush1.bf16.msra.mxu0 %v819
    %893 = vmatprep.subr.bf16.mxu0 %v822
    %894 = vmatpush1.bf16.msra.mxu0 %v821
    %895 = vmatprep.subr.bf16.mxu0 %v824
    %896 = vmatpush1.bf16.msra.mxu0 %v823
    %897 = vmatprep.subr.bf16.mxu0 %v826
    %898 = vmatpush1.bf16.msra.mxu0 %v825
    %899 = vmatprep.subr.bf16.mxu0 %v828
    %900 = vmatpush1.bf16.msra.mxu0 %v827
    %901 = vmatprep.subr.bf16.mxu0 0
    %902 = vmatpush1.bf16.msra.mxu0 0
    %903 = vmatprep.subr.bf16.mxu0 0
    %904 = vmatpush1.bf16.msra.mxu0 0
    %905 = vmatprep.subr.bf16.mxu0 0
    %906 = vmatpush1.bf16.msra.mxu0 0
    %907 = vmatprep.subr.bf16.mxu0 0
    %908 = vmatpush1.bf16.msra.mxu0 0
    %909 = vmatprep.subr.bf16.mxu0 0
    %910 = vmatpush1.bf16.msra.mxu0 0
    %911 = vmatprep.subr.bf16.mxu0 0
    %912 = vmatpush1.bf16.msra.mxu0 0
    %913 = vmatprep.subr.bf16.mxu0 0
    %914 = vmatpush1.bf16.msra.mxu0 0
    %915 = vmatprep.subr.bf16.mxu0 0
    %916 = vmatpush1.bf16.msra.mxu0 0
    %917 = vmatprep.subr.bf16.mxu0 0
    %918 = vmatpush1.bf16.msra.mxu0 0
    %919 = vmatprep.subr.bf16.mxu0 0
    %920 = vmatpush1.bf16.msra.mxu0 0
    %921 = vmatprep.mubr.bf16.mxu0 0
    %922 = vmatmul.mubr.bf16.gmra.mrb[0].mxu0 %v842
    %v923 = vpop.f32.mrb[0].mxu0
    %v924 = vadd.f32 %v623, %v923
    %v925 = vpop.f32.mrb[0].mxu0
    %v926 = vadd.f32 %v625, %v925
    %v927 = vpop.f32.mrb[0].mxu0
    %v928 = vadd.f32 %v627, %v927
    %v929 = vpop.f32.mrb[0].mxu0
    %v930 = vadd.f32 %v629, %v929
    %931 = vmatprep.mubr.bf16.mxu0 0
    %932 = vmatmul.mubr.bf16.gmra.mrb[0].mxu0 %v845
    %v933 = vpop.f32.mrb[0].mxu0
    %v934 = vadd.f32 %v633, %v933
    %v935 = vpop.f32.mrb[0].mxu0
    %v936 = vadd.f32 %v635, %v935
    %v937 = vpop.f32.mrb[0].mxu0
    %v938 = vadd.f32 %v637, %v937
    %v939 = vpop.f32.mrb[0].mxu0
    %v940 = vadd.f32 %v639, %v939
    %941 = vmatprep.mubr.bf16.mxu0 0
    %942 = vmatmul.mubr.bf16.gmra.mrb[0].mxu0 %v848
    %v943 = vpop.f32.mrb[0].mxu0
    %v944 = vadd.f32 %v643, %v943
    %v945 = vpop.f32.mrb[0].mxu0
    %v946 = vadd.f32 %v645, %v945
    %v947 = vpop.f32.mrb[0].mxu0
    %v948 = vadd.f32 %v647, %v947
    %v949 = vpop.f32.mrb[0].mxu0
    %v950 = vadd.f32 %v649, %v949
    %951 = vmatprep.mubr.bf16.mxu0 0
    %952 = vmatmul.mubr.bf16.gmra.mrb[0].mxu0 %v851
    %v953 = vpop.f32.mrb[0].mxu0
    %v954 = vadd.f32 %v653, %v953
    %v955 = vpop.f32.mrb[0].mxu0
    %v956 = vadd.f32 %v655, %v955
    %v957 = vpop.f32.mrb[0].mxu0
    %v958 = vadd.f32 %v657, %v957
    %v959 = vpop.f32.mrb[0].mxu0
    %v960 = vadd.f32 %v659, %v959
    %961 = vmatprep.mubr.bf16.mxu0 0
    %962 = vmatmul.mubr.bf16.gmra.mrb[0].mxu0 %v854
    %v963 = vpop.f32.mrb[0].mxu0
    %v964 = vadd.f32 %v663, %v963
    %v965 = vpop.f32.mrb[0].mxu0
    %v966 = vadd.f32 %v665, %v965
    %v967 = vpop.f32.mrb[0].mxu0
    %v968 = vadd.f32 %v667, %v967
    %v969 = vpop.f32.mrb[0].mxu0
    %v970 = vadd.f32 %v669, %v969
    %971 = vmatprep.mubr.bf16.mxu0 0
    %972 = vmatmul.mubr.bf16.gmra.mrb[0].mxu0 %v857
    %v973 = vpop.f32.mrb[0].mxu0
    %v974 = vadd.f32 %v673, %v973
    %v975 = vpop.f32.mrb[0].mxu0
    %v976 = vadd.f32 %v675, %v975
    %v977 = vpop.f32.mrb[0].mxu0
    %v978 = vadd.f32 %v677, %v977
    %v979 = vpop.f32.mrb[0].mxu0
    %v980 = vadd.f32 %v679, %v979
    %981 = vmatprep.mubr.bf16.mxu0 0
    %982 = vmatmul.mubr.bf16.gmra.mrb[0].mxu0 %v860
    %v983 = vpop.f32.mrb[0].mxu0
    %v984 = vadd.f32 %v683, %v983
    %v985 = vpop.f32.mrb[0].mxu0
    %v986 = vadd.f32 %v685, %v985
    %v987 = vpop.f32.mrb[0].mxu0
    %v988 = vadd.f32 %v687, %v987
    %v989 = vpop.f32.mrb[0].mxu0
    %v990 = vadd.f32 %v689, %v989
    %991 = vmatprep.mubr.bf16.mxu0 0
    %992 = vmatmul.mubr.bf16.gmra.mrb[0].mxu0 %v863
    %v993 = vpop.f32.mrb[0].mxu0
    %v994 = vadd.f32 %v693, %v993
    %v995 = vpop.f32.mrb[0].mxu0
    %v996 = vadd.f32 %v695, %v995
    %v997 = vpop.f32.mrb[0].mxu0
    %v998 = vadd.f32 %v697, %v997
    %v999 = vpop.f32.mrb[0].mxu0
    %v1000 = vadd.f32 %v699, %v999
    %1001 = vmatprep.mubr.bf16.mxu0 0
    %1002 = vmatmul.mubr.bf16.gmra.mrb[0].mxu0 %v866
    %v1003 = vpop.f32.mrb[0].mxu0
    %v1004 = vadd.f32 %v703, %v1003
    %v1005 = vpop.f32.mrb[0].mxu0
    %v1006 = vadd.f32 %v705, %v1005
    %v1007 = vpop.f32.mrb[0].mxu0
    %v1008 = vadd.f32 %v707, %v1007
    %v1009 = vpop.f32.mrb[0].mxu0
    %v1010 = vadd.f32 %v709, %v1009
    %1011 = vmatprep.mubr.bf16.mxu0 0
    %1012 = vmatmul.mubr.bf16.gmra.mrb[0].mxu0 %v869
    %v1013 = vpop.f32.mrb[0].mxu0
    %v1014 = vadd.f32 %v713, %v1013
    %v1015 = vpop.f32.mrb[0].mxu0
    %v1016 = vadd.f32 %v715, %v1015
    %v1017 = vpop.f32.mrb[0].mxu0
    %v1018 = vadd.f32 %v717, %v1017
    %v1019 = vpop.f32.mrb[0].mxu0
    %v1020 = vadd.f32 %v719, %v1019
    %1021 = vmatprep.mubr.bf16.mxu0 0
    %1022 = vmatmul.mubr.bf16.gmra.mrb[0].mxu0 %v872
    %v1023 = vpop.f32.mrb[0].mxu0
    %v1024 = vadd.f32 %v723, %v1023
    %v1025 = vpop.f32.mrb[0].mxu0
    %v1026 = vadd.f32 %v725, %v1025
    %v1027 = vpop.f32.mrb[0].mxu0
    %v1028 = vadd.f32 %v727, %v1027
    %v1029 = vpop.f32.mrb[0].mxu0
    %v1030 = vadd.f32 %v729, %v1029
    %1031 = vmatprep.mubr.bf16.mxu0 0
    %1032 = vmatmul.mubr.bf16.gmra.mrb[0].mxu0 %v875
    %v1033 = vpop.f32.mrb[0].mxu0
    %v1034 = vadd.f32 %v733, %v1033
    %v1035 = vpop.f32.mrb[0].mxu0
    %v1036 = vadd.f32 %v735, %v1035
    %v1037 = vpop.f32.mrb[0].mxu0
    %v1038 = vadd.f32 %v737, %v1037
    %v1039 = vpop.f32.mrb[0].mxu0
    %v1040 = vadd.f32 %v739, %v1039
    %1041 = vmatprep.mubr.bf16.mxu0 0
    %1042 = vmatmul.mubr.bf16.gmra.mrb[0].mxu0 %v878
    %v1043 = vpop.f32.mrb[0].mxu0
    %v1044 = vadd.f32 %v743, %v1043
    %v1045 = vpop.f32.mrb[0].mxu0
    %v1046 = vadd.f32 %v745, %v1045
    %v1047 = vpop.f32.mrb[0].mxu0
    %v1048 = vadd.f32 %v747, %v1047
    %v1049 = vpop.f32.mrb[0].mxu0
    %v1050 = vadd.f32 %v749, %v1049
    %1051 = vmatprep.mubr.bf16.mxu0 0
    %1052 = vmatmul.mubr.bf16.gmra.mrb[0].mxu0 %v881
    %v1053 = vpop.f32.mrb[0].mxu0
    %v1054 = vadd.f32 %v753, %v1053
    %v1055 = vpop.f32.mrb[0].mxu0
    %v1056 = vadd.f32 %v755, %v1055
    %v1057 = vpop.f32.mrb[0].mxu0
    %v1058 = vadd.f32 %v757, %v1057
    %v1059 = vpop.f32.mrb[0].mxu0
    %v1060 = vadd.f32 %v759, %v1059
    %1061 = vmatprep.mubr.bf16.mxu0 0
    %1062 = vmatmul.mubr.bf16.gmra.mrb[0].mxu0 %v884
    %v1063 = vpop.f32.mrb[0].mxu0
    %v1064 = vadd.f32 %v763, %v1063
    %v1065 = vpop.f32.mrb[0].mxu0
    %v1066 = vadd.f32 %v765, %v1065
    %v1067 = vpop.f32.mrb[0].mxu0
    %v1068 = vadd.f32 %v767, %v1067
    %v1069 = vpop.f32.mrb[0].mxu0
    %v1070 = vadd.f32 %v769, %v1069
    %1071 = vmatprep.mubr.bf16.mxu0 0
    %1072 = vmatmul.mubr.bf16.gmra.mrb[0].mxu0 %v887
    %v1073 = vpop.f32.mrb[0].mxu0
    %v1074 = vadd.f32 %v773, %v1073
    %v1075 = vpop.f32.mrb[0].mxu0
    %v1076 = vadd.f32 %v775, %v1075
    %v1077 = vpop.f32.mrb[0].mxu0
    %v1078 = vadd.f32 %v777, %v1077
    %v1079 = vpop.f32.mrb[0].mxu0
    %v1080 = vadd.f32 %v779, %v1079
    %1081 = vdwg.mxu0
    %s1082 = scalar_lea.vmem [#allocation3], 192
    %v1083 = vld [vmem:[%s1082] sm:$0xff]
    %v1084 = vld [vmem:[%s1082 + $0x8] sm:$0xff]
    %v1085 = vld [vmem:[%s1082 + $0x10] sm:$0xff]
    %v1086 = vld [vmem:[%s1082 + $0x18] sm:$0xff]
    %v1087 = vld [vmem:[%s1082 + $0x20] sm:$0xff]
    %v1088 = vld [vmem:[%s1082 + $0x28] sm:$0xff]
    %v1089 = vld [vmem:[%s1082 + $0x30] sm:$0xff]
    %v1090 = vld [vmem:[%s1082 + $0x38] sm:$0xff]
    %v1091 = vld [vmem:[%s1082 + $0x40] sm:$0xff]
    %v1092 = vld [vmem:[%s1082 + $0x48] sm:$0xff]
    %v1093 = vld [vmem:[%s1082 + $0x50] sm:$0xff]
    %v1094 = vld [vmem:[%s1082 + $0x58] sm:$0xff]
    %v1095 = vpack.c.bf16 %v391, %v390
    %v1096 = vpack.c.bf16 %v393, %v392
    %v1097 = vpack.c.bf16 %v395, %v394
    %v1098 = vpack.c.bf16 %v397, %v396
    %v1099 = vpack.c.bf16 %v399, %v398
    %v1100 = vpack.c.bf16 %v401, %v400
    %v1101 = vpack.c.bf16 %v403, %v402
    %v1102 = vpack.c.bf16 %v405, %v404
    %v1103 = vpack.c.bf16 %v407, %v406
    %v1104 = vpack.c.bf16 %v409, %v408
    %v1105 = vpack.c.bf16 %v411, %v410
    %v1106 = vpack.c.bf16 %v413, %v412
    %v1107 = vpack.c.bf16 %v415, %v414
    %v1108 = vpack.c.bf16 %v417, %v416
    %v1109 = vpack.c.bf16 %v419, %v418
    %v1110 = vpack.c.bf16 %v421, %v420
    %v1123 = vunpack.c.l.b16 %v1083
    %v1124 = vunpack.c.h.b16 %v1083
    %v1125 = vunpack.c.l.b16 %v1084
    %v1126 = vunpack.c.h.b16 %v1084
    %v1127 = vunpack.c.l.b16 %v1085
    %v1128 = vunpack.c.h.b16 %v1085
    %v1129 = vunpack.c.l.b16 %v1086
    %v1130 = vunpack.c.h.b16 %v1086
    %v1131 = vunpack.c.l.b16 %v1087
    %v1132 = vunpack.c.h.b16 %v1087
    %v1133 = vunpack.c.l.b16 %v1088
    %v1134 = vunpack.c.h.b16 %v1088
    %v1135 = vunpack.c.l.b16 %v1089
    %v1136 = vunpack.c.h.b16 %v1089
    %v1137 = vunpack.c.l.b16 %v1090
    %v1138 = vunpack.c.h.b16 %v1090
    %v1139 = vunpack.c.l.b16 %v1091
    %v1140 = vunpack.c.h.b16 %v1091
    %v1141 = vunpack.c.l.b16 %v1092
    %v1142 = vunpack.c.h.b16 %v1092
    %v1143 = vunpack.c.l.b16 %v1093
    %v1144 = vunpack.c.h.b16 %v1093
    %v1145 = vunpack.c.l.b16 %v1094
    %v1146 = vunpack.c.h.b16 %v1094
    %v1147 = vpack.c.b16 %v1125, %v1123
    %v1148 = vpack.c.b16 %v1126, %v1124
    %v1149 = vpack.c.b16 %v1129, %v1127
    %v1150 = vpack.c.b16 %v1130, %v1128
    %v1151 = vpack.c.b16 %v1133, %v1131
    %v1152 = vpack.c.b16 %v1134, %v1132
    %v1153 = vpack.c.b16 %v1137, %v1135
    %v1154 = vpack.c.b16 %v1138, %v1136
    %v1155 = vpack.c.b16 %v1141, %v1139
    %v1156 = vpack.c.b16 %v1142, %v1140
    %v1157 = vpack.c.b16 %v1145, %v1143
    %v1158 = vpack.c.b16 %v1146, %v1144
    %v1172 = vsel %vm539, %v1095, 0
    %v1175 = vsel %vm539, %v1096, 0
    %v1178 = vsel %vm539, %v1097, 0
    %v1181 = vsel %vm539, %v1098, 0
    %v1184 = vsel %vm539, %v1099, 0
    %v1187 = vsel %vm539, %v1100, 0
    %v1190 = vsel %vm539, %v1101, 0
    %v1193 = vsel %vm539, %v1102, 0
    %v1196 = vsel %vm539, %v1103, 0
    %v1199 = vsel %vm539, %v1104, 0
    %v1202 = vsel %vm539, %v1105, 0
    %v1205 = vsel %vm539, %v1106, 0
    %v1208 = vsel %vm539, %v1107, 0
    %v1211 = vsel %vm539, %v1108, 0
    %v1214 = vsel %vm539, %v1109, 0
    %v1217 = vsel %vm539, %v1110, 0
    %1219 = vmatprep.subr.bf16.mxu0 %v1148
    %1220 = vmatpush1.bf16.msra.mxu0 %v1147
    %1221 = vmatprep.subr.bf16.mxu0 %v1150
    %1222 = vmatpush1.bf16.msra.mxu0 %v1149
    %1223 = vmatprep.subr.bf16.mxu0 %v1152
    %1224 = vmatpush1.bf16.msra.mxu0 %v1151
    %1225 = vmatprep.subr.bf16.mxu0 %v1154
    %1226 = vmatpush1.bf16.msra.mxu0 %v1153
    %1227 = vmatprep.subr.bf16.mxu0 %v1156
    %1228 = vmatpush1.bf16.msra.mxu0 %v1155
    %1229 = vmatprep.subr.bf16.mxu0 %v1158
    %1230 = vmatpush1.bf16.msra.mxu0 %v1157
    %1231 = vmatprep.subr.bf16.mxu0 0
    %1232 = vmatpush1.bf16.msra.mxu0 0
    %1233 = vmatprep.subr.bf16.mxu0 0
    %1234 = vmatpush1.bf16.msra.mxu0 0
    %1235 = vmatprep.subr.bf16.mxu0 0
    %1236 = vmatpush1.bf16.msra.mxu0 0
    %1237 = vmatprep.subr.bf16.mxu0 0
    %1238 = vmatpush1.bf16.msra.mxu0 0
    %1239 = vmatprep.subr.bf16.mxu0 0
    %1240 = vmatpush1.bf16.msra.mxu0 0
    %1241 = vmatprep.subr.bf16.mxu0 0
    %1242 = vmatpush1.bf16.msra.mxu0 0
    %1243 = vmatprep.subr.bf16.mxu0 0
    %1244 = vmatpush1.bf16.msra.mxu0 0
    %1245 = vmatprep.subr.bf16.mxu0 0
    %1246 = vmatpush1.bf16.msra.mxu0 0
    %1247 = vmatprep.subr.bf16.mxu0 0
    %1248 = vmatpush1.bf16.msra.mxu0 0
    %1249 = vmatprep.subr.bf16.mxu0 0
    %1250 = vmatpush1.bf16.msra.mxu0 0
    %1251 = vmatprep.mubr.bf16.mxu0 0
    %1252 = vmatmul.mubr.bf16.gmra.mrb[0].mxu0 %v1172
    %v1253 = vpop.f32.mrb[0].mxu0
    %v1254 = vadd.f32 0.0, %v1253
    %v1255 = vpop.f32.mrb[0].mxu0
    %v1256 = vadd.f32 0.0, %v1255
    %v1257 = vpop.f32.mrb[0].mxu0
    %v1258 = vadd.f32 0.0, %v1257
    %v1259 = vpop.f32.mrb[0].mxu0
    %v1260 = vadd.f32 0.0, %v1259
    %1261 = vmatprep.mubr.bf16.mxu0 0
    %1262 = vmatmul.mubr.bf16.gmra.mrb[0].mxu0 %v1175
    %v1263 = vpop.f32.mrb[0].mxu0
    %v1264 = vadd.f32 0.0, %v1263
    %v1265 = vpop.f32.mrb[0].mxu0
    %v1266 = vadd.f32 0.0, %v1265
    %v1267 = vpop.f32.mrb[0].mxu0
    %v1268 = vadd.f32 0.0, %v1267
    %v1269 = vpop.f32.mrb[0].mxu0
    %v1270 = vadd.f32 0.0, %v1269
    %1271 = vmatprep.mubr.bf16.mxu0 0
    %1272 = vmatmul.mubr.bf16.gmra.mrb[0].mxu0 %v1178
    %v1273 = vpop.f32.mrb[0].mxu0
    %v1274 = vadd.f32 0.0, %v1273
    %v1275 = vpop.f32.mrb[0].mxu0
    %v1276 = vadd.f32 0.0, %v1275
    %v1277 = vpop.f32.mrb[0].mxu0
    %v1278 = vadd.f32 0.0, %v1277
    %v1279 = vpop.f32.mrb[0].mxu0
    %v1280 = vadd.f32 0.0, %v1279
    %1281 = vmatprep.mubr.bf16.mxu0 0
    %1282 = vmatmul.mubr.bf16.gmra.mrb[0].mxu0 %v1181
    %v1283 = vpop.f32.mrb[0].mxu0
    %v1284 = vadd.f32 0.0, %v1283
    %v1285 = vpop.f32.mrb[0].mxu0
    %v1286 = vadd.f32 0.0, %v1285
    %v1287 = vpop.f32.mrb[0].mxu0
    %v1288 = vadd.f32 0.0, %v1287
    %v1289 = vpop.f32.mrb[0].mxu0
    %v1290 = vadd.f32 0.0, %v1289
    %1291 = vmatprep.mubr.bf16.mxu0 0
    %1292 = vmatmul.mubr.bf16.gmra.mrb[0].mxu0 %v1184
    %v1293 = vpop.f32.mrb[0].mxu0
    %v1294 = vadd.f32 0.0, %v1293
    %v1295 = vpop.f32.mrb[0].mxu0
    %v1296 = vadd.f32 0.0, %v1295
    %v1297 = vpop.f32.mrb[0].mxu0
    %v1298 = vadd.f32 0.0, %v1297
    %v1299 = vpop.f32.mrb[0].mxu0
    %v1300 = vadd.f32 0.0, %v1299
    %1301 = vmatprep.mubr.bf16.mxu0 0
    %1302 = vmatmul.mubr.bf16.gmra.mrb[0].mxu0 %v1187
    %v1303 = vpop.f32.mrb[0].mxu0
    %v1304 = vadd.f32 0.0, %v1303
    %v1305 = vpop.f32.mrb[0].mxu0
    %v1306 = vadd.f32 0.0, %v1305
    %v1307 = vpop.f32.mrb[0].mxu0
    %v1308 = vadd.f32 0.0, %v1307
    %v1309 = vpop.f32.mrb[0].mxu0
    %v1310 = vadd.f32 0.0, %v1309
    %1311 = vmatprep.mubr.bf16.mxu0 0
    %1312 = vmatmul.mubr.bf16.gmra.mrb[0].mxu0 %v1190
    %v1313 = vpop.f32.mrb[0].mxu0
    %v1314 = vadd.f32 0.0, %v1313
    %v1315 = vpop.f32.mrb[0].mxu0
    %v1316 = vadd.f32 0.0, %v1315
    %v1317 = vpop.f32.mrb[0].mxu0
    %v1318 = vadd.f32 0.0, %v1317
    %v1319 = vpop.f32.mrb[0].mxu0
    %v1320 = vadd.f32 0.0, %v1319
    %1321 = vmatprep.mubr.bf16.mxu0 0
    %1322 = vmatmul.mubr.bf16.gmra.mrb[0].mxu0 %v1193
    %v1323 = vpop.f32.mrb[0].mxu0
    %v1324 = vadd.f32 0.0, %v1323
    %v1325 = vpop.f32.mrb[0].mxu0
    %v1326 = vadd.f32 0.0, %v1325
    %v1327 = vpop.f32.mrb[0].mxu0
    %v1328 = vadd.f32 0.0, %v1327
    %v1329 = vpop.f32.mrb[0].mxu0
    %v1330 = vadd.f32 0.0, %v1329
    %1331 = vmatprep.mubr.bf16.mxu0 0
    %1332 = vmatmul.mubr.bf16.gmra.mrb[0].mxu0 %v1196
    %v1333 = vpop.f32.mrb[0].mxu0
    %v1334 = vadd.f32 0.0, %v1333
    %v1335 = vpop.f32.mrb[0].mxu0
    %v1336 = vadd.f32 0.0, %v1335
    %v1337 = vpop.f32.mrb[0].mxu0
    %v1338 = vadd.f32 0.0, %v1337
    %v1339 = vpop.f32.mrb[0].mxu0
    %v1340 = vadd.f32 0.0, %v1339
    %1341 = vmatprep.mubr.bf16.mxu0 0
    %1342 = vmatmul.mubr.bf16.gmra.mrb[0].mxu0 %v1199
    %v1343 = vpop.f32.mrb[0].mxu0
    %v1344 = vadd.f32 0.0, %v1343
    %v1345 = vpop.f32.mrb[0].mxu0
    %v1346 = vadd.f32 0.0, %v1345
    %v1347 = vpop.f32.mrb[0].mxu0
    %v1348 = vadd.f32 0.0, %v1347
    %v1349 = vpop.f32.mrb[0].mxu0
    %v1350 = vadd.f32 0.0, %v1349
    %1351 = vmatprep.mubr.bf16.mxu0 0
    %1352 = vmatmul.mubr.bf16.gmra.mrb[0].mxu0 %v1202
    %v1353 = vpop.f32.mrb[0].mxu0
    %v1354 = vadd.f32 0.0, %v1353
    %v1355 = vpop.f32.mrb[0].mxu0
    %v1356 = vadd.f32 0.0, %v1355
    %v1357 = vpop.f32.mrb[0].mxu0
    %v1358 = vadd.f32 0.0, %v1357
    %v1359 = vpop.f32.mrb[0].mxu0
    %v1360 = vadd.f32 0.0, %v1359
    %1361 = vmatprep.mubr.bf16.mxu0 0
    %1362 = vmatmul.mubr.bf16.gmra.mrb[0].mxu0 %v1205
    %v1363 = vpop.f32.mrb[0].mxu0
    %v1364 = vadd.f32 0.0, %v1363
    %v1365 = vpop.f32.mrb[0].mxu0
    %v1366 = vadd.f32 0.0, %v1365
    %v1367 = vpop.f32.mrb[0].mxu0
    %v1368 = vadd.f32 0.0, %v1367
    %v1369 = vpop.f32.mrb[0].mxu0
    %v1370 = vadd.f32 0.0, %v1369
    %1371 = vmatprep.mubr.bf16.mxu0 0
    %1372 = vmatmul.mubr.bf16.gmra.mrb[0].mxu0 %v1208
    %v1373 = vpop.f32.mrb[0].mxu0
    %v1374 = vadd.f32 0.0, %v1373
    %v1375 = vpop.f32.mrb[0].mxu0
    %v1376 = vadd.f32 0.0, %v1375
    %v1377 = vpop.f32.mrb[0].mxu0
    %v1378 = vadd.f32 0.0, %v1377
    %v1379 = vpop.f32.mrb[0].mxu0
    %v1380 = vadd.f32 0.0, %v1379
    %1381 = vmatprep.mubr.bf16.mxu0 0
    %1382 = vmatmul.mubr.bf16.gmra.mrb[0].mxu0 %v1211
    %v1383 = vpop.f32.mrb[0].mxu0
    %v1384 = vadd.f32 0.0, %v1383
    %v1385 = vpop.f32.mrb[0].mxu0
    %v1386 = vadd.f32 0.0, %v1385
    %v1387 = vpop.f32.mrb[0].mxu0
    %v1388 = vadd.f32 0.0, %v1387
    %v1389 = vpop.f32.mrb[0].mxu0
    %v1390 = vadd.f32 0.0, %v1389
    %1391 = vmatprep.mubr.bf16.mxu0 0
    %1392 = vmatmul.mubr.bf16.gmra.mrb[0].mxu0 %v1214
    %v1393 = vpop.f32.mrb[0].mxu0
    %v1394 = vadd.f32 0.0, %v1393
    %v1395 = vpop.f32.mrb[0].mxu0
    %v1396 = vadd.f32 0.0, %v1395
    %v1397 = vpop.f32.mrb[0].mxu0
    %v1398 = vadd.f32 0.0, %v1397
    %v1399 = vpop.f32.mrb[0].mxu0
    %v1400 = vadd.f32 0.0, %v1399
    %1401 = vmatprep.mubr.bf16.mxu0 0
    %1402 = vmatmul.mubr.bf16.gmra.mrb[0].mxu0 %v1217
    %v1403 = vpop.f32.mrb[0].mxu0
    %v1404 = vadd.f32 0.0, %v1403
    %v1405 = vpop.f32.mrb[0].mxu0
    %v1406 = vadd.f32 0.0, %v1405
    %v1407 = vpop.f32.mrb[0].mxu0
    %v1408 = vadd.f32 0.0, %v1407
    %v1409 = vpop.f32.mrb[0].mxu0
    %v1410 = vadd.f32 0.0, %v1409
    %1411 = vdwg.mxu0
    %v1412 = vadd.f32 %v924, %v1254
    %v1413 = vadd.f32 %v926, %v1256
    %v1414 = vadd.f32 %v928, %v1258
    %v1415 = vadd.f32 %v930, %v1260
    %v1416 = vadd.f32 %v934, %v1264
    %v1417 = vadd.f32 %v936, %v1266
    %v1418 = vadd.f32 %v938, %v1268
    %v1419 = vadd.f32 %v940, %v1270
    %v1420 = vadd.f32 %v944, %v1274
    %v1421 = vadd.f32 %v946, %v1276
    %v1422 = vadd.f32 %v948, %v1278
    %v1423 = vadd.f32 %v950, %v1280
    %v1424 = vadd.f32 %v954, %v1284
    %v1425 = vadd.f32 %v956, %v1286
    %v1426 = vadd.f32 %v958, %v1288
    %v1427 = vadd.f32 %v960, %v1290
    %v1428 = vadd.f32 %v964, %v1294
    %v1429 = vadd.f32 %v966, %v1296
    %v1430 = vadd.f32 %v968, %v1298
    %v1431 = vadd.f32 %v970, %v1300
    %v1432 = vadd.f32 %v974, %v1304
    %v1433 = vadd.f32 %v976, %v1306
    %v1434 = vadd.f32 %v978, %v1308
    %v1435 = vadd.f32 %v980, %v1310
    %v1436 = vadd.f32 %v984, %v1314
    %v1437 = vadd.f32 %v986, %v1316
    %v1438 = vadd.f32 %v988, %v1318
    %v1439 = vadd.f32 %v990, %v1320
    %v1440 = vadd.f32 %v994, %v1324
    %v1441 = vadd.f32 %v996, %v1326
    %v1442 = vadd.f32 %v998, %v1328
    %v1443 = vadd.f32 %v1000, %v1330
    %v1444 = vadd.f32 %v1004, %v1334
    %v1445 = vadd.f32 %v1006, %v1336
    %v1446 = vadd.f32 %v1008, %v1338
    %v1447 = vadd.f32 %v1010, %v1340
    %v1448 = vadd.f32 %v1014, %v1344
    %v1449 = vadd.f32 %v1016, %v1346
    %v1450 = vadd.f32 %v1018, %v1348
    %v1451 = vadd.f32 %v1020, %v1350
    %v1452 = vadd.f32 %v1024, %v1354
    %v1453 = vadd.f32 %v1026, %v1356
    %v1454 = vadd.f32 %v1028, %v1358
    %v1455 = vadd.f32 %v1030, %v1360
    %v1456 = vadd.f32 %v1034, %v1364
    %v1457 = vadd.f32 %v1036, %v1366
    %v1458 = vadd.f32 %v1038, %v1368
    %v1459 = vadd.f32 %v1040, %v1370
    %v1460 = vadd.f32 %v1044, %v1374
    %v1461 = vadd.f32 %v1046, %v1376
    %v1462 = vadd.f32 %v1048, %v1378
    %v1463 = vadd.f32 %v1050, %v1380
    %v1464 = vadd.f32 %v1054, %v1384
    %v1465 = vadd.f32 %v1056, %v1386
    %v1466 = vadd.f32 %v1058, %v1388
    %v1467 = vadd.f32 %v1060, %v1390
    %v1468 = vadd.f32 %v1064, %v1394
    %v1469 = vadd.f32 %v1066, %v1396
    %v1470 = vadd.f32 %v1068, %v1398
    %v1471 = vadd.f32 %v1070, %v1400
    %v1472 = vadd.f32 %v1074, %v1404
    %v1473 = vadd.f32 %v1076, %v1406
    %v1474 = vadd.f32 %v1078, %v1408
    %v1475 = vadd.f32 %v1080, %v1410
    %v1476 = vld [vmem:[%s2] sm:$0x3]
    %v1478 = vlaneseq
    %v1479 = vshrl.u32 %v1478, 7
    %v1480 = vsub.s32 0, %v1479
    %v1481 = vrot.slane %v1476, %v1480
    %v1482 = vlaneseq
    %v1483 = vshrl.u32 %v1482, 7
    %v1484 = vsub.s32 1, %v1483
    %v1485 = vrot.slane %v1476, %v1484
    %v1488 = vadd.f32 %v1412, %v1481
    %v1489 = vadd.f32 %v1413, %v1485
    %v1490 = vadd.f32 %v1414, %v1481
    %v1491 = vadd.f32 %v1415, %v1485
    %v1492 = vadd.f32 %v1416, %v1481
    %v1493 = vadd.f32 %v1417, %v1485
    %v1494 = vadd.f32 %v1418, %v1481
    %v1495 = vadd.f32 %v1419, %v1485
    %v1496 = vadd.f32 %v1420, %v1481
    %v1497 = vadd.f32 %v1421, %v1485
    %v1498 = vadd.f32 %v1422, %v1481
    %v1499 = vadd.f32 %v1423, %v1485
    %v1500 = vadd.f32 %v1424, %v1481
    %v1501 = vadd.f32 %v1425, %v1485
    %v1502 = vadd.f32 %v1426, %v1481
    %v1503 = vadd.f32 %v1427, %v1485
    %v1504 = vadd.f32 %v1428, %v1481
    %v1505 = vadd.f32 %v1429, %v1485
    %v1506 = vadd.f32 %v1430, %v1481
    %v1507 = vadd.f32 %v1431, %v1485
    %v1508 = vadd.f32 %v1432, %v1481
    %v1509 = vadd.f32 %v1433, %v1485
    %v1510 = vadd.f32 %v1434, %v1481
    %v1511 = vadd.f32 %v1435, %v1485
    %v1512 = vadd.f32 %v1436, %v1481
    %v1513 = vadd.f32 %v1437, %v1485
    %v1514 = vadd.f32 %v1438, %v1481
    %v1515 = vadd.f32 %v1439, %v1485
    %v1516 = vadd.f32 %v1440, %v1481
    %v1517 = vadd.f32 %v1441, %v1485
    %v1518 = vadd.f32 %v1442, %v1481
    %v1519 = vadd.f32 %v1443, %v1485
    %v1520 = vadd.f32 %v1444, %v1481
    %v1521 = vadd.f32 %v1445, %v1485
    %v1522 = vadd.f32 %v1446, %v1481
    %v1523 = vadd.f32 %v1447, %v1485
    %v1524 = vadd.f32 %v1448, %v1481
    %v1525 = vadd.f32 %v1449, %v1485
    %v1526 = vadd.f32 %v1450, %v1481
    %v1527 = vadd.f32 %v1451, %v1485
    %v1528 = vadd.f32 %v1452, %v1481
    %v1529 = vadd.f32 %v1453, %v1485
    %v1530 = vadd.f32 %v1454, %v1481
    %v1531 = vadd.f32 %v1455, %v1485
    %v1532 = vadd.f32 %v1456, %v1481
    %v1533 = vadd.f32 %v1457, %v1485
    %v1534 = vadd.f32 %v1458, %v1481
    %v1535 = vadd.f32 %v1459, %v1485
    %v1536 = vadd.f32 %v1460, %v1481
    %v1537 = vadd.f32 %v1461, %v1485
    %v1538 = vadd.f32 %v1462, %v1481
    %v1539 = vadd.f32 %v1463, %v1485
    %v1540 = vadd.f32 %v1464, %v1481
    %v1541 = vadd.f32 %v1465, %v1485
    %v1542 = vadd.f32 %v1466, %v1481
    %v1543 = vadd.f32 %v1467, %v1485
    %v1544 = vadd.f32 %v1468, %v1481
    %v1545 = vadd.f32 %v1469, %v1485
    %v1546 = vadd.f32 %v1470, %v1481
    %v1547 = vadd.f32 %v1471, %v1485
    %v1548 = vadd.f32 %v1472, %v1481
    %v1549 = vadd.f32 %v1473, %v1485
    %v1550 = vadd.f32 %v1474, %v1481
    %v1551 = vadd.f32 %v1475, %v1485
    %v1552 = vmax.f32 %v1488, 0.0
    %v1553 = vmax.f32 %v1489, 0.0
    %v1554 = vmax.f32 %v1490, 0.0
    %v1555 = vmax.f32 %v1491, 0.0
    %v1556 = vmax.f32 %v1492, 0.0
    %v1557 = vmax.f32 %v1493, 0.0
    %v1558 = vmax.f32 %v1494, 0.0
    %v1559 = vmax.f32 %v1495, 0.0
    %v1560 = vmax.f32 %v1496, 0.0
    %v1561 = vmax.f32 %v1497, 0.0
    %v1562 = vmax.f32 %v1498, 0.0
    %v1563 = vmax.f32 %v1499, 0.0
    %v1564 = vmax.f32 %v1500, 0.0
    %v1565 = vmax.f32 %v1501, 0.0
    %v1566 = vmax.f32 %v1502, 0.0
    %v1567 = vmax.f32 %v1503, 0.0
    %v1568 = vmax.f32 %v1504, 0.0
    %v1569 = vmax.f32 %v1505, 0.0
    %v1570 = vmax.f32 %v1506, 0.0
    %v1571 = vmax.f32 %v1507, 0.0
    %v1572 = vmax.f32 %v1508, 0.0
    %v1573 = vmax.f32 %v1509, 0.0
    %v1574 = vmax.f32 %v1510, 0.0
    %v1575 = vmax.f32 %v1511, 0.0
    %v1576 = vmax.f32 %v1512, 0.0
    %v1577 = vmax.f32 %v1513, 0.0
    %v1578 = vmax.f32 %v1514, 0.0
    %v1579 = vmax.f32 %v1515, 0.0
    %v1580 = vmax.f32 %v1516, 0.0
    %v1581 = vmax.f32 %v1517, 0.0
    %v1582 = vmax.f32 %v1518, 0.0
    %v1583 = vmax.f32 %v1519, 0.0
    %v1584 = vmax.f32 %v1520, 0.0
    %v1585 = vmax.f32 %v1521, 0.0
    %v1586 = vmax.f32 %v1522, 0.0
    %v1587 = vmax.f32 %v1523, 0.0
    %v1588 = vmax.f32 %v1524, 0.0
    %v1589 = vmax.f32 %v1525, 0.0
    %v1590 = vmax.f32 %v1526, 0.0
    %v1591 = vmax.f32 %v1527, 0.0
    %v1592 = vmax.f32 %v1528, 0.0
    %v1593 = vmax.f32 %v1529, 0.0
    %v1594 = vmax.f32 %v1530, 0.0
    %v1595 = vmax.f32 %v1531, 0.0
    %v1596 = vmax.f32 %v1532, 0.0
    %v1597 = vmax.f32 %v1533, 0.0
    %v1598 = vmax.f32 %v1534, 0.0
    %v1599 = vmax.f32 %v1535, 0.0
    %v1600 = vmax.f32 %v1536, 0.0
    %v1601 = vmax.f32 %v1537, 0.0
    %v1602 = vmax.f32 %v1538, 0.0
    %v1603 = vmax.f32 %v1539, 0.0
    %v1604 = vmax.f32 %v1540, 0.0
    %v1605 = vmax.f32 %v1541, 0.0
    %v1606 = vmax.f32 %v1542, 0.0
    %v1607 = vmax.f32 %v1543, 0.0
    %v1608 = vmax.f32 %v1544, 0.0
    %v1609 = vmax.f32 %v1545, 0.0
    %v1610 = vmax.f32 %v1546, 0.0
    %v1611 = vmax.f32 %v1547, 0.0
    %v1612 = vmax.f32 %v1548, 0.0
    %v1613 = vmax.f32 %v1549, 0.0
    %v1614 = vmax.f32 %v1550, 0.0
    %v1615 = vmax.f32 %v1551, 0.0
    %v1616 = vmax.f32 %v1552, %v1553
    %v1617 = vmax.f32 %v1554, %v1555
    %v1618 = vmax.f32 %v1556, %v1557
    %v1619 = vmax.f32 %v1558, %v1559
    %v1620 = vmax.f32 %v1560, %v1561
    %v1621 = vmax.f32 %v1562, %v1563
    %v1622 = vmax.f32 %v1564, %v1565
    %v1623 = vmax.f32 %v1566, %v1567
    %v1624 = vmax.f32 %v1568, %v1569
    %v1625 = vmax.f32 %v1570, %v1571
    %v1626 = vmax.f32 %v1572, %v1573
    %v1627 = vmax.f32 %v1574, %v1575
    %v1628 = vmax.f32 %v1576, %v1577
    %v1629 = vmax.f32 %v1578, %v1579
    %v1630 = vmax.f32 %v1580, %v1581
    %v1631 = vmax.f32 %v1582, %v1583
    %v1632 = vmax.f32 %v1584, %v1585
    %v1633 = vmax.f32 %v1586, %v1587
    %v1634 = vmax.f32 %v1588, %v1589
    %v1635 = vmax.f32 %v1590, %v1591
    %v1636 = vmax.f32 %v1592, %v1593
    %v1637 = vmax.f32 %v1594, %v1595
    %v1638 = vmax.f32 %v1596, %v1597
    %v1639 = vmax.f32 %v1598, %v1599
    %v1640 = vmax.f32 %v1600, %v1601
    %v1641 = vmax.f32 %v1602, %v1603
    %v1642 = vmax.f32 %v1604, %v1605
    %v1643 = vmax.f32 %v1606, %v1607
    %v1644 = vmax.f32 %v1608, %v1609
    %v1645 = vmax.f32 %v1610, %v1611
    %v1646 = vmax.f32 %v1612, %v1613
    %v1647 = vmax.f32 %v1614, %v1615
    %1648 = vst [vmem:[#allocation2] sm:$0xff] %v1616
    %1649 = vst [vmem:[#allocation2 + $0x8] sm:$0xff] %v1617
    %1650 = vst [vmem:[#allocation2 + $0x10] sm:$0xff] %v1618
    %1651 = vst [vmem:[#allocation2 + $0x18] sm:$0xff] %v1619
    %1652 = vst [vmem:[#allocation2 + $0x20] sm:$0xff] %v1620
    %1653 = vst [vmem:[#allocation2 + $0x28] sm:$0xff] %v1621
    %1654 = vst [vmem:[#allocation2 + $0x30] sm:$0xff] %v1622
    %1655 = vst [vmem:[#allocation2 + $0x38] sm:$0xff] %v1623
    %1656 = vst [vmem:[#allocation2 + $0x40] sm:$0xff] %v1624
    %1657 = vst [vmem:[#allocation2 + $0x48] sm:$0xff] %v1625
    %1658 = vst [vmem:[#allocation2 + $0x50] sm:$0xff] %v1626
    %1659 = vst [vmem:[#allocation2 + $0x58] sm:$0xff] %v1627
    %1660 = vst [vmem:[#allocation2 + $0x60] sm:$0xff] %v1628
    %1661 = vst [vmem:[#allocation2 + $0x68] sm:$0xff] %v1629
    %1662 = vst [vmem:[#allocation2 + $0x70] sm:$0xff] %v1630
    %1663 = vst [vmem:[#allocation2 + $0x78] sm:$0xff] %v1631
    %1664 = vst [vmem:[#allocation2 + $0x80] sm:$0xff] %v1632
    %1665 = vst [vmem:[#allocation2 + $0x88] sm:$0xff] %v1633
    %1666 = vst [vmem:[#allocation2 + $0x90] sm:$0xff] %v1634
    %1667 = vst [vmem:[#allocation2 + $0x98] sm:$0xff] %v1635
    %1668 = vst [vmem:[#allocation2 + $0xa0] sm:$0xff] %v1636
    %1669 = vst [vmem:[#allocation2 + $0xa8] sm:$0xff] %v1637
    %1670 = vst [vmem:[#allocation2 + $0xb0] sm:$0xff] %v1638
    %1671 = vst [vmem:[#allocation2 + $0xb8] sm:$0xff] %v1639
    %1672 = vst [vmem:[#allocation2 + $0xc0] sm:$0xff] %v1640
    %1673 = vst [vmem:[#allocation2 + $0xc8] sm:$0xff] %v1641
    %1674 = vst [vmem:[#allocation2 + $0xd0] sm:$0xff] %v1642
    %1675 = vst [vmem:[#allocation2 + $0xd8] sm:$0xff] %v1643
    %1676 = vst [vmem:[#allocation2 + $0xe0] sm:$0xff] %v1644
    %1677 = vst [vmem:[#allocation2 + $0xe8] sm:$0xff] %v1645
    %1678 = vst [vmem:[#allocation2 + $0xf0] sm:$0xff] %v1646
    %1679 = vst [vmem:[#allocation2 + $0xf8] sm:$0xff] %v1647
    %v1680 = vld [vmem:[#allocation2] ss:$2 sm:$0xff]
    %s1681 = scalar_lea.vmem [#allocation2], 16
    %v1682 = vld [vmem:[%s1681] ss:$2 sm:$0xff]
    %s1683 = scalar_lea.vmem [#allocation2], 32
    %v1684 = vld [vmem:[%s1683] ss:$2 sm:$0xff]
    %s1685 = scalar_lea.vmem [#allocation2], 48
    %v1686 = vld [vmem:[%s1685] ss:$2 sm:$0xff]
    %s1687 = scalar_lea.vmem [#allocation2], 64
    %v1688 = vld [vmem:[%s1687] ss:$2 sm:$0xff]
    %s1689 = scalar_lea.vmem [#allocation2], 80
    %v1690 = vld [vmem:[%s1689] ss:$2 sm:$0xff]
    %s1691 = scalar_lea.vmem [#allocation2], 96
    %v1692 = vld [vmem:[%s1691] ss:$2 sm:$0xff]
    %s1693 = scalar_lea.vmem [#allocation2], 112
    %v1694 = vld [vmem:[%s1693] ss:$2 sm:$0xff]
    %s1695 = scalar_lea.vmem [#allocation2], 128
    %v1696 = vld [vmem:[%s1695] ss:$2 sm:$0xff]
    %s1697 = scalar_lea.vmem [#allocation2], 144
    %v1698 = vld [vmem:[%s1697] ss:$2 sm:$0xff]
    %s1699 = scalar_lea.vmem [#allocation2], 160
    %v1700 = vld [vmem:[%s1699] ss:$2 sm:$0xff]
    %s1701 = scalar_lea.vmem [#allocation2], 176
    %v1702 = vld [vmem:[%s1701] ss:$2 sm:$0xff]
    %s1703 = scalar_lea.vmem [#allocation2], 192
    %v1704 = vld [vmem:[%s1703] ss:$2 sm:$0xff]
    %s1705 = scalar_lea.vmem [#allocation2], 208
    %v1706 = vld [vmem:[%s1705] ss:$2 sm:$0xff]
    %s1707 = scalar_lea.vmem [#allocation2], 224
    %v1708 = vld [vmem:[%s1707] ss:$2 sm:$0xff]
    %s1709 = scalar_lea.vmem [#allocation2], 240
    %v1710 = vld [vmem:[%s1709] ss:$2 sm:$0xff]
    %s1711 = scalar_lea.vmem [#allocation2], 1
    %v1712 = vld [vmem:[%s1711] ss:$2 sm:$0xff]
    %s1713 = scalar_lea.vmem [#allocation2], 17
    %v1714 = vld [vmem:[%s1713] ss:$2 sm:$0xff]
    %s1715 = scalar_lea.vmem [#allocation2], 33
    %v1716 = vld [vmem:[%s1715] ss:$2 sm:$0xff]
    %s1717 = scalar_lea.vmem [#allocation2], 49
    %v1718 = vld [vmem:[%s1717] ss:$2 sm:$0xff]
    %s1719 = scalar_lea.vmem [#allocation2], 65
    %v1720 = vld [vmem:[%s1719] ss:$2 sm:$0xff]
    %s1721 = scalar_lea.vmem [#allocation2], 81
    %v1722 = vld [vmem:[%s1721] ss:$2 sm:$0xff]
    %s1723 = scalar_lea.vmem [#allocation2], 97
    %v1724 = vld [vmem:[%s1723] ss:$2 sm:$0xff]
    %s1725 = scalar_lea.vmem [#allocation2], 113
    %v1726 = vld [vmem:[%s1725] ss:$2 sm:$0xff]
    %s1727 = scalar_lea.vmem [#allocation2], 129
    %v1728 = vld [vmem:[%s1727] ss:$2 sm:$0xff]
    %s1729 = scalar_lea.vmem [#allocation2], 145
    %v1730 = vld [vmem:[%s1729] ss:$2 sm:$0xff]
    %s1731 = scalar_lea.vmem [#allocation2], 161
    %v1732 = vld [vmem:[%s1731] ss:$2 sm:$0xff]
    %s1733 = scalar_lea.vmem [#allocation2], 177
    %v1734 = vld [vmem:[%s1733] ss:$2 sm:$0xff]
    %s1735 = scalar_lea.vmem [#allocation2], 193
    %v1736 = vld [vmem:[%s1735] ss:$2 sm:$0xff]
    %s1737 = scalar_lea.vmem [#allocation2], 209
    %v1738 = vld [vmem:[%s1737] ss:$2 sm:$0xff]
    %s1739 = scalar_lea.vmem [#allocation2], 225
    %v1740 = vld [vmem:[%s1739] ss:$2 sm:$0xff]
    %s1741 = scalar_lea.vmem [#allocation2], 241
    %v1742 = vld [vmem:[%s1741] ss:$2 sm:$0xff]
    %v1743 = vmax.f32 %v1680, %v1712
    %v1744 = vmax.f32 %v1682, %v1714
    %v1745 = vmax.f32 %v1684, %v1716
    %v1746 = vmax.f32 %v1686, %v1718
    %v1747 = vmax.f32 %v1688, %v1720
    %v1748 = vmax.f32 %v1690, %v1722
    %v1749 = vmax.f32 %v1692, %v1724
    %v1750 = vmax.f32 %v1694, %v1726
    %v1751 = vmax.f32 %v1696, %v1728
    %v1752 = vmax.f32 %v1698, %v1730
    %v1753 = vmax.f32 %v1700, %v1732
    %v1754 = vmax.f32 %v1702, %v1734
    %v1755 = vmax.f32 %v1704, %v1736
    %v1756 = vmax.f32 %v1706, %v1738
    %v1757 = vmax.f32 %v1708, %v1740
    %v1758 = vmax.f32 %v1710, %v1742
    %v1759 = vand.u32 %v100, 15
    %v1760 = vand.u32 %v101, 15
    %v1761 = vand.u32 %v102, 15
    %v1762 = vand.u32 %v103, 15
    %v1763 = vand.u32 %v104, 15
    %v1764 = vand.u32 %v105, 15
    %v1765 = vand.u32 %v106, 15
    %v1766 = vand.u32 %v107, 15
    %v1767 = vand.u32 %v108, 15
    %v1768 = vand.u32 %v109, 15
    %v1769 = vand.u32 %v110, 15
    %v1770 = vand.u32 %v111, 15
    %v1771 = vand.u32 %v112, 15
    %v1772 = vand.u32 %v113, 15
    %v1773 = vand.u32 %v114, 15
    %v1774 = vand.u32 %v115, 15
    %vm1775 = vcmp.eq.s32.totalorder %v1759, 0
    %vm1776 = vcmp.eq.s32.totalorder %v1760, 0
    %vm1777 = vcmp.eq.s32.totalorder %v1761, 0
    %vm1778 = vcmp.eq.s32.totalorder %v1762, 0
    %vm1779 = vcmp.eq.s32.totalorder %v1763, 0
    %vm1780 = vcmp.eq.s32.totalorder %v1764, 0
    %vm1781 = vcmp.eq.s32.totalorder %v1765, 0
    %vm1782 = vcmp.eq.s32.totalorder %v1766, 0
    %vm1783 = vcmp.eq.s32.totalorder %v1767, 0
    %vm1784 = vcmp.eq.s32.totalorder %v1768, 0
    %vm1785 = vcmp.eq.s32.totalorder %v1769, 0
    %vm1786 = vcmp.eq.s32.totalorder %v1770, 0
    %vm1787 = vcmp.eq.s32.totalorder %v1771, 0
    %vm1788 = vcmp.eq.s32.totalorder %v1772, 0
    %vm1789 = vcmp.eq.s32.totalorder %v1773, 0
    %vm1790 = vcmp.eq.s32.totalorder %v1774, 0
    %vm1791 = vcmp.eq.s32.totalorder %v1759, 15
    %vm1792 = vcmp.eq.s32.totalorder %v1760, 15
    %vm1793 = vcmp.eq.s32.totalorder %v1761, 15
    %vm1794 = vcmp.eq.s32.totalorder %v1762, 15
    %vm1795 = vcmp.eq.s32.totalorder %v1763, 15
    %vm1796 = vcmp.eq.s32.totalorder %v1764, 15
    %vm1797 = vcmp.eq.s32.totalorder %v1765, 15
    %vm1798 = vcmp.eq.s32.totalorder %v1766, 15
    %vm1799 = vcmp.eq.s32.totalorder %v1767, 15
    %vm1800 = vcmp.eq.s32.totalorder %v1768, 15
    %vm1801 = vcmp.eq.s32.totalorder %v1769, 15
    %vm1802 = vcmp.eq.s32.totalorder %v1770, 15
    %vm1803 = vcmp.eq.s32.totalorder %v1771, 15
    %vm1804 = vcmp.eq.s32.totalorder %v1772, 15
    %vm1805 = vcmp.eq.s32.totalorder %v1773, 15
    %vm1806 = vcmp.eq.s32.totalorder %v1774, 15
    %v1807 = vrot.slane %v1743, 7
    %v1808 = vrot.slane %v1744, 7
    %v1809 = vrot.slane %v1745, 7
    %v1810 = vrot.slane %v1746, 7
    %v1811 = vrot.slane %v1747, 7
    %v1812 = vrot.slane %v1748, 7
    %v1813 = vrot.slane %v1749, 7
    %v1814 = vrot.slane %v1750, 7
    %v1815 = vrot.slane %v1751, 7
    %v1816 = vrot.slane %v1752, 7
    %v1817 = vrot.slane %v1753, 7
    %v1818 = vrot.slane %v1754, 7
    %v1819 = vrot.slane %v1755, 7
    %v1820 = vrot.slane %v1756, 7
    %v1821 = vrot.slane %v1757, 7
    %v1822 = vrot.slane %v1758, 7
    %v1823 = vsel %vm260, %v1821, %v1822
    %v1824 = vsel %vm260, %v1820, %v1821
    %v1825 = vsel %vm260, %v1819, %v1820
    %v1826 = vsel %vm260, %v1818, %v1819
    %v1827 = vsel %vm260, %v1817, %v1818
    %v1828 = vsel %vm260, %v1816, %v1817
    %v1829 = vsel %vm260, %v1815, %v1816
    %v1830 = vsel %vm260, %v1814, %v1815
    %v1831 = vsel %vm260, %v1813, %v1814
    %v1832 = vsel %vm260, %v1812, %v1813
    %v1833 = vsel %vm260, %v1811, %v1812
    %v1834 = vsel %vm260, %v1810, %v1811
    %v1835 = vsel %vm260, %v1809, %v1810
    %v1836 = vsel %vm260, %v1808, %v1809
    %v1837 = vsel %vm260, %v1807, %v1808
    %v1838 = vsel %vm260, %v1822, %v1807
    %v1839 = vsel %vm1775, 0.0, %v1838
    %v1840 = vsel %vm1776, 0.0, %v1837
    %v1841 = vsel %vm1777, 0.0, %v1836
    %v1842 = vsel %vm1778, 0.0, %v1835
    %v1843 = vsel %vm1779, 0.0, %v1834
    %v1844 = vsel %vm1780, 0.0, %v1833
    %v1845 = vsel %vm1781, 0.0, %v1832
    %v1846 = vsel %vm1782, 0.0, %v1831
    %v1847 = vsel %vm1783, 0.0, %v1830
    %v1848 = vsel %vm1784, 0.0, %v1829
    %v1849 = vsel %vm1785, 0.0, %v1828
    %v1850 = vsel %vm1786, 0.0, %v1827
    %v1851 = vsel %vm1787, 0.0, %v1826
    %v1852 = vsel %vm1788, 0.0, %v1825
    %v1853 = vsel %vm1789, 0.0, %v1824
    %v1854 = vsel %vm1790, 0.0, %v1823
    %v1855 = vrot.slane %v1743, 1
    %v1856 = vrot.slane %v1744, 1
    %v1857 = vrot.slane %v1745, 1
    %v1858 = vrot.slane %v1746, 1
    %v1859 = vrot.slane %v1747, 1
    %v1860 = vrot.slane %v1748, 1
    %v1861 = vrot.slane %v1749, 1
    %v1862 = vrot.slane %v1750, 1
    %v1863 = vrot.slane %v1751, 1
    %v1864 = vrot.slane %v1752, 1
    %v1865 = vrot.slane %v1753, 1
    %v1866 = vrot.slane %v1754, 1
    %v1867 = vrot.slane %v1755, 1
    %v1868 = vrot.slane %v1756, 1
    %v1869 = vrot.slane %v1757, 1
    %v1870 = vrot.slane %v1758, 1
    %v1871 = vsel %vm357, %v1869, %v1870
    %v1872 = vsel %vm357, %v1868, %v1869
    %v1873 = vsel %vm357, %v1867, %v1868
    %v1874 = vsel %vm357, %v1866, %v1867
    %v1875 = vsel %vm357, %v1865, %v1866
    %v1876 = vsel %vm357, %v1864, %v1865
    %v1877 = vsel %vm357, %v1863, %v1864
    %v1878 = vsel %vm357, %v1862, %v1863
    %v1879 = vsel %vm357, %v1861, %v1862
    %v1880 = vsel %vm357, %v1860, %v1861
    %v1881 = vsel %vm357, %v1859, %v1860
    %v1882 = vsel %vm357, %v1858, %v1859
    %v1883 = vsel %vm357, %v1857, %v1858
    %v1884 = vsel %vm357, %v1856, %v1857
    %v1885 = vsel %vm357, %v1855, %v1856
    %v1886 = vsel %vm357, %v1870, %v1855
    %v1887 = vsel %vm1791, 0.0, %v1885
    %v1888 = vsel %vm1792, 0.0, %v1884
    %v1889 = vsel %vm1793, 0.0, %v1883
    %v1890 = vsel %vm1794, 0.0, %v1882
    %v1891 = vsel %vm1795, 0.0, %v1881
    %v1892 = vsel %vm1796, 0.0, %v1880
    %v1893 = vsel %vm1797, 0.0, %v1879
    %v1894 = vsel %vm1798, 0.0, %v1878
    %v1895 = vsel %vm1799, 0.0, %v1877
    %v1896 = vsel %vm1800, 0.0, %v1876
    %v1897 = vsel %vm1801, 0.0, %v1875
    %v1898 = vsel %vm1802, 0.0, %v1874
    %v1899 = vsel %vm1803, 0.0, %v1873
    %v1900 = vsel %vm1804, 0.0, %v1872
    %v1901 = vsel %vm1805, 0.0, %v1871
    %v1902 = vsel %vm1806, 0.0, %v1886
    %v1903 = vld [vmem:[%s3] sm:$0xff]
    %v1904 = vld [vmem:[%s3 + $0x8] sm:$0xff]
    %v1905 = vld [vmem:[%s3 + $0x10] sm:$0xff]
    %v1906 = vld [vmem:[%s3 + $0x18] sm:$0xff]
    %v1907 = vld [vmem:[%s3 + $0x20] sm:$0xff]
    %v1908 = vld [vmem:[%s3 + $0x28] sm:$0xff]
    %v1909 = vld [vmem:[%s3 + $0x30] sm:$0xff]
    %v1910 = vld [vmem:[%s3 + $0x38] sm:$0xff]
    %v1911 = vld [vmem:[%s3 + $0x40] sm:$0xff]
    %v1912 = vld [vmem:[%s3 + $0x48] sm:$0xff]
    %v1913 = vld [vmem:[%s3 + $0x50] sm:$0xff]
    %v1914 = vld [vmem:[%s3 + $0x58] sm:$0xff]
    %v1915 = vld [vmem:[%s3 + $0x60] sm:$0xff]
    %v1916 = vld [vmem:[%s3 + $0x68] sm:$0xff]
    %v1917 = vld [vmem:[%s3 + $0x70] sm:$0xff]
    %v1918 = vld [vmem:[%s3 + $0x78] sm:$0xff]
    %v1919 = vld [vmem:[%s3 + $0x80] sm:$0xff]
    %v1920 = vld [vmem:[%s3 + $0x88] sm:$0xff]
    %v1921 = vld [vmem:[%s3 + $0x90] sm:$0xff]
    %v1922 = vld [vmem:[%s3 + $0x98] sm:$0xff]
    %v1923 = vld [vmem:[%s3 + $0xa0] sm:$0xff]
    %v1924 = vld [vmem:[%s3 + $0xa8] sm:$0xff]
    %v1925 = vld [vmem:[%s3 + $0xb0] sm:$0xff]
    %v1926 = vld [vmem:[%s3 + $0xb8] sm:$0xff]
    %v1927 = vld [vmem:[%s3 + $0xc0] sm:$0xff]
    %v1928 = vld [vmem:[%s3 + $0xc8] sm:$0xff]
    %v1929 = vld [vmem:[%s3 + $0xd0] sm:$0xff]
    %v1930 = vld [vmem:[%s3 + $0xd8] sm:$0xff]
    %v1931 = vld [vmem:[%s3 + $0xe0] sm:$0xff]
    %v1932 = vld [vmem:[%s3 + $0xe8] sm:$0xff]
    %v1933 = vld [vmem:[%s3 + $0xf0] sm:$0xff]
    %v1934 = vld [vmem:[%s3 + $0xf8] sm:$0xff]
    %v1935 = vld [vmem:[%s3 + $0x100] sm:$0xff]
    %v1936 = vld [vmem:[%s3 + $0x108] sm:$0xff]
    %v1937 = vld [vmem:[%s3 + $0x110] sm:$0xff]
    %v1938 = vld [vmem:[%s3 + $0x118] sm:$0xff]
    %v1939 = vld [vmem:[%s3 + $0x120] sm:$0xff]
    %v1940 = vld [vmem:[%s3 + $0x128] sm:$0xff]
    %v1941 = vld [vmem:[%s3 + $0x130] sm:$0xff]
    %v1942 = vld [vmem:[%s3 + $0x138] sm:$0xff]
    %v1943 = vld [vmem:[%s3 + $0x140] sm:$0xff]
    %v1944 = vld [vmem:[%s3 + $0x148] sm:$0xff]
    %v1945 = vld [vmem:[%s3 + $0x150] sm:$0xff]
    %v1946 = vld [vmem:[%s3 + $0x158] sm:$0xff]
    %v1947 = vld [vmem:[%s3 + $0x160] sm:$0xff]
    %v1948 = vld [vmem:[%s3 + $0x168] sm:$0xff]
    %v1949 = vld [vmem:[%s3 + $0x170] sm:$0xff]
    %v1950 = vld [vmem:[%s3 + $0x178] sm:$0xff]
    %v1951 = vpack.c.bf16 %v1840, %v1839
    %v1952 = vpack.c.bf16 %v1744, %v1743
    %v1953 = vpack.c.bf16 %v1888, %v1887
    %v1954 = vpack.c.bf16 %v1842, %v1841
    %v1955 = vpack.c.bf16 %v1746, %v1745
    %v1956 = vpack.c.bf16 %v1890, %v1889
    %v1957 = vpack.c.bf16 %v1844, %v1843
    %v1958 = vpack.c.bf16 %v1748, %v1747
    %v1959 = vpack.c.bf16 %v1892, %v1891
    %v1960 = vpack.c.bf16 %v1846, %v1845
    %v1961 = vpack.c.bf16 %v1750, %v1749
    %v1962 = vpack.c.bf16 %v1894, %v1893
    %v1963 = vpack.c.bf16 %v1848, %v1847
    %v1964 = vpack.c.bf16 %v1752, %v1751
    %v1965 = vpack.c.bf16 %v1896, %v1895
    %v1966 = vpack.c.bf16 %v1850, %v1849
    %v1967 = vpack.c.bf16 %v1754, %v1753
    %v1968 = vpack.c.bf16 %v1898, %v1897
    %v1969 = vpack.c.bf16 %v1852, %v1851
    %v1970 = vpack.c.bf16 %v1756, %v1755
    %v1971 = vpack.c.bf16 %v1900, %v1899
    %v1972 = vpack.c.bf16 %v1854, %v1853
    %v1973 = vpack.c.bf16 %v1758, %v1757
    %v1974 = vpack.c.bf16 %v1902, %v1901
    %v1975 = vld [vmem:[%s4] sm:$0x3]
    %v1977 = vlaneseq
    %v1978 = vshrl.u32 %v1977, 7
    %v1979 = vsub.s32 0, %v1978
    %v1980 = vrot.slane %v1975, %v1979
    %v1981 = vlaneseq
    %v1982 = vshrl.u32 %v1981, 7
    %v1983 = vsub.s32 1, %v1982
    %v1984 = vrot.slane %v1975, %v1983
    %v2035 = vunpack.c.l.b16 %v1903
    %v2036 = vunpack.c.h.b16 %v1903
    %v2037 = vunpack.c.l.b16 %v1904
    %v2038 = vunpack.c.h.b16 %v1904
    %v2039 = vunpack.c.l.b16 %v1905
    %v2040 = vunpack.c.h.b16 %v1905
    %v2041 = vunpack.c.l.b16 %v1906
    %v2042 = vunpack.c.h.b16 %v1906
    %v2043 = vunpack.c.l.b16 %v1907
    %v2044 = vunpack.c.h.b16 %v1907
    %v2045 = vunpack.c.l.b16 %v1908
    %v2046 = vunpack.c.h.b16 %v1908
    %v2047 = vunpack.c.l.b16 %v1909
    %v2048 = vunpack.c.h.b16 %v1909
    %v2049 = vunpack.c.l.b16 %v1910
    %v2050 = vunpack.c.h.b16 %v1910
    %v2051 = vunpack.c.l.b16 %v1911
    %v2052 = vunpack.c.h.b16 %v1911
    %v2053 = vunpack.c.l.b16 %v1912
    %v2054 = vunpack.c.h.b16 %v1912
    %v2055 = vunpack.c.l.b16 %v1913
    %v2056 = vunpack.c.h.b16 %v1913
    %v2057 = vunpack.c.l.b16 %v1914
    %v2058 = vunpack.c.h.b16 %v1914
    %v2059 = vunpack.c.l.b16 %v1915
    %v2060 = vunpack.c.h.b16 %v1915
    %v2061 = vunpack.c.l.b16 %v1916
    %v2062 = vunpack.c.h.b16 %v1916
    %v2063 = vunpack.c.l.b16 %v1917
    %v2064 = vunpack.c.h.b16 %v1917
    %v2065 = vunpack.c.l.b16 %v1918
    %v2066 = vunpack.c.h.b16 %v1918
    %v2067 = vunpack.c.l.b16 %v1919
    %v2068 = vunpack.c.h.b16 %v1919
    %v2069 = vunpack.c.l.b16 %v1920
    %v2070 = vunpack.c.h.b16 %v1920
    %v2071 = vunpack.c.l.b16 %v1921
    %v2072 = vunpack.c.h.b16 %v1921
    %v2073 = vunpack.c.l.b16 %v1922
    %v2074 = vunpack.c.h.b16 %v1922
    %v2075 = vunpack.c.l.b16 %v1923
    %v2076 = vunpack.c.h.b16 %v1923
    %v2077 = vunpack.c.l.b16 %v1924
    %v2078 = vunpack.c.h.b16 %v1924
    %v2079 = vunpack.c.l.b16 %v1925
    %v2080 = vunpack.c.h.b16 %v1925
    %v2081 = vunpack.c.l.b16 %v1926
    %v2082 = vunpack.c.h.b16 %v1926
    %v2083 = vunpack.c.l.b16 %v1927
    %v2084 = vunpack.c.h.b16 %v1927
    %v2085 = vunpack.c.l.b16 %v1928
    %v2086 = vunpack.c.h.b16 %v1928
    %v2087 = vunpack.c.l.b16 %v1929
    %v2088 = vunpack.c.h.b16 %v1929
    %v2089 = vunpack.c.l.b16 %v1930
    %v2090 = vunpack.c.h.b16 %v1930
    %v2091 = vunpack.c.l.b16 %v1931
    %v2092 = vunpack.c.h.b16 %v1931
    %v2093 = vunpack.c.l.b16 %v1932
    %v2094 = vunpack.c.h.b16 %v1932
    %v2095 = vunpack.c.l.b16 %v1933
    %v2096 = vunpack.c.h.b16 %v1933
    %v2097 = vunpack.c.l.b16 %v1934
    %v2098 = vunpack.c.h.b16 %v1934
    %v2099 = vunpack.c.l.b16 %v1935
    %v2100 = vunpack.c.h.b16 %v1935
    %v2101 = vunpack.c.l.b16 %v1936
    %v2102 = vunpack.c.h.b16 %v1936
    %v2103 = vunpack.c.l.b16 %v1937
    %v2104 = vunpack.c.h.b16 %v1937
    %v2105 = vunpack.c.l.b16 %v1938
    %v2106 = vunpack.c.h.b16 %v1938
    %v2107 = vunpack.c.l.b16 %v1939
    %v2108 = vunpack.c.h.b16 %v1939
    %v2109 = vunpack.c.l.b16 %v1940
    %v2110 = vunpack.c.h.b16 %v1940
    %v2111 = vunpack.c.l.b16 %v1941
    %v2112 = vunpack.c.h.b16 %v1941
    %v2113 = vunpack.c.l.b16 %v1942
    %v2114 = vunpack.c.h.b16 %v1942
    %v2115 = vunpack.c.l.b16 %v1943
    %v2116 = vunpack.c.h.b16 %v1943
    %v2117 = vunpack.c.l.b16 %v1944
    %v2118 = vunpack.c.h.b16 %v1944
    %v2119 = vunpack.c.l.b16 %v1945
    %v2120 = vunpack.c.h.b16 %v1945
    %v2121 = vunpack.c.l.b16 %v1946
    %v2122 = vunpack.c.h.b16 %v1946
    %v2123 = vunpack.c.l.b16 %v1947
    %v2124 = vunpack.c.h.b16 %v1947
    %v2125 = vunpack.c.l.b16 %v1948
    %v2126 = vunpack.c.h.b16 %v1948
    %v2127 = vunpack.c.l.b16 %v1949
    %v2128 = vunpack.c.h.b16 %v1949
    %v2129 = vunpack.c.l.b16 %v1950
    %v2130 = vunpack.c.h.b16 %v1950
    %v2131 = vpack.c.b16 %v2037, %v2035
    %v2132 = vpack.c.b16 %v2038, %v2036
    %v2133 = vpack.c.b16 %v2041, %v2039
    %v2134 = vpack.c.b16 %v2042, %v2040
    %v2135 = vpack.c.b16 %v2045, %v2043
    %v2136 = vpack.c.b16 %v2046, %v2044
    %v2137 = vpack.c.b16 %v2049, %v2047
    %v2138 = vpack.c.b16 %v2050, %v2048
    %v2139 = vpack.c.b16 %v2053, %v2051
    %v2140 = vpack.c.b16 %v2054, %v2052
    %v2141 = vpack.c.b16 %v2057, %v2055
    %v2142 = vpack.c.b16 %v2058, %v2056
    %v2143 = vpack.c.b16 %v2061, %v2059
    %v2144 = vpack.c.b16 %v2062, %v2060
    %v2145 = vpack.c.b16 %v2065, %v2063
    %v2146 = vpack.c.b16 %v2066, %v2064
    %v2147 = vpack.c.b16 %v2069, %v2067
    %v2148 = vpack.c.b16 %v2070, %v2068
    %v2149 = vpack.c.b16 %v2073, %v2071
    %v2150 = vpack.c.b16 %v2074, %v2072
    %v2151 = vpack.c.b16 %v2077, %v2075
    %v2152 = vpack.c.b16 %v2078, %v2076
    %v2153 = vpack.c.b16 %v2081, %v2079
    %v2154 = vpack.c.b16 %v2082, %v2080
    %v2155 = vpack.c.b16 %v2085, %v2083
    %v2156 = vpack.c.b16 %v2086, %v2084
    %v2157 = vpack.c.b16 %v2089, %v2087
    %v2158 = vpack.c.b16 %v2090, %v2088
    %v2159 = vpack.c.b16 %v2093, %v2091
    %v2160 = vpack.c.b16 %v2094, %v2092
    %v2161 = vpack.c.b16 %v2097, %v2095
    %v2162 = vpack.c.b16 %v2098, %v2096
    %v2163 = vpack.c.b16 %v2101, %v2099
    %v2164 = vpack.c.b16 %v2102, %v2100
    %v2165 = vpack.c.b16 %v2105, %v2103
    %v2166 = vpack.c.b16 %v2106, %v2104
    %v2167 = vpack.c.b16 %v2109, %v2107
    %v2168 = vpack.c.b16 %v2110, %v2108
    %v2169 = vpack.c.b16 %v2113, %v2111
    %v2170 = vpack.c.b16 %v2114, %v2112
    %v2171 = vpack.c.b16 %v2117, %v2115
    %v2172 = vpack.c.b16 %v2118, %v2116
    %v2173 = vpack.c.b16 %v2121, %v2119
    %v2174 = vpack.c.b16 %v2122, %v2120
    %v2175 = vpack.c.b16 %v2125, %v2123
    %v2176 = vpack.c.b16 %v2126, %v2124
    %v2177 = vpack.c.b16 %v2129, %v2127
    %v2178 = vpack.c.b16 %v2130, %v2128
    %2227 = vmatprep.subr.bf16.mxu0 %v2132
    %2228 = vmatpush1.bf16.msra.mxu0 %v2131
    %2229 = vmatprep.subr.bf16.mxu0 %v2134
    %2230 = vmatpush1.bf16.msra.mxu0 %v2133
    %2231 = vmatprep.subr.bf16.mxu0 %v2136
    %2232 = vmatpush1.bf16.msra.mxu0 %v2135
    %2233 = vmatprep.subr.bf16.mxu0 %v2138
    %2234 = vmatpush1.bf16.msra.mxu0 %v2137
    %2235 = vmatprep.subr.bf16.mxu0 %v2140
    %2236 = vmatpush1.bf16.msra.mxu0 %v2139
    %2237 = vmatprep.subr.bf16.mxu0 %v2142
    %2238 = vmatpush1.bf16.msra.mxu0 %v2141
    %2239 = vmatprep.subr.bf16.mxu0 %v2144
    %2240 = vmatpush1.bf16.msra.mxu0 %v2143
    %2241 = vmatprep.subr.bf16.mxu0 %v2146
    %2242 = vmatpush1.bf16.msra.mxu0 %v2145
    %2243 = vmatprep.subr.bf16.mxu0 %v2148
    %2244 = vmatpush1.bf16.msra.mxu0 %v2147
    %2245 = vmatprep.subr.bf16.mxu0 %v2150
    %2246 = vmatpush1.bf16.msra.mxu0 %v2149
    %2247 = vmatprep.subr.bf16.mxu0 %v2152
    %2248 = vmatpush1.bf16.msra.mxu0 %v2151
    %2249 = vmatprep.subr.bf16.mxu0 %v2154
    %2250 = vmatpush1.bf16.msra.mxu0 %v2153
    %2251 = vmatprep.subr.bf16.mxu0 %v2156
    %2252 = vmatpush1.bf16.msra.mxu0 %v2155
    %2253 = vmatprep.subr.bf16.mxu0 %v2158
    %2254 = vmatpush1.bf16.msra.mxu0 %v2157
    %2255 = vmatprep.subr.bf16.mxu0 %v2160
    %2256 = vmatpush1.bf16.msra.mxu0 %v2159
    %2257 = vmatprep.subr.bf16.mxu0 %v2162
    %2258 = vmatpush1.bf16.msra.mxu0 %v2161
    %2259 = vmatprep.mubr.bf16.mxu0 %v1952
    %2260 = vmatmul.mubr.bf16.gmra.mrb[0].mxu0 %v1951
    %v2261 = vpop.f32.mrb[0].mxu0
    %v2262 = vadd.f32 %v1980, %v2261
    %v2263 = vpop.f32.mrb[0].mxu0
    %v2264 = vadd.f32 %v1984, %v2263
    %v2265 = vpop.f32.mrb[0].mxu0
    %v2266 = vadd.f32 %v1980, %v2265
    %v2267 = vpop.f32.mrb[0].mxu0
    %v2268 = vadd.f32 %v1984, %v2267
    %2269 = vmatprep.mubr.bf16.mxu0 %v1955
    %2270 = vmatmul.mubr.bf16.gmra.mrb[0].mxu0 %v1954
    %v2271 = vpop.f32.mrb[0].mxu0
    %v2272 = vadd.f32 %v1980, %v2271
    %v2273 = vpop.f32.mrb[0].mxu0
    %v2274 = vadd.f32 %v1984, %v2273
    %v2275 = vpop.f32.mrb[0].mxu0
    %v2276 = vadd.f32 %v1980, %v2275
    %v2277 = vpop.f32.mrb[0].mxu0
    %v2278 = vadd.f32 %v1984, %v2277
    %2279 = vmatprep.mubr.bf16.mxu0 %v1958
    %2280 = vmatmul.mubr.bf16.gmra.mrb[0].mxu0 %v1957
    %v2281 = vpop.f32.mrb[0].mxu0
    %v2282 = vadd.f32 %v1980, %v2281
    %v2283 = vpop.f32.mrb[0].mxu0
    %v2284 = vadd.f32 %v1984, %v2283
    %v2285 = vpop.f32.mrb[0].mxu0
    %v2286 = vadd.f32 %v1980, %v2285
    %v2287 = vpop.f32.mrb[0].mxu0
    %v2288 = vadd.f32 %v1984, %v2287
    %2289 = vmatprep.mubr.bf16.mxu0 %v1961
    %2290 = vmatmul.mubr.bf16.gmra.mrb[0].mxu0 %v1960
    %v2291 = vpop.f32.mrb[0].mxu0
    %v2292 = vadd.f32 %v1980, %v2291
    %v2293 = vpop.f32.mrb[0].mxu0
    %v2294 = vadd.f32 %v1984, %v2293
    %v2295 = vpop.f32.mrb[0].mxu0
    %v2296 = vadd.f32 %v1980, %v2295
    %v2297 = vpop.f32.mrb[0].mxu0
    %v2298 = vadd.f32 %v1984, %v2297
    %2299 = vmatprep.mubr.bf16.mxu0 %v1964
    %2300 = vmatmul.mubr.bf16.gmra.mrb[0].mxu0 %v1963
    %v2301 = vpop.f32.mrb[0].mxu0
    %v2302 = vadd.f32 %v1980, %v2301
    %v2303 = vpop.f32.mrb[0].mxu0
    %v2304 = vadd.f32 %v1984, %v2303
    %v2305 = vpop.f32.mrb[0].mxu0
    %v2306 = vadd.f32 %v1980, %v2305
    %v2307 = vpop.f32.mrb[0].mxu0
    %v2308 = vadd.f32 %v1984, %v2307
    %2309 = vmatprep.mubr.bf16.mxu0 %v1967
    %2310 = vmatmul.mubr.bf16.gmra.mrb[0].mxu0 %v1966
    %v2311 = vpop.f32.mrb[0].mxu0
    %v2312 = vadd.f32 %v1980, %v2311
    %v2313 = vpop.f32.mrb[0].mxu0
    %v2314 = vadd.f32 %v1984, %v2313
    %v2315 = vpop.f32.mrb[0].mxu0
    %v2316 = vadd.f32 %v1980, %v2315
    %v2317 = vpop.f32.mrb[0].mxu0
    %v2318 = vadd.f32 %v1984, %v2317
    %2319 = vmatprep.mubr.bf16.mxu0 %v1970
    %2320 = vmatmul.mubr.bf16.gmra.mrb[0].mxu0 %v1969
    %v2321 = vpop.f32.mrb[0].mxu0
    %v2322 = vadd.f32 %v1980, %v2321
    %v2323 = vpop.f32.mrb[0].mxu0
    %v2324 = vadd.f32 %v1984, %v2323
    %v2325 = vpop.f32.mrb[0].mxu0
    %v2326 = vadd.f32 %v1980, %v2325
    %v2327 = vpop.f32.mrb[0].mxu0
    %v2328 = vadd.f32 %v1984, %v2327
    %2329 = vmatprep.mubr.bf16.mxu0 %v1973
    %2330 = vmatmul.mubr.bf16.gmra.mrb[0].mxu0 %v1972
    %v2331 = vpop.f32.mrb[0].mxu0
    %v2332 = vadd.f32 %v1980, %v2331
    %v2333 = vpop.f32.mrb[0].mxu0
    %v2334 = vadd.f32 %v1984, %v2333
    %v2335 = vpop.f32.mrb[0].mxu0
    %v2336 = vadd.f32 %v1980, %v2335
    %v2337 = vpop.f32.mrb[0].mxu0
    %v2338 = vadd.f32 %v1984, %v2337
    %2339 = vdwg.mxu0
    %2340 = vmatprep.subr.bf16.mxu0 %v2164
    %2341 = vmatpush1.bf16.msra.mxu0 %v2163
    %2342 = vmatprep.subr.bf16.mxu0 %v2166
    %2343 = vmatpush1.bf16.msra.mxu0 %v2165
    %2344 = vmatprep.subr.bf16.mxu0 %v2168
    %2345 = vmatpush1.bf16.msra.mxu0 %v2167
    %2346 = vmatprep.subr.bf16.mxu0 %v2170
    %2347 = vmatpush1.bf16.msra.mxu0 %v2169
    %2348 = vmatprep.subr.bf16.mxu0 %v2172
    %2349 = vmatpush1.bf16.msra.mxu0 %v2171
    %2350 = vmatprep.subr.bf16.mxu0 %v2174
    %2351 = vmatpush1.bf16.msra.mxu0 %v2173
    %2352 = vmatprep.subr.bf16.mxu0 %v2176
    %2353 = vmatpush1.bf16.msra.mxu0 %v2175
    %2354 = vmatprep.subr.bf16.mxu0 %v2178
    %2355 = vmatpush1.bf16.msra.mxu0 %v2177
    %2356 = vmatprep.subr.bf16.mxu0 0
    %2357 = vmatpush1.bf16.msra.mxu0 0
    %2358 = vmatprep.subr.bf16.mxu0 0
    %2359 = vmatpush1.bf16.msra.mxu0 0
    %2360 = vmatprep.subr.bf16.mxu0 0
    %2361 = vmatpush1.bf16.msra.mxu0 0
    %2362 = vmatprep.subr.bf16.mxu0 0
    %2363 = vmatpush1.bf16.msra.mxu0 0
    %2364 = vmatprep.subr.bf16.mxu0 0
    %2365 = vmatpush1.bf16.msra.mxu0 0
    %2366 = vmatprep.subr.bf16.mxu0 0
    %2367 = vmatpush1.bf16.msra.mxu0 0
    %2368 = vmatprep.subr.bf16.mxu0 0
    %2369 = vmatpush1.bf16.msra.mxu0 0
    %2370 = vmatprep.subr.bf16.mxu0 0
    %2371 = vmatpush1.bf16.msra.mxu0 0
    %2372 = vmatprep.mubr.bf16.mxu0 0
    %2373 = vmatmul.mubr.bf16.gmra.mrb[0].mxu0 %v1953
    %v2374 = vpop.f32.mrb[0].mxu0
    %v2375 = vadd.f32 %v2262, %v2374
    %v2376 = vpop.f32.mrb[0].mxu0
    %v2377 = vadd.f32 %v2264, %v2376
    %v2378 = vpop.f32.mrb[0].mxu0
    %v2379 = vadd.f32 %v2266, %v2378
    %v2380 = vpop.f32.mrb[0].mxu0
    %v2381 = vadd.f32 %v2268, %v2380
    %2382 = vmatprep.mubr.bf16.mxu0 0
    %2383 = vmatmul.mubr.bf16.gmra.mrb[0].mxu0 %v1956
    %v2384 = vpop.f32.mrb[0].mxu0
    %v2385 = vadd.f32 %v2272, %v2384
    %v2386 = vpop.f32.mrb[0].mxu0
    %v2387 = vadd.f32 %v2274, %v2386
    %v2388 = vpop.f32.mrb[0].mxu0
    %v2389 = vadd.f32 %v2276, %v2388
    %v2390 = vpop.f32.mrb[0].mxu0
    %v2391 = vadd.f32 %v2278, %v2390
    %2392 = vmatprep.mubr.bf16.mxu0 0
    %2393 = vmatmul.mubr.bf16.gmra.mrb[0].mxu0 %v1959
    %v2394 = vpop.f32.mrb[0].mxu0
    %v2395 = vadd.f32 %v2282, %v2394
    %v2396 = vpop.f32.mrb[0].mxu0
    %v2397 = vadd.f32 %v2284, %v2396
    %v2398 = vpop.f32.mrb[0].mxu0
    %v2399 = vadd.f32 %v2286, %v2398
    %v2400 = vpop.f32.mrb[0].mxu0
    %v2401 = vadd.f32 %v2288, %v2400
    %2402 = vmatprep.mubr.bf16.mxu0 0
    %2403 = vmatmul.mubr.bf16.gmra.mrb[0].mxu0 %v1962
    %v2404 = vpop.f32.mrb[0].mxu0
    %v2405 = vadd.f32 %v2292, %v2404
    %v2406 = vpop.f32.mrb[0].mxu0
    %v2407 = vadd.f32 %v2294, %v2406
    %v2408 = vpop.f32.mrb[0].mxu0
    %v2409 = vadd.f32 %v2296, %v2408
    %v2410 = vpop.f32.mrb[0].mxu0
    %v2411 = vadd.f32 %v2298, %v2410
    %2412 = vmatprep.mubr.bf16.mxu0 0
    %2413 = vmatmul.mubr.bf16.gmra.mrb[0].mxu0 %v1965
    %v2414 = vpop.f32.mrb[0].mxu0
    %v2415 = vadd.f32 %v2302, %v2414
    %v2416 = vpop.f32.mrb[0].mxu0
    %v2417 = vadd.f32 %v2304, %v2416
    %v2418 = vpop.f32.mrb[0].mxu0
    %v2419 = vadd.f32 %v2306, %v2418
    %v2420 = vpop.f32.mrb[0].mxu0
    %v2421 = vadd.f32 %v2308, %v2420
    %2422 = vmatprep.mubr.bf16.mxu0 0
    %2423 = vmatmul.mubr.bf16.gmra.mrb[0].mxu0 %v1968
    %v2424 = vpop.f32.mrb[0].mxu0
    %v2425 = vadd.f32 %v2312, %v2424
    %v2426 = vpop.f32.mrb[0].mxu0
    %v2427 = vadd.f32 %v2314, %v2426
    %v2428 = vpop.f32.mrb[0].mxu0
    %v2429 = vadd.f32 %v2316, %v2428
    %v2430 = vpop.f32.mrb[0].mxu0
    %v2431 = vadd.f32 %v2318, %v2430
    %2432 = vmatprep.mubr.bf16.mxu0 0
    %2433 = vmatmul.mubr.bf16.gmra.mrb[0].mxu0 %v1971
    %v2434 = vpop.f32.mrb[0].mxu0
    %v2435 = vadd.f32 %v2322, %v2434
    %v2436 = vpop.f32.mrb[0].mxu0
    %v2437 = vadd.f32 %v2324, %v2436
    %v2438 = vpop.f32.mrb[0].mxu0
    %v2439 = vadd.f32 %v2326, %v2438
    %v2440 = vpop.f32.mrb[0].mxu0
    %v2441 = vadd.f32 %v2328, %v2440
    %2442 = vmatprep.mubr.bf16.mxu0 0
    %2443 = vmatmul.mubr.bf16.gmra.mrb[0].mxu0 %v1974
    %v2444 = vpop.f32.mrb[0].mxu0
    %v2445 = vadd.f32 %v2332, %v2444
    %v2446 = vpop.f32.mrb[0].mxu0
    %v2447 = vadd.f32 %v2334, %v2446
    %v2448 = vpop.f32.mrb[0].mxu0
    %v2449 = vadd.f32 %v2336, %v2448
    %v2450 = vpop.f32.mrb[0].mxu0
    %v2451 = vadd.f32 %v2338, %v2450
    %2452 = vdwg.mxu0
    %v2453 = vmax.f32 %v2375, 0.0
    %v2454 = vmax.f32 %v2377, 0.0
    %v2455 = vmax.f32 %v2379, 0.0
    %v2456 = vmax.f32 %v2381, 0.0
    %v2457 = vmax.f32 %v2385, 0.0
    %v2458 = vmax.f32 %v2387, 0.0
    %v2459 = vmax.f32 %v2389, 0.0
    %v2460 = vmax.f32 %v2391, 0.0
    %v2461 = vmax.f32 %v2395, 0.0
    %v2462 = vmax.f32 %v2397, 0.0
    %v2463 = vmax.f32 %v2399, 0.0
    %v2464 = vmax.f32 %v2401, 0.0
    %v2465 = vmax.f32 %v2405, 0.0
    %v2466 = vmax.f32 %v2407, 0.0
    %v2467 = vmax.f32 %v2409, 0.0
    %v2468 = vmax.f32 %v2411, 0.0
    %v2469 = vmax.f32 %v2415, 0.0
    %v2470 = vmax.f32 %v2417, 0.0
    %v2471 = vmax.f32 %v2419, 0.0
    %v2472 = vmax.f32 %v2421, 0.0
    %v2473 = vmax.f32 %v2425, 0.0
    %v2474 = vmax.f32 %v2427, 0.0
    %v2475 = vmax.f32 %v2429, 0.0
    %v2476 = vmax.f32 %v2431, 0.0
    %v2477 = vmax.f32 %v2435, 0.0
    %v2478 = vmax.f32 %v2437, 0.0
    %v2479 = vmax.f32 %v2439, 0.0
    %v2480 = vmax.f32 %v2441, 0.0
    %v2481 = vmax.f32 %v2445, 0.0
    %v2482 = vmax.f32 %v2447, 0.0
    %v2483 = vmax.f32 %v2449, 0.0
    %v2484 = vmax.f32 %v2451, 0.0
    %v2485 = vmax.f32 %v2453, %v2454
    %v2486 = vmax.f32 %v2455, %v2456
    %v2487 = vmax.f32 %v2457, %v2458
    %v2488 = vmax.f32 %v2459, %v2460
    %v2489 = vmax.f32 %v2461, %v2462
    %v2490 = vmax.f32 %v2463, %v2464
    %v2491 = vmax.f32 %v2465, %v2466
    %v2492 = vmax.f32 %v2467, %v2468
    %v2493 = vmax.f32 %v2469, %v2470
    %v2494 = vmax.f32 %v2471, %v2472
    %v2495 = vmax.f32 %v2473, %v2474
    %v2496 = vmax.f32 %v2475, %v2476
    %v2497 = vmax.f32 %v2477, %v2478
    %v2498 = vmax.f32 %v2479, %v2480
    %v2499 = vmax.f32 %v2481, %v2482
    %v2500 = vmax.f32 %v2483, %v2484
    %2501 = vst [vmem:[#allocation2] sm:$0xff] %v2485
    %2502 = vst [vmem:[#allocation2 + $0x8] sm:$0xff] %v2486
    %2503 = vst [vmem:[#allocation2 + $0x10] sm:$0xff] %v2487
    %2504 = vst [vmem:[#allocation2 + $0x18] sm:$0xff] %v2488
    %2505 = vst [vmem:[#allocation2 + $0x20] sm:$0xff] %v2489
    %2506 = vst [vmem:[#allocation2 + $0x28] sm:$0xff] %v2490
    %2507 = vst [vmem:[#allocation2 + $0x30] sm:$0xff] %v2491
    %2508 = vst [vmem:[#allocation2 + $0x38] sm:$0xff] %v2492
    %2509 = vst [vmem:[#allocation2 + $0x40] sm:$0xff] %v2493
    %2510 = vst [vmem:[#allocation2 + $0x48] sm:$0xff] %v2494
    %2511 = vst [vmem:[#allocation2 + $0x50] sm:$0xff] %v2495
    %2512 = vst [vmem:[#allocation2 + $0x58] sm:$0xff] %v2496
    %2513 = vst [vmem:[#allocation2 + $0x60] sm:$0xff] %v2497
    %2514 = vst [vmem:[#allocation2 + $0x68] sm:$0xff] %v2498
    %2515 = vst [vmem:[#allocation2 + $0x70] sm:$0xff] %v2499
    %2516 = vst [vmem:[#allocation2 + $0x78] sm:$0xff] %v2500
    %v2517 = vld [vmem:[#allocation2] ss:$2 sm:$0xff]
    %s2518 = scalar_lea.vmem [#allocation2], 16
    %v2519 = vld [vmem:[%s2518] ss:$2 sm:$0xff]
    %s2520 = scalar_lea.vmem [#allocation2], 32
    %v2521 = vld [vmem:[%s2520] ss:$2 sm:$0xff]
    %s2522 = scalar_lea.vmem [#allocation2], 48
    %v2523 = vld [vmem:[%s2522] ss:$2 sm:$0xff]
    %s2524 = scalar_lea.vmem [#allocation2], 64
    %v2525 = vld [vmem:[%s2524] ss:$2 sm:$0xff]
    %s2526 = scalar_lea.vmem [#allocation2], 80
    %v2527 = vld [vmem:[%s2526] ss:$2 sm:$0xff]
    %s2528 = scalar_lea.vmem [#allocation2], 96
    %v2529 = vld [vmem:[%s2528] ss:$2 sm:$0xff]
    %s2530 = scalar_lea.vmem [#allocation2], 112
    %v2531 = vld [vmem:[%s2530] ss:$2 sm:$0xff]
    %v2532 = vld [vmem:[%s1711] ss:$2 sm:$0xff]
    %v2533 = vld [vmem:[%s1713] ss:$2 sm:$0xff]
    %v2534 = vld [vmem:[%s1715] ss:$2 sm:$0xff]
    %v2535 = vld [vmem:[%s1717] ss:$2 sm:$0xff]
    %v2536 = vld [vmem:[%s1719] ss:$2 sm:$0xff]
    %v2537 = vld [vmem:[%s1721] ss:$2 sm:$0xff]
    %v2538 = vld [vmem:[%s1723] ss:$2 sm:$0xff]
    %v2539 = vld [vmem:[%s1725] ss:$2 sm:$0xff]
    %v2540 = vmax.f32 %v2517, %v2532
    %v2541 = vmax.f32 %v2519, %v2533
    %v2542 = vmax.f32 %v2521, %v2534
    %v2543 = vmax.f32 %v2523, %v2535
    %v2544 = vmax.f32 %v2525, %v2536
    %v2545 = vmax.f32 %v2527, %v2537
    %v2546 = vmax.f32 %v2529, %v2538
    %v2547 = vmax.f32 %v2531, %v2539
    %v2548 = vand.u32 %v100, 7
    %v2549 = vand.u32 %v101, 7
    %v2550 = vand.u32 %v102, 7
    %v2551 = vand.u32 %v103, 7
    %v2552 = vand.u32 %v104, 7
    %v2553 = vand.u32 %v105, 7
    %v2554 = vand.u32 %v106, 7
    %v2555 = vand.u32 %v107, 7
    %vm2556 = vcmp.eq.s32.totalorder %v2548, 0
    %vm2557 = vcmp.eq.s32.totalorder %v2549, 0
    %vm2558 = vcmp.eq.s32.totalorder %v2550, 0
    %vm2559 = vcmp.eq.s32.totalorder %v2551, 0
    %vm2560 = vcmp.eq.s32.totalorder %v2552, 0
    %vm2561 = vcmp.eq.s32.totalorder %v2553, 0
    %vm2562 = vcmp.eq.s32.totalorder %v2554, 0
    %vm2563 = vcmp.eq.s32.totalorder %v2555, 0
    %vm2564 = vcmp.eq.s32.totalorder %v2548, 7
    %vm2565 = vcmp.eq.s32.totalorder %v2549, 7
    %vm2566 = vcmp.eq.s32.totalorder %v2550, 7
    %vm2567 = vcmp.eq.s32.totalorder %v2551, 7
    %vm2568 = vcmp.eq.s32.totalorder %v2552, 7
    %vm2569 = vcmp.eq.s32.totalorder %v2553, 7
    %vm2570 = vcmp.eq.s32.totalorder %v2554, 7
    %vm2571 = vcmp.eq.s32.totalorder %v2555, 7
    %v2572 = vrot.slane %v2540, 7
    %v2573 = vrot.slane %v2541, 7
    %v2574 = vrot.slane %v2542, 7
    %v2575 = vrot.slane %v2543, 7
    %v2576 = vrot.slane %v2544, 7
    %v2577 = vrot.slane %v2545, 7
    %v2578 = vrot.slane %v2546, 7
    %v2579 = vrot.slane %v2547, 7
    %v2580 = vsel %vm260, %v2578, %v2579
    %v2581 = vsel %vm260, %v2577, %v2578
    %v2582 = vsel %vm260, %v2576, %v2577
    %v2583 = vsel %vm260, %v2575, %v2576
    %v2584 = vsel %vm260, %v2574, %v2575
    %v2585 = vsel %vm260, %v2573, %v2574
    %v2586 = vsel %vm260, %v2572, %v2573
    %v2587 = vsel %vm260, %v2579, %v2572
    %v2588 = vsel %vm2556, 0.0, %v2587
    %v2589 = vsel %vm2557, 0.0, %v2586
    %v2590 = vsel %vm2558, 0.0, %v2585
    %v2591 = vsel %vm2559, 0.0, %v2584
    %v2592 = vsel %vm2560, 0.0, %v2583
    %v2593 = vsel %vm2561, 0.0, %v2582
    %v2594 = vsel %vm2562, 0.0, %v2581
    %v2595 = vsel %vm2563, 0.0, %v2580
    %v2596 = vrot.slane %v2540, 1
    %v2597 = vrot.slane %v2541, 1
    %v2598 = vrot.slane %v2542, 1
    %v2599 = vrot.slane %v2543, 1
    %v2600 = vrot.slane %v2544, 1
    %v2601 = vrot.slane %v2545, 1
    %v2602 = vrot.slane %v2546, 1
    %v2603 = vrot.slane %v2547, 1
    %v2604 = vsel %vm357, %v2602, %v2603
    %v2605 = vsel %vm357, %v2601, %v2602
    %v2606 = vsel %vm357, %v2600, %v2601
    %v2607 = vsel %vm357, %v2599, %v2600
    %v2608 = vsel %vm357, %v2598, %v2599
    %v2609 = vsel %vm357, %v2597, %v2598
    %v2610 = vsel %vm357, %v2596, %v2597
    %v2611 = vsel %vm357, %v2603, %v2596
    %v2612 = vsel %vm2564, 0.0, %v2610
    %v2613 = vsel %vm2565, 0.0, %v2609
    %v2614 = vsel %vm2566, 0.0, %v2608
    %v2615 = vsel %vm2567, 0.0, %v2607
    %v2616 = vsel %vm2568, 0.0, %v2606
    %v2617 = vsel %vm2569, 0.0, %v2605
    %v2618 = vsel %vm2570, 0.0, %v2604
    %v2619 = vsel %vm2571, 0.0, %v2611
    %v2620 = vld [vmem:[%s5] sm:$0xff]
    %v2621 = vld [vmem:[%s5 + $0x8] sm:$0xff]
    %v2622 = vld [vmem:[%s5 + $0x10] sm:$0xff]
    %v2623 = vld [vmem:[%s5 + $0x18] sm:$0xff]
    %v2624 = vld [vmem:[%s5 + $0x20] sm:$0xff]
    %v2625 = vld [vmem:[%s5 + $0x28] sm:$0xff]
    %v2626 = vld [vmem:[%s5 + $0x30] sm:$0xff]
    %v2627 = vld [vmem:[%s5 + $0x38] sm:$0xff]
    %v2628 = vld [vmem:[%s5 + $0x40] sm:$0xff]
    %v2629 = vld [vmem:[%s5 + $0x48] sm:$0xff]
    %v2630 = vld [vmem:[%s5 + $0x50] sm:$0xff]
    %v2631 = vld [vmem:[%s5 + $0x58] sm:$0xff]
    %v2632 = vld [vmem:[%s5 + $0x60] sm:$0xff]
    %v2633 = vld [vmem:[%s5 + $0x68] sm:$0xff]
    %v2634 = vld [vmem:[%s5 + $0x70] sm:$0xff]
    %v2635 = vld [vmem:[%s5 + $0x78] sm:$0xff]
    %v2636 = vld [vmem:[%s5 + $0x80] sm:$0xff]
    %v2637 = vld [vmem:[%s5 + $0x88] sm:$0xff]
    %v2638 = vld [vmem:[%s5 + $0x90] sm:$0xff]
    %v2639 = vld [vmem:[%s5 + $0x98] sm:$0xff]
    %v2640 = vld [vmem:[%s5 + $0xa0] sm:$0xff]
    %v2641 = vld [vmem:[%s5 + $0xa8] sm:$0xff]
    %v2642 = vld [vmem:[%s5 + $0xb0] sm:$0xff]
    %v2643 = vld [vmem:[%s5 + $0xb8] sm:$0xff]
    %v2644 = vld [vmem:[%s5 + $0xc0] sm:$0xff]
    %v2645 = vld [vmem:[%s5 + $0xc8] sm:$0xff]
    %v2646 = vld [vmem:[%s5 + $0xd0] sm:$0xff]
    %v2647 = vld [vmem:[%s5 + $0xd8] sm:$0xff]
    %v2648 = vld [vmem:[%s5 + $0xe0] sm:$0xff]
    %v2649 = vld [vmem:[%s5 + $0xe8] sm:$0xff]
    %v2650 = vld [vmem:[%s5 + $0xf0] sm:$0xff]
    %v2651 = vld [vmem:[%s5 + $0xf8] sm:$0xff]
    %v2652 = vld [vmem:[%s5 + $0x100] sm:$0xff]
    %v2653 = vld [vmem:[%s5 + $0x108] sm:$0xff]
    %v2654 = vld [vmem:[%s5 + $0x110] sm:$0xff]
    %v2655 = vld [vmem:[%s5 + $0x118] sm:$0xff]
    %v2656 = vld [vmem:[%s5 + $0x120] sm:$0xff]
    %v2657 = vld [vmem:[%s5 + $0x128] sm:$0xff]
    %v2658 = vld [vmem:[%s5 + $0x130] sm:$0xff]
    %v2659 = vld [vmem:[%s5 + $0x138] sm:$0xff]
    %v2660 = vld [vmem:[%s5 + $0x140] sm:$0xff]
    %v2661 = vld [vmem:[%s5 + $0x148] sm:$0xff]
    %v2662 = vld [vmem:[%s5 + $0x150] sm:$0xff]
    %v2663 = vld [vmem:[%s5 + $0x158] sm:$0xff]
    %v2664 = vld [vmem:[%s5 + $0x160] sm:$0xff]
    %v2665 = vld [vmem:[%s5 + $0x168] sm:$0xff]
    %v2666 = vld [vmem:[%s5 + $0x170] sm:$0xff]
    %v2667 = vld [vmem:[%s5 + $0x178] sm:$0xff]
    %v2668 = vpack.c.bf16 %v2589, %v2588
    %v2669 = vpack.c.bf16 %v2541, %v2540
    %v2670 = vpack.c.bf16 %v2613, %v2612
    %v2671 = vpack.c.bf16 %v2591, %v2590
    %v2672 = vpack.c.bf16 %v2543, %v2542
    %v2673 = vpack.c.bf16 %v2615, %v2614
    %v2674 = vpack.c.bf16 %v2593, %v2592
    %v2675 = vpack.c.bf16 %v2545, %v2544
    %v2676 = vpack.c.bf16 %v2617, %v2616
    %v2677 = vpack.c.bf16 %v2595, %v2594
    %v2678 = vpack.c.bf16 %v2547, %v2546
    %v2679 = vpack.c.bf16 %v2619, %v2618
    %v2680 = vld [vmem:[%s6] sm:$0x3]
    %v2682 = vlaneseq
    %v2683 = vshrl.u32 %v2682, 7
    %v2684 = vsub.s32 0, %v2683
    %v2685 = vrot.slane %v2680, %v2684
    %v2686 = vlaneseq
    %v2687 = vshrl.u32 %v2686, 7
    %v2688 = vsub.s32 1, %v2687
    %v2689 = vrot.slane %v2680, %v2688
    %v2740 = vunpack.c.l.b16 %v2620
    %v2741 = vunpack.c.h.b16 %v2620
    %v2742 = vunpack.c.l.b16 %v2621
    %v2743 = vunpack.c.h.b16 %v2621
    %v2744 = vunpack.c.l.b16 %v2622
    %v2745 = vunpack.c.h.b16 %v2622
    %v2746 = vunpack.c.l.b16 %v2623
    %v2747 = vunpack.c.h.b16 %v2623
    %v2748 = vunpack.c.l.b16 %v2624
    %v2749 = vunpack.c.h.b16 %v2624
    %v2750 = vunpack.c.l.b16 %v2625
    %v2751 = vunpack.c.h.b16 %v2625
    %v2752 = vunpack.c.l.b16 %v2626
    %v2753 = vunpack.c.h.b16 %v2626
    %v2754 = vunpack.c.l.b16 %v2627
    %v2755 = vunpack.c.h.b16 %v2627
    %v2756 = vunpack.c.l.b16 %v2628
    %v2757 = vunpack.c.h.b16 %v2628
    %v2758 = vunpack.c.l.b16 %v2629
    %v2759 = vunpack.c.h.b16 %v2629
    %v2760 = vunpack.c.l.b16 %v2630
    %v2761 = vunpack.c.h.b16 %v2630
    %v2762 = vunpack.c.l.b16 %v2631
    %v2763 = vunpack.c.h.b16 %v2631
    %v2764 = vunpack.c.l.b16 %v2632
    %v2765 = vunpack.c.h.b16 %v2632
    %v2766 = vunpack.c.l.b16 %v2633
    %v2767 = vunpack.c.h.b16 %v2633
    %v2768 = vunpack.c.l.b16 %v2634
    %v2769 = vunpack.c.h.b16 %v2634
    %v2770 = vunpack.c.l.b16 %v2635
    %v2771 = vunpack.c.h.b16 %v2635
    %v2772 = vunpack.c.l.b16 %v2636
    %v2773 = vunpack.c.h.b16 %v2636
    %v2774 = vunpack.c.l.b16 %v2637
    %v2775 = vunpack.c.h.b16 %v2637
    %v2776 = vunpack.c.l.b16 %v2638
    %v2777 = vunpack.c.h.b16 %v2638
    %v2778 = vunpack.c.l.b16 %v2639
    %v2779 = vunpack.c.h.b16 %v2639
    %v2780 = vunpack.c.l.b16 %v2640
    %v2781 = vunpack.c.h.b16 %v2640
    %v2782 = vunpack.c.l.b16 %v2641
    %v2783 = vunpack.c.h.b16 %v2641
    %v2784 = vunpack.c.l.b16 %v2642
    %v2785 = vunpack.c.h.b16 %v2642
    %v2786 = vunpack.c.l.b16 %v2643
    %v2787 = vunpack.c.h.b16 %v2643
    %v2788 = vunpack.c.l.b16 %v2644
    %v2789 = vunpack.c.h.b16 %v2644
    %v2790 = vunpack.c.l.b16 %v2645
    %v2791 = vunpack.c.h.b16 %v2645
    %v2792 = vunpack.c.l.b16 %v2646
    %v2793 = vunpack.c.h.b16 %v2646
    %v2794 = vunpack.c.l.b16 %v2647
    %v2795 = vunpack.c.h.b16 %v2647
    %v2796 = vunpack.c.l.b16 %v2648
    %v2797 = vunpack.c.h.b16 %v2648
    %v2798 = vunpack.c.l.b16 %v2649
    %v2799 = vunpack.c.h.b16 %v2649
    %v2800 = vunpack.c.l.b16 %v2650
    %v2801 = vunpack.c.h.b16 %v2650
    %v2802 = vunpack.c.l.b16 %v2651
    %v2803 = vunpack.c.h.b16 %v2651
    %v2804 = vunpack.c.l.b16 %v2652
    %v2805 = vunpack.c.h.b16 %v2652
    %v2806 = vunpack.c.l.b16 %v2653
    %v2807 = vunpack.c.h.b16 %v2653
    %v2808 = vunpack.c.l.b16 %v2654
    %v2809 = vunpack.c.h.b16 %v2654
    %v2810 = vunpack.c.l.b16 %v2655
    %v2811 = vunpack.c.h.b16 %v2655
    %v2812 = vunpack.c.l.b16 %v2656
    %v2813 = vunpack.c.h.b16 %v2656
    %v2814 = vunpack.c.l.b16 %v2657
    %v2815 = vunpack.c.h.b16 %v2657
    %v2816 = vunpack.c.l.b16 %v2658
    %v2817 = vunpack.c.h.b16 %v2658
    %v2818 = vunpack.c.l.b16 %v2659
    %v2819 = vunpack.c.h.b16 %v2659
    %v2820 = vunpack.c.l.b16 %v2660
    %v2821 = vunpack.c.h.b16 %v2660
    %v2822 = vunpack.c.l.b16 %v2661
    %v2823 = vunpack.c.h.b16 %v2661
    %v2824 = vunpack.c.l.b16 %v2662
    %v2825 = vunpack.c.h.b16 %v2662
    %v2826 = vunpack.c.l.b16 %v2663
    %v2827 = vunpack.c.h.b16 %v2663
    %v2828 = vunpack.c.l.b16 %v2664
    %v2829 = vunpack.c.h.b16 %v2664
    %v2830 = vunpack.c.l.b16 %v2665
    %v2831 = vunpack.c.h.b16 %v2665
    %v2832 = vunpack.c.l.b16 %v2666
    %v2833 = vunpack.c.h.b16 %v2666
    %v2834 = vunpack.c.l.b16 %v2667
    %v2835 = vunpack.c.h.b16 %v2667
    %v2836 = vpack.c.b16 %v2742, %v2740
    %v2837 = vpack.c.b16 %v2743, %v2741
    %v2838 = vpack.c.b16 %v2746, %v2744
    %v2839 = vpack.c.b16 %v2747, %v2745
    %v2840 = vpack.c.b16 %v2750, %v2748
    %v2841 = vpack.c.b16 %v2751, %v2749
    %v2842 = vpack.c.b16 %v2754, %v2752
    %v2843 = vpack.c.b16 %v2755, %v2753
    %v2844 = vpack.c.b16 %v2758, %v2756
    %v2845 = vpack.c.b16 %v2759, %v2757
    %v2846 = vpack.c.b16 %v2762, %v2760
    %v2847 = vpack.c.b16 %v2763, %v2761
    %v2848 = vpack.c.b16 %v2766, %v2764
    %v2849 = vpack.c.b16 %v2767, %v2765
    %v2850 = vpack.c.b16 %v2770, %v2768
    %v2851 = vpack.c.b16 %v2771, %v2769
    %v2852 = vpack.c.b16 %v2774, %v2772
    %v2853 = vpack.c.b16 %v2775, %v2773
    %v2854 = vpack.c.b16 %v2778, %v2776
    %v2855 = vpack.c.b16 %v2779, %v2777
    %v2856 = vpack.c.b16 %v2782, %v2780
    %v2857 = vpack.c.b16 %v2783, %v2781
    %v2858 = vpack.c.b16 %v2786, %v2784
    %v2859 = vpack.c.b16 %v2787, %v2785
    %v2860 = vpack.c.b16 %v2790, %v2788
    %v2861 = vpack.c.b16 %v2791, %v2789
    %v2862 = vpack.c.b16 %v2794, %v2792
    %v2863 = vpack.c.b16 %v2795, %v2793
    %v2864 = vpack.c.b16 %v2798, %v2796
    %v2865 = vpack.c.b16 %v2799, %v2797
    %v2866 = vpack.c.b16 %v2802, %v2800
    %v2867 = vpack.c.b16 %v2803, %v2801
    %v2868 = vpack.c.b16 %v2806, %v2804
    %v2869 = vpack.c.b16 %v2807, %v2805
    %v2870 = vpack.c.b16 %v2810, %v2808
    %v2871 = vpack.c.b16 %v2811, %v2809
    %v2872 = vpack.c.b16 %v2814, %v2812
    %v2873 = vpack.c.b16 %v2815, %v2813
    %v2874 = vpack.c.b16 %v2818, %v2816
    %v2875 = vpack.c.b16 %v2819, %v2817
    %v2876 = vpack.c.b16 %v2822, %v2820
    %v2877 = vpack.c.b16 %v2823, %v2821
    %v2878 = vpack.c.b16 %v2826, %v2824
    %v2879 = vpack.c.b16 %v2827, %v2825
    %v2880 = vpack.c.b16 %v2830, %v2828
    %v2881 = vpack.c.b16 %v2831, %v2829
    %v2882 = vpack.c.b16 %v2834, %v2832
    %v2883 = vpack.c.b16 %v2835, %v2833
    %2932 = vmatprep.subr.bf16.mxu0 %v2837
    %2933 = vmatpush1.bf16.msra.mxu0 %v2836
    %2934 = vmatprep.subr.bf16.mxu0 %v2839
    %2935 = vmatpush1.bf16.msra.mxu0 %v2838
    %2936 = vmatprep.subr.bf16.mxu0 %v2841
    %2937 = vmatpush1.bf16.msra.mxu0 %v2840
    %2938 = vmatprep.subr.bf16.mxu0 %v2843
    %2939 = vmatpush1.bf16.msra.mxu0 %v2842
    %2940 = vmatprep.subr.bf16.mxu0 %v2845
    %2941 = vmatpush1.bf16.msra.mxu0 %v2844
    %2942 = vmatprep.subr.bf16.mxu0 %v2847
    %2943 = vmatpush1.bf16.msra.mxu0 %v2846
    %2944 = vmatprep.subr.bf16.mxu0 %v2849
    %2945 = vmatpush1.bf16.msra.mxu0 %v2848
    %2946 = vmatprep.subr.bf16.mxu0 %v2851
    %2947 = vmatpush1.bf16.msra.mxu0 %v2850
    %2948 = vmatprep.subr.bf16.mxu0 %v2853
    %2949 = vmatpush1.bf16.msra.mxu0 %v2852
    %2950 = vmatprep.subr.bf16.mxu0 %v2855
    %2951 = vmatpush1.bf16.msra.mxu0 %v2854
    %2952 = vmatprep.subr.bf16.mxu0 %v2857
    %2953 = vmatpush1.bf16.msra.mxu0 %v2856
    %2954 = vmatprep.subr.bf16.mxu0 %v2859
    %2955 = vmatpush1.bf16.msra.mxu0 %v2858
    %2956 = vmatprep.subr.bf16.mxu0 %v2861
    %2957 = vmatpush1.bf16.msra.mxu0 %v2860
    %2958 = vmatprep.subr.bf16.mxu0 %v2863
    %2959 = vmatpush1.bf16.msra.mxu0 %v2862
    %2960 = vmatprep.subr.bf16.mxu0 %v2865
    %2961 = vmatpush1.bf16.msra.mxu0 %v2864
    %2962 = vmatprep.subr.bf16.mxu0 %v2867
    %2963 = vmatpush1.bf16.msra.mxu0 %v2866
    %2964 = vmatprep.mubr.bf16.mxu0 %v2669
    %2965 = vmatmul.mubr.bf16.gmra.mrb[0].mxu0 %v2668
    %v2966 = vpop.f32.mrb[0].mxu0
    %v2967 = vadd.f32 %v2685, %v2966
    %v2968 = vpop.f32.mrb[0].mxu0
    %v2969 = vadd.f32 %v2689, %v2968
    %v2970 = vpop.f32.mrb[0].mxu0
    %v2971 = vadd.f32 %v2685, %v2970
    %v2972 = vpop.f32.mrb[0].mxu0
    %v2973 = vadd.f32 %v2689, %v2972
    %2974 = vmatprep.mubr.bf16.mxu0 %v2672
    %2975 = vmatmul.mubr.bf16.gmra.mrb[0].mxu0 %v2671
    %v2976 = vpop.f32.mrb[0].mxu0
    %v2977 = vadd.f32 %v2685, %v2976
    %v2978 = vpop.f32.mrb[0].mxu0
    %v2979 = vadd.f32 %v2689, %v2978
    %v2980 = vpop.f32.mrb[0].mxu0
    %v2981 = vadd.f32 %v2685, %v2980
    %v2982 = vpop.f32.mrb[0].mxu0
    %v2983 = vadd.f32 %v2689, %v2982
    %2984 = vmatprep.mubr.bf16.mxu0 %v2675
    %2985 = vmatmul.mubr.bf16.gmra.mrb[0].mxu0 %v2674
    %v2986 = vpop.f32.mrb[0].mxu0
    %v2987 = vadd.f32 %v2685, %v2986
    %v2988 = vpop.f32.mrb[0].mxu0
    %v2989 = vadd.f32 %v2689, %v2988
    %v2990 = vpop.f32.mrb[0].mxu0
    %v2991 = vadd.f32 %v2685, %v2990
    %v2992 = vpop.f32.mrb[0].mxu0
    %v2993 = vadd.f32 %v2689, %v2992
    %2994 = vmatprep.mubr.bf16.mxu0 %v2678
    %2995 = vmatmul.mubr.bf16.gmra.mrb[0].mxu0 %v2677
    %v2996 = vpop.f32.mrb[0].mxu0
    %v2997 = vadd.f32 %v2685, %v2996
    %v2998 = vpop.f32.mrb[0].mxu0
    %v2999 = vadd.f32 %v2689, %v2998
    %v3000 = vpop.f32.mrb[0].mxu0
    %v3001 = vadd.f32 %v2685, %v3000
    %v3002 = vpop.f32.mrb[0].mxu0
    %v3003 = vadd.f32 %v2689, %v3002
    %3004 = vdwg.mxu0
    %3005 = vmatprep.subr.bf16.mxu0 %v2869
    %3006 = vmatpush1.bf16.msra.mxu0 %v2868
    %3007 = vmatprep.subr.bf16.mxu0 %v2871
    %3008 = vmatpush1.bf16.msra.mxu0 %v2870
    %3009 = vmatprep.subr.bf16.mxu0 %v2873
    %3010 = vmatpush1.bf16.msra.mxu0 %v2872
    %3011 = vmatprep.subr.bf16.mxu0 %v2875
    %3012 = vmatpush1.bf16.msra.mxu0 %v2874
    %3013 = vmatprep.subr.bf16.mxu0 %v2877
    %3014 = vmatpush1.bf16.msra.mxu0 %v2876
    %3015 = vmatprep.subr.bf16.mxu0 %v2879
    %3016 = vmatpush1.bf16.msra.mxu0 %v2878
    %3017 = vmatprep.subr.bf16.mxu0 %v2881
    %3018 = vmatpush1.bf16.msra.mxu0 %v2880
    %3019 = vmatprep.subr.bf16.mxu0 %v2883
    %3020 = vmatpush1.bf16.msra.mxu0 %v2882
    %3021 = vmatprep.subr.bf16.mxu0 0
    %3022 = vmatpush1.bf16.msra.mxu0 0
    %3023 = vmatprep.subr.bf16.mxu0 0
    %3024 = vmatpush1.bf16.msra.mxu0 0
    %3025 = vmatprep.subr.bf16.mxu0 0
    %3026 = vmatpush1.bf16.msra.mxu0 0
    %3027 = vmatprep.subr.bf16.mxu0 0
    %3028 = vmatpush1.bf16.msra.mxu0 0
    %3029 = vmatprep.subr.bf16.mxu0 0
    %3030 = vmatpush1.bf16.msra.mxu0 0
    %3031 = vmatprep.subr.bf16.mxu0 0
    %3032 = vmatpush1.bf16.msra.mxu0 0
    %3033 = vmatprep.subr.bf16.mxu0 0
    %3034 = vmatpush1.bf16.msra.mxu0 0
    %3035 = vmatprep.subr.bf16.mxu0 0
    %3036 = vmatpush1.bf16.msra.mxu0 0
    %3037 = vmatprep.mubr.bf16.mxu0 0
    %3038 = vmatmul.mubr.bf16.gmra.mrb[0].mxu0 %v2670
    %v3039 = vpop.f32.mrb[0].mxu0
    %v3040 = vadd.f32 %v2967, %v3039
    %v3041 = vpop.f32.mrb[0].mxu0
    %v3042 = vadd.f32 %v2969, %v3041
    %v3043 = vpop.f32.mrb[0].mxu0
    %v3044 = vadd.f32 %v2971, %v3043
    %v3045 = vpop.f32.mrb[0].mxu0
    %v3046 = vadd.f32 %v2973, %v3045
    %3047 = vmatprep.mubr.bf16.mxu0 0
    %3048 = vmatmul.mubr.bf16.gmra.mrb[0].mxu0 %v2673
    %v3049 = vpop.f32.mrb[0].mxu0
    %v3050 = vadd.f32 %v2977, %v3049
    %v3051 = vpop.f32.mrb[0].mxu0
    %v3052 = vadd.f32 %v2979, %v3051
    %v3053 = vpop.f32.mrb[0].mxu0
    %v3054 = vadd.f32 %v2981, %v3053
    %v3055 = vpop.f32.mrb[0].mxu0
    %v3056 = vadd.f32 %v2983, %v3055
    %3057 = vmatprep.mubr.bf16.mxu0 0
    %3058 = vmatmul.mubr.bf16.gmra.mrb[0].mxu0 %v2676
    %v3059 = vpop.f32.mrb[0].mxu0
    %v3060 = vadd.f32 %v2987, %v3059
    %v3061 = vpop.f32.mrb[0].mxu0
    %v3062 = vadd.f32 %v2989, %v3061
    %v3063 = vpop.f32.mrb[0].mxu0
    %v3064 = vadd.f32 %v2991, %v3063
    %v3065 = vpop.f32.mrb[0].mxu0
    %v3066 = vadd.f32 %v2993, %v3065
    %3067 = vmatprep.mubr.bf16.mxu0 0
    %3068 = vmatmul.mubr.bf16.gmra.mrb[0].mxu0 %v2679
    %v3069 = vpop.f32.mrb[0].mxu0
    %v3070 = vadd.f32 %v2997, %v3069
    %v3071 = vpop.f32.mrb[0].mxu0
    %v3072 = vadd.f32 %v2999, %v3071
    %v3073 = vpop.f32.mrb[0].mxu0
    %v3074 = vadd.f32 %v3001, %v3073
    %v3075 = vpop.f32.mrb[0].mxu0
    %v3076 = vadd.f32 %v3003, %v3075
    %3077 = vdwg.mxu0
    %v3078 = vmax.f32 %v3040, 0.0
    %v3079 = vmax.f32 %v3042, 0.0
    %v3080 = vmax.f32 %v3044, 0.0
    %v3081 = vmax.f32 %v3046, 0.0
    %v3082 = vmax.f32 %v3050, 0.0
    %v3083 = vmax.f32 %v3052, 0.0
    %v3084 = vmax.f32 %v3054, 0.0
    %v3085 = vmax.f32 %v3056, 0.0
    %v3086 = vmax.f32 %v3060, 0.0
    %v3087 = vmax.f32 %v3062, 0.0
    %v3088 = vmax.f32 %v3064, 0.0
    %v3089 = vmax.f32 %v3066, 0.0
    %v3090 = vmax.f32 %v3070, 0.0
    %v3091 = vmax.f32 %v3072, 0.0
    %v3092 = vmax.f32 %v3074, 0.0
    %v3093 = vmax.f32 %v3076, 0.0
    %v3094 = vmax.f32 %v3078, %v3079
    %v3095 = vmax.f32 %v3080, %v3081
    %v3096 = vmax.f32 %v3082, %v3083
    %v3097 = vmax.f32 %v3084, %v3085
    %v3098 = vmax.f32 %v3086, %v3087
    %v3099 = vmax.f32 %v3088, %v3089
    %v3100 = vmax.f32 %v3090, %v3091
    %v3101 = vmax.f32 %v3092, %v3093
    %3102 = vst [vmem:[#allocation2] sm:$0xff] %v3094
    %3103 = vst [vmem:[#allocation2 + $0x8] sm:$0xff] %v3095
    %3104 = vst [vmem:[#allocation2 + $0x10] sm:$0xff] %v3096
    %3105 = vst [vmem:[#allocation2 + $0x18] sm:$0xff] %v3097
    %3106 = vst [vmem:[#allocation2 + $0x20] sm:$0xff] %v3098
    %3107 = vst [vmem:[#allocation2 + $0x28] sm:$0xff] %v3099
    %3108 = vst [vmem:[#allocation2 + $0x30] sm:$0xff] %v3100
    %3109 = vst [vmem:[#allocation2 + $0x38] sm:$0xff] %v3101
    %v3110 = vld [vmem:[#allocation2] ss:$2 sm:$0xff]
    %v3111 = vld [vmem:[%s2518] ss:$2 sm:$0xff]
    %v3112 = vld [vmem:[%s2520] ss:$2 sm:$0xff]
    %v3113 = vld [vmem:[%s2522] ss:$2 sm:$0xff]
    %v3114 = vld [vmem:[%s1711] ss:$2 sm:$0xff]
    %v3115 = vld [vmem:[%s1713] ss:$2 sm:$0xff]
    %v3116 = vld [vmem:[%s1715] ss:$2 sm:$0xff]
    %v3117 = vld [vmem:[%s1717] ss:$2 sm:$0xff]
    %v3118 = vmax.f32 %v3110, %v3114
    %v3119 = vmax.f32 %v3111, %v3115
    %v3120 = vmax.f32 %v3112, %v3116
    %v3121 = vmax.f32 %v3113, %v3117
    %3122 = vst [vmem:[#allocation2 + $0x40] sm:$0xff] %v3118
    %3123 = vst [vmem:[#allocation2 + $0x48] sm:$0xff] %v3119
    %3124 = vst [vmem:[#allocation2 + $0x50] sm:$0xff] %v3120
    %3125 = vst [vmem:[#allocation2 + $0x58] sm:$0xff] %v3121
    %v3126 = vld [vmem:[%s2524] ss:$4 sm:$0xff]
    %v3127 = vld [vmem:[%s1719] ss:$4 sm:$0xff]
    %s3128 = scalar_lea.vmem [#allocation2], 66
    %v3129 = vld [vmem:[%s3128] ss:$4 sm:$0xff]
    %s3130 = scalar_lea.vmem [#allocation2], 67
    %v3131 = vld [vmem:[%s3130] ss:$4 sm:$0xff]
    %v3132 = vld [vmem:[#allocation5] sm:$0xf]
    %v3133 = vld [vmem:[#allocation5 + $0x4] sm:$0xf]
    %v3134 = vld [vmem:[#allocation5 + $0x8] sm:$0xf]
    %v3135 = vld [vmem:[#allocation5 + $0xc] sm:$0xf]
    %v3136 = vld [vmem:[#allocation5 + $0x10] sm:$0xf]
    %v3137 = vld [vmem:[#allocation5 + $0x14] sm:$0xf]
    %v3138 = vld [vmem:[#allocation5 + $0x18] sm:$0xf]
    %v3139 = vld [vmem:[#allocation5 + $0x1c] sm:$0xf]
    %v3140 = vld [vmem:[#allocation5 + $0x20] sm:$0xf]
    %v3141 = vld [vmem:[#allocation5 + $0x24] sm:$0xf]
    %v3142 = vld [vmem:[#allocation5 + $0x28] sm:$0xf]
    %v3143 = vld [vmem:[#allocation5 + $0x2c] sm:$0xf]
    %v3144 = vld [vmem:[#allocation5 + $0x30] sm:$0xf]
    %v3145 = vld [vmem:[#allocation5 + $0x34] sm:$0xf]
    %v3146 = vld [vmem:[#allocation5 + $0x38] sm:$0xf]
    %v3147 = vld [vmem:[#allocation5 + $0x3c] sm:$0xf]
    %v3148 = vld [vmem:[#allocation5 + $0x40] sm:$0xf]
    %v3149 = vld [vmem:[#allocation5 + $0x44] sm:$0xf]
    %v3150 = vld [vmem:[#allocation5 + $0x48] sm:$0xf]
    %v3151 = vld [vmem:[#allocation5 + $0x4c] sm:$0xf]
    %v3152 = vld [vmem:[#allocation5 + $0x50] sm:$0xf]
    %v3153 = vld [vmem:[#allocation5 + $0x54] sm:$0xf]
    %v3154 = vld [vmem:[#allocation5 + $0x58] sm:$0xf]
    %v3155 = vld [vmem:[#allocation5 + $0x5c] sm:$0xf]
    %v3156 = vld [vmem:[#allocation5 + $0x60] sm:$0xf]
    %v3157 = vld [vmem:[#allocation5 + $0x64] sm:$0xf]
    %v3158 = vld [vmem:[#allocation5 + $0x68] sm:$0xf]
    %v3159 = vld [vmem:[#allocation5 + $0x6c] sm:$0xf]
    %v3160 = vld [vmem:[#allocation5 + $0x70] sm:$0xf]
    %v3161 = vld [vmem:[#allocation5 + $0x74] sm:$0xf]
    %v3162 = vld [vmem:[#allocation5 + $0x78] sm:$0xf]
    %v3163 = vld [vmem:[#allocation5 + $0x7c] sm:$0xf]
    %v3164 = vld [vmem:[#allocation5 + $0x80] sm:$0xf]
    %v3165 = vld [vmem:[#allocation5 + $0x84] sm:$0xf]
    %v3166 = vld [vmem:[#allocation5 + $0x88] sm:$0xf]
    %v3167 = vld [vmem:[#allocation5 + $0x8c] sm:$0xf]
    %v3168 = vld [vmem:[#allocation5 + $0x90] sm:$0xf]
    %v3169 = vld [vmem:[#allocation5 + $0x94] sm:$0xf]
    %v3170 = vld [vmem:[#allocation5 + $0x98] sm:$0xf]
    %v3171 = vld [vmem:[#allocation5 + $0x9c] sm:$0xf]
    %v3172 = vld [vmem:[#allocation5 + $0xa0] sm:$0xf]
    %v3173 = vld [vmem:[#allocation5 + $0xa4] sm:$0xf]
    %v3174 = vld [vmem:[#allocation5 + $0xa8] sm:$0xf]
    %v3175 = vld [vmem:[#allocation5 + $0xac] sm:$0xf]
    %v3176 = vld [vmem:[#allocation5 + $0xb0] sm:$0xf]
    %v3177 = vld [vmem:[#allocation5 + $0xb4] sm:$0xf]
    %v3178 = vld [vmem:[#allocation5 + $0xb8] sm:$0xf]
    %v3179 = vld [vmem:[#allocation5 + $0xbc] sm:$0xf]
    %v3180 = vld [vmem:[#allocation5 + $0xc0] sm:$0xf]
    %v3181 = vld [vmem:[#allocation5 + $0xc4] sm:$0xf]
    %v3182 = vld [vmem:[#allocation5 + $0xc8] sm:$0xf]
    %v3183 = vld [vmem:[#allocation5 + $0xcc] sm:$0xf]
    %v3184 = vld [vmem:[#allocation5 + $0xd0] sm:$0xf]
    %v3185 = vld [vmem:[#allocation5 + $0xd4] sm:$0xf]
    %v3186 = vld [vmem:[#allocation5 + $0xd8] sm:$0xf]
    %v3187 = vld [vmem:[#allocation5 + $0xdc] sm:$0xf]
    %v3188 = vld [vmem:[#allocation5 + $0xe0] sm:$0xf]
    %v3189 = vld [vmem:[#allocation5 + $0xe4] sm:$0xf]
    %v3190 = vld [vmem:[#allocation5 + $0xe8] sm:$0xf]
    %v3191 = vld [vmem:[#allocation5 + $0xec] sm:$0xf]
    %v3192 = vld [vmem:[#allocation5 + $0xf0] sm:$0xf]
    %v3193 = vld [vmem:[#allocation5 + $0xf4] sm:$0xf]
    %v3194 = vld [vmem:[#allocation5 + $0xf8] sm:$0xf]
    %v3195 = vld [vmem:[#allocation5 + $0xfc] sm:$0xf]
    %v3196 = vpack.c.bf16 %v3126, %v3126
    %v3197 = vpack.c.bf16 %v3127, %v3127
    %v3198 = vpack.c.bf16 %v3129, %v3129
    %v3199 = vpack.c.bf16 %v3131, %v3131
    %v3200 = vld [vmem:[%s8] sm:$0x1]
    %v3202 = vlaneseq
    %v3203 = vshrl.u32 %v3202, 7
    %v3204 = vsub.s32 0, %v3203
    %v3205 = vrot.slane %v3200, %v3204
    %v3271 = vunpack.c.l.b16 %v3132
    %v3272 = vunpack.c.l.b16 %v3133
    %v3273 = vunpack.c.l.b16 %v3134
    %v3274 = vunpack.c.l.b16 %v3135
    %v3275 = vunpack.c.l.b16 %v3136
    %v3276 = vunpack.c.l.b16 %v3137
    %v3277 = vunpack.c.l.b16 %v3138
    %v3278 = vunpack.c.l.b16 %v3139
    %v3279 = vunpack.c.l.b16 %v3140
    %v3280 = vunpack.c.l.b16 %v3141
    %v3281 = vunpack.c.l.b16 %v3142
    %v3282 = vunpack.c.l.b16 %v3143
    %v3283 = vunpack.c.l.b16 %v3144
    %v3284 = vunpack.c.l.b16 %v3145
    %v3285 = vunpack.c.l.b16 %v3146
    %v3286 = vunpack.c.l.b16 %v3147
    %v3287 = vunpack.c.l.b16 %v3148
    %v3288 = vunpack.c.l.b16 %v3149
    %v3289 = vunpack.c.l.b16 %v3150
    %v3290 = vunpack.c.l.b16 %v3151
    %v3291 = vunpack.c.l.b16 %v3152
    %v3292 = vunpack.c.l.b16 %v3153
    %v3293 = vunpack.c.l.b16 %v3154
    %v3294 = vunpack.c.l.b16 %v3155
    %v3295 = vunpack.c.l.b16 %v3156
    %v3296 = vunpack.c.l.b16 %v3157
    %v3297 = vunpack.c.l.b16 %v3158
    %v3298 = vunpack.c.l.b16 %v3159
    %v3299 = vunpack.c.l.b16 %v3160
    %v3300 = vunpack.c.l.b16 %v3161
    %v3301 = vunpack.c.l.b16 %v3162
    %v3302 = vunpack.c.l.b16 %v3163
    %v3303 = vunpack.c.l.b16 %v3164
    %v3304 = vunpack.c.l.b16 %v3165
    %v3305 = vunpack.c.l.b16 %v3166
    %v3306 = vunpack.c.l.b16 %v3167
    %v3307 = vunpack.c.l.b16 %v3168
    %v3308 = vunpack.c.l.b16 %v3169
    %v3309 = vunpack.c.l.b16 %v3170
    %v3310 = vunpack.c.l.b16 %v3171
    %v3311 = vunpack.c.l.b16 %v3172
    %v3312 = vunpack.c.l.b16 %v3173
    %v3313 = vunpack.c.l.b16 %v3174
    %v3314 = vunpack.c.l.b16 %v3175
    %v3315 = vunpack.c.l.b16 %v3176
    %v3316 = vunpack.c.l.b16 %v3177
    %v3317 = vunpack.c.l.b16 %v3178
    %v3318 = vunpack.c.l.b16 %v3179
    %v3319 = vunpack.c.l.b16 %v3180
    %v3320 = vunpack.c.l.b16 %v3181
    %v3321 = vunpack.c.l.b16 %v3182
    %v3322 = vunpack.c.l.b16 %v3183
    %v3323 = vunpack.c.l.b16 %v3184
    %v3324 = vunpack.c.l.b16 %v3185
    %v3325 = vunpack.c.l.b16 %v3186
    %v3326 = vunpack.c.l.b16 %v3187
    %v3327 = vunpack.c.l.b16 %v3188
    %v3328 = vunpack.c.l.b16 %v3189
    %v3329 = vunpack.c.l.b16 %v3190
    %v3330 = vunpack.c.l.b16 %v3191
    %v3331 = vunpack.c.l.b16 %v3192
    %v3332 = vunpack.c.l.b16 %v3193
    %v3333 = vunpack.c.l.b16 %v3194
    %v3334 = vunpack.c.l.b16 %v3195
    %v3335 = vpack.c.b16 %v3272, %v3271
    %v3336 = vpack.c.b16 %v3274, %v3273
    %v3337 = vpack.c.b16 %v3276, %v3275
    %v3338 = vpack.c.b16 %v3278, %v3277
    %v3339 = vpack.c.b16 %v3280, %v3279
    %v3340 = vpack.c.b16 %v3282, %v3281
    %v3341 = vpack.c.b16 %v3284, %v3283
    %v3342 = vpack.c.b16 %v3286, %v3285
    %v3343 = vpack.c.b16 %v3288, %v3287
    %v3344 = vpack.c.b16 %v3290, %v3289
    %v3345 = vpack.c.b16 %v3292, %v3291
    %v3346 = vpack.c.b16 %v3294, %v3293
    %v3347 = vpack.c.b16 %v3296, %v3295
    %v3348 = vpack.c.b16 %v3298, %v3297
    %v3349 = vpack.c.b16 %v3300, %v3299
    %v3350 = vpack.c.b16 %v3302, %v3301
    %v3351 = vpack.c.b16 %v3304, %v3303
    %v3352 = vpack.c.b16 %v3306, %v3305
    %v3353 = vpack.c.b16 %v3308, %v3307
    %v3354 = vpack.c.b16 %v3310, %v3309
    %v3355 = vpack.c.b16 %v3312, %v3311
    %v3356 = vpack.c.b16 %v3314, %v3313
    %v3357 = vpack.c.b16 %v3316, %v3315
    %v3358 = vpack.c.b16 %v3318, %v3317
    %v3359 = vpack.c.b16 %v3320, %v3319
    %v3360 = vpack.c.b16 %v3322, %v3321
    %v3361 = vpack.c.b16 %v3324, %v3323
    %v3362 = vpack.c.b16 %v3326, %v3325
    %v3363 = vpack.c.b16 %v3328, %v3327
    %v3364 = vpack.c.b16 %v3330, %v3329
    %v3365 = vpack.c.b16 %v3332, %v3331
    %v3366 = vpack.c.b16 %v3334, %v3333
    %3399 = vmatprep.subr.bf16.mxu0 0
    %3400 = vmatpush1.bf16.msra.mxu0 %v3335
    %3401 = vmatprep.subr.bf16.mxu0 0
    %3402 = vmatpush1.bf16.msra.mxu0 %v3336
    %3403 = vmatprep.subr.bf16.mxu0 0
    %3404 = vmatpush1.bf16.msra.mxu0 %v3337
    %3405 = vmatprep.subr.bf16.mxu0 0
    %3406 = vmatpush1.bf16.msra.mxu0 %v3338
    %3407 = vmatprep.subr.bf16.mxu0 0
    %3408 = vmatpush1.bf16.msra.mxu0 %v3339
    %3409 = vmatprep.subr.bf16.mxu0 0
    %3410 = vmatpush1.bf16.msra.mxu0 %v3340
    %3411 = vmatprep.subr.bf16.mxu0 0
    %3412 = vmatpush1.bf16.msra.mxu0 %v3341
    %3413 = vmatprep.subr.bf16.mxu0 0
    %3414 = vmatpush1.bf16.msra.mxu0 %v3342
    %3415 = vmatprep.subr.bf16.mxu0 0
    %3416 = vmatpush1.bf16.msra.mxu0 %v3343
    %3417 = vmatprep.subr.bf16.mxu0 0
    %3418 = vmatpush1.bf16.msra.mxu0 %v3344
    %3419 = vmatprep.subr.bf16.mxu0 0
    %3420 = vmatpush1.bf16.msra.mxu0 %v3345
    %3421 = vmatprep.subr.bf16.mxu0 0
    %3422 = vmatpush1.bf16.msra.mxu0 %v3346
    %3423 = vmatprep.subr.bf16.mxu0 0
    %3424 = vmatpush1.bf16.msra.mxu0 %v3347
    %3425 = vmatprep.subr.bf16.mxu0 0
    %3426 = vmatpush1.bf16.msra.mxu0 %v3348
    %3427 = vmatprep.subr.bf16.mxu0 0
    %3428 = vmatpush1.bf16.msra.mxu0 %v3349
    %3429 = vmatprep.subr.bf16.mxu0 0
    %3430 = vmatpush1.bf16.msra.mxu0 %v3350
    %3431 = vmatprep.mubr.bf16.mxu0 %v3197
    %3432 = vmatmul.mubr.bf16.gmra.mrb[0].mxu0 %v3196
    %v3433 = vpop.f32.mrb[0].mxu0
    %v3434 = vadd.f32 %v3205, %v3433
    %v3435 = vpop.f32.mrb[0].mxu0
    %v3436 = vpop.f32.mrb[0].mxu0
    %v3437 = vpop.f32.mrb[0].mxu0
    %3438 = vdwg.mxu0
    %3439 = vmatprep.subr.bf16.mxu0 0
    %3440 = vmatpush1.bf16.msra.mxu0 %v3351
    %3441 = vmatprep.subr.bf16.mxu0 0
    %3442 = vmatpush1.bf16.msra.mxu0 %v3352
    %3443 = vmatprep.subr.bf16.mxu0 0
    %3444 = vmatpush1.bf16.msra.mxu0 %v3353
    %3445 = vmatprep.subr.bf16.mxu0 0
    %3446 = vmatpush1.bf16.msra.mxu0 %v3354
    %3447 = vmatprep.subr.bf16.mxu0 0
    %3448 = vmatpush1.bf16.msra.mxu0 %v3355
    %3449 = vmatprep.subr.bf16.mxu0 0
    %3450 = vmatpush1.bf16.msra.mxu0 %v3356
    %3451 = vmatprep.subr.bf16.mxu0 0
    %3452 = vmatpush1.bf16.msra.mxu0 %v3357
    %3453 = vmatprep.subr.bf16.mxu0 0
    %3454 = vmatpush1.bf16.msra.mxu0 %v3358
    %3455 = vmatprep.subr.bf16.mxu0 0
    %3456 = vmatpush1.bf16.msra.mxu0 %v3359
    %3457 = vmatprep.subr.bf16.mxu0 0
    %3458 = vmatpush1.bf16.msra.mxu0 %v3360
    %3459 = vmatprep.subr.bf16.mxu0 0
    %3460 = vmatpush1.bf16.msra.mxu0 %v3361
    %3461 = vmatprep.subr.bf16.mxu0 0
    %3462 = vmatpush1.bf16.msra.mxu0 %v3362
    %3463 = vmatprep.subr.bf16.mxu0 0
    %3464 = vmatpush1.bf16.msra.mxu0 %v3363
    %3465 = vmatprep.subr.bf16.mxu0 0
    %3466 = vmatpush1.bf16.msra.mxu0 %v3364
    %3467 = vmatprep.subr.bf16.mxu0 0
    %3468 = vmatpush1.bf16.msra.mxu0 %v3365
    %3469 = vmatprep.subr.bf16.mxu0 0
    %3470 = vmatpush1.bf16.msra.mxu0 %v3366
    %3471 = vmatprep.mubr.bf16.mxu0 %v3199
    %3472 = vmatmul.mubr.bf16.gmra.mrb[0].mxu0 %v3198
    %v3473 = vpop.f32.mrb[0].mxu0
    %v3474 = vadd.f32 %v3434, %v3473
    %v3475 = vpop.f32.mrb[0].mxu0
    %v3476 = vpop.f32.mrb[0].mxu0
    %v3477 = vpop.f32.mrb[0].mxu0
    %3478 = vdwg.mxu0
    %v3479 = vmax.f32 %v3474, 0.0
    %v3480 = vld [vmem:[%s9] sm:$0xf]
    %v3481 = vld [vmem:[%s9 + $0x4] sm:$0xf]
    %v3482 = vld [vmem:[%s9 + $0x8] sm:$0xf]
    %v3483 = vld [vmem:[%s9 + $0xc] sm:$0xf]
    %v3484 = vld [vmem:[%s9 + $0x10] sm:$0xf]
    %v3485 = vld [vmem:[%s9 + $0x14] sm:$0xf]
    %v3486 = vld [vmem:[%s9 + $0x18] sm:$0xf]
    %v3487 = vld [vmem:[%s9 + $0x1c] sm:$0xf]
    %v3488 = vld [vmem:[%s9 + $0x20] sm:$0xf]
    %v3489 = vld [vmem:[%s9 + $0x24] sm:$0xf]
    %v3490 = vld [vmem:[%s9 + $0x28] sm:$0xf]
    %v3491 = vld [vmem:[%s9 + $0x2c] sm:$0xf]
    %v3492 = vld [vmem:[%s9 + $0x30] sm:$0xf]
    %v3493 = vld [vmem:[%s9 + $0x34] sm:$0xf]
    %v3494 = vld [vmem:[%s9 + $0x38] sm:$0xf]
    %v3495 = vld [vmem:[%s9 + $0x3c] sm:$0xf]
    %v3496 = vpack.c.bf16 %v3479, %v3479
    %v3497 = vld [vmem:[%s10] sm:$0x1]
    %v3499 = vlaneseq
    %v3500 = vshrl.u32 %v3499, 7
    %v3501 = vsub.s32 0, %v3500
    %v3502 = vrot.slane %v3497, %v3501
    %v3520 = vunpack.c.l.b16 %v3480
    %v3521 = vunpack.c.l.b16 %v3481
    %v3522 = vunpack.c.l.b16 %v3482
    %v3523 = vunpack.c.l.b16 %v3483
    %v3524 = vunpack.c.l.b16 %v3484
    %v3525 = vunpack.c.l.b16 %v3485
    %v3526 = vunpack.c.l.b16 %v3486
    %v3527 = vunpack.c.l.b16 %v3487
    %v3528 = vunpack.c.l.b16 %v3488
    %v3529 = vunpack.c.l.b16 %v3489
    %v3530 = vunpack.c.l.b16 %v3490
    %v3531 = vunpack.c.l.b16 %v3491
    %v3532 = vunpack.c.l.b16 %v3492
    %v3533 = vunpack.c.l.b16 %v3493
    %v3534 = vunpack.c.l.b16 %v3494
    %v3535 = vunpack.c.l.b16 %v3495
    %v3536 = vpack.c.b16 %v3521, %v3520
    %v3537 = vpack.c.b16 %v3523, %v3522
    %v3538 = vpack.c.b16 %v3525, %v3524
    %v3539 = vpack.c.b16 %v3527, %v3526
    %v3540 = vpack.c.b16 %v3529, %v3528
    %v3541 = vpack.c.b16 %v3531, %v3530
    %v3542 = vpack.c.b16 %v3533, %v3532
    %v3543 = vpack.c.b16 %v3535, %v3534
    %3552 = vmatprep.subr.bf16.mxu0 0
    %3553 = vmatpush1.bf16.msra.mxu0 %v3536
    %3554 = vmatprep.subr.bf16.mxu0 0
    %3555 = vmatpush1.bf16.msra.mxu0 %v3537
    %3556 = vmatprep.subr.bf16.mxu0 0
    %3557 = vmatpush1.bf16.msra.mxu0 %v3538
    %3558 = vmatprep.subr.bf16.mxu0 0
    %3559 = vmatpush1.bf16.msra.mxu0 %v3539
    %3560 = vmatprep.subr.bf16.mxu0 0
    %3561 = vmatpush1.bf16.msra.mxu0 %v3540
    %3562 = vmatprep.subr.bf16.mxu0 0
    %3563 = vmatpush1.bf16.msra.mxu0 %v3541
    %3564 = vmatprep.subr.bf16.mxu0 0
    %3565 = vmatpush1.bf16.msra.mxu0 %v3542
    %3566 = vmatprep.subr.bf16.mxu0 0
    %3567 = vmatpush1.bf16.msra.mxu0 %v3543
    %3568 = vmatprep.subr.bf16.mxu0 0
    %3569 = vmatpush1.bf16.msra.mxu0 0
    %3570 = vmatprep.subr.bf16.mxu0 0
    %3571 = vmatpush1.bf16.msra.mxu0 0
    %3572 = vmatprep.subr.bf16.mxu0 0
    %3573 = vmatpush1.bf16.msra.mxu0 0
    %3574 = vmatprep.subr.bf16.mxu0 0
    %3575 = vmatpush1.bf16.msra.mxu0 0
    %3576 = vmatprep.subr.bf16.mxu0 0
    %3577 = vmatpush1.bf16.msra.mxu0 0
    %3578 = vmatprep.subr.bf16.mxu0 0
    %3579 = vmatpush1.bf16.msra.mxu0 0
    %3580 = vmatprep.subr.bf16.mxu0 0
    %3581 = vmatpush1.bf16.msra.mxu0 0
    %3582 = vmatprep.subr.bf16.mxu0 0
    %3583 = vmatpush1.bf16.msra.mxu0 0
    %3584 = vmatprep.mubr.bf16.mxu0 0
    %3585 = vmatmul.mubr.bf16.gmra.mrb[0].mxu0 %v3496
    %v3586 = vpop.f32.mrb[0].mxu0
    %v3587 = vadd.f32 %v3502, %v3586
    %v3588 = vpop.f32.mrb[0].mxu0
    %v3589 = vpop.f32.mrb[0].mxu0
    %v3590 = vpop.f32.mrb[0].mxu0
    %3591 = vdwg.mxu0
    %3592 = vst [vmem:[%s11] sm:$0xff] %v3587
    // Predicated region
    $region54: #{forward_fn.1} parent=1 // pred_check
      _
    $region55: #{forward_fn.1} parent=1 // pred_check_branch
      %3594 = sbr.rel (0) target = $region57
    $region56: #{forward_fn.1} parent=1 // pred_region
      _
    $region57: #{forward_fn.1} parent=1 // pred_fallthru
      _
    // Predicated region
    $region58: #{forward_fn.1} parent=1 // pred_check
      _
    $region59: #{forward_fn.1} parent=1 // pred_check_branch
      %3596 = sbr.rel (0) target = $region61
    $region60: #{forward_fn.1} parent=1 // pred_region
      _
    $region61: #{forward_fn.1} parent=1 // pred_fallthru
      _
    %3597 = vsyncpa [#allocation4], 1
    %3598 = vsyncpa [#allocation6], 1

</llo_original>
